<compile_context>
chip_gen: v7x
topology: tpu7x:2x2x1
jax: 0.10.0
libtpu: 0.0.40
codegen_flags: <defaults>
</compile_context>

<pallas_src>
import functools
import math

import jax
import jax.numpy as jnp
from jax.experimental import pallas as pl
from jax.experimental.pallas import tpu as pltpu

# --- constants from the reference script ---
B_J0 = 0.01
BETA = 1.8          # isAdapt = 1
R_M = 1.0
DT = 1.0
# TODO(synk): tau_m is an undefined free symbol in the original script; 20.0 is
# the usual LSNN membrane time constant and is assumed here.
TAU_M = 20.0


def _adaptive_update(z, mem, spike, b, ro, one_minus_ro, alpha):
    """mem_update_NU_adp forward semantics (algo == 'LSNN'), ro precomputed."""
    b = ro * b + one_minus_ro * spike
    Bth = B_J0 + BETA * b
    mem = mem * alpha + (1.0 - alpha) * R_M * z - Bth * spike * DT
    spike = (mem - Bth > 0.0).astype(jnp.float32)   # ActFun_adp.forward: gt(0).float()
    return mem, spike, b


def lsnn_kernel(x_ref,                                  # (T*N, P) bf16
                wi1_ref, wh1_ref, b1_ref, ro1_ref,
                wi2_ref, wh2_ref, b2_ref, ro2_ref,
                wi3_ref, wh3_ref, b3_ref, ro3_ref,
                wo_ref, bo_ref,
                out_ref,
                *, T, N, alpha):
    H1 = b1_ref.shape[1]
    H2 = b2_ref.shape[1]
    H3 = b3_ref.shape[1]
    f32 = jnp.float32
    bf16 = jnp.bfloat16

    # --- hoisted: all-timesteps layer-1 input projection in ONE MXU push ---
    # (T*N, P) @ (P, H1) + (bi1 + bh1); exact, since it is state-independent.
    z1_in_all = (jnp.dot(x_ref[...], wi1_ref[...], preferred_element_type=f32)
                 + jnp.broadcast_to(b1_ref[...], (T * N, H1)))

    # --- hoisted loads / broadcasts (executed once, outside the time loop) ---
    wh1 = wh1_ref[...]
    wi2 = wi2_ref[...]; wh2 = wh2_ref[...]
    wi3 = wi3_ref[...]; wh3 = wh3_ref[...]
    wo = wo_ref[...]
    bias2 = jnp.broadcast_to(b2_ref[...], (N, H2))
    bias3 = jnp.broadcast_to(b3_ref[...], (N, H3))
    ro1 = jnp.broadcast_to(ro1_ref[...], (N, H1)); omr1 = 1.0 - ro1
    ro2 = jnp.broadcast_to(ro2_ref[...], (N, H2)); omr2 = 1.0 - ro2
    ro3 = jnp.broadcast_to(ro3_ref[...], (N, H3)); omr3 = 1.0 - ro3

    # --- initial state (registers, not scratch: whole recurrence is one call) ---
    mem1 = jnp.zeros((N, H1), f32); spk1 = jnp.zeros((N, H1), f32)
    mem2 = jnp.zeros((N, H2), f32); spk2 = jnp.zeros((N, H2), f32)
    mem3 = jnp.zeros((N, H3), f32); spk3 = jnp.zeros((N, H3), f32)
    b1 = jnp.full((N, H1), B_J0, f32)
    b2 = jnp.full((N, H2), B_J0, f32)
    b3 = jnp.full((N, H3), B_J0, f32)
    sum_spk3 = jnp.zeros((N, H3), f32)

    # --- time recurrence, fully unrolled (T is small and static) ---
    for t in range(T):
        z1 = (z1_in_all[t * N:(t + 1) * N, :]
              + jnp.dot(spk1.astype(bf16), wh1, preferred_element_type=f32))
        mem1, spk1, b1 = _adaptive_update(z1, mem1, spk1, b1, ro1, omr1, alpha)

        z2 = (jnp.dot(spk1.astype(bf16), wi2, preferred_element_type=f32)
              + jnp.dot(spk2.astype(bf16), wh2, preferred_element_type=f32)
              + bias2)
        mem2, spk2, b2 = _adaptive_update(z2, mem2, spk2, b2, ro2, omr2, alpha)

        z3 = (jnp.dot(spk2.astype(bf16), wi3, preferred_element_type=f32)
              + jnp.dot(spk3.astype(bf16), wh3, preferred_element_type=f32)
              + bias3)
        mem3, spk3, b3 = _adaptive_update(z3, mem3, spk3, b3, ro3, omr3, alpha)

        sum_spk3 = sum_spk3 + spk3

    # --- deferred linear readout: sum_t (spk3_t @ Wo + bo) == (sum_t spk3_t) @ Wo + T*bo
    out_ref[...] = (jnp.dot(sum_spk3.astype(bf16), wo, preferred_element_type=f32)
                    + float(T) * jnp.broadcast_to(bo_ref[...], out_ref.shape))


def _round_up(n, m):
    return ((n + m - 1) // m) * m


def _prep_params(params, input_size):
    """Pre-sum biases, precompute ro, lane-pad Wi1, cast matmul weights to bf16."""
    bf16 = jnp.bfloat16
    P = _round_up(input_size, 128)                      # lane-pad 98 -> 128
    wi1p = jnp.pad(params['wi1'], ((0, P - input_size), (0, 0)))
    prepped = {
        'wi1': wi1p.astype(bf16),
        'wh1': params['wh1'].astype(bf16),
        'b1': params['bi1'] + params['bh1'],
        'ro1': jnp.exp(-DT / params['tau1']),
        'wi2': params['wi2'].astype(bf16),
        'wh2': params['wh2'].astype(bf16),
        'b2': params['bi2'] + params['bh2'],
        'ro2': jnp.exp(-DT / params['tau2']),
        'wi3': params['wi3'].astype(bf16),
        'wh3': params['wh3'].astype(bf16),
        'b3': params['bi3'] + params['bh3'],
        'ro3': jnp.exp(-DT / params['tau3']),
        'wo': params['wo'].astype(bf16),
        'bo': params['bo'],
    }
    return prepped, P


def lsnn_forward(x, params, *, input_size, cfg_fc, output_size):
    N = x.shape[0]
    T = 784 // input_size
    prm, P = _prep_params(params, input_size)

    # (N, 784) -> (N, input_size, T) -> (T, N, input_size) -> lane-pad -> (T*N, P) bf16
    x_t = jnp.transpose(x.reshape(N, input_size, T), (2, 0, 1)).astype(jnp.float32)
    x_t = jnp.pad(x_t, ((0, 0), (0, 0), (0, P - input_size)))
    x_flat = x_t.reshape(T * N, P).astype(jnp.bfloat16)

    alpha = math.exp(-DT / TAU_M)                       # python float: jit-safe

    def full_spec(shape):
        zeros = (0,) * len(shape)
        return pl.BlockSpec(shape, lambda i: zeros)

    args = (x_flat,
            prm['wi1'], prm['wh1'], prm['b1'], prm['ro1'],
            prm['wi2'], prm['wh2'], prm['b2'], prm['ro2'],
            prm['wi3'], prm['wh3'], prm['b3'], prm['ro3'],
            prm['wo'], prm['bo'])

    grid_spec = pltpu.PrefetchScalarGridSpec(
        num_scalar_prefetch=0,
        grid=(1,),                                      # whole recurrence in one step
        in_specs=[full_spec(a.shape) for a in args],
        out_specs=pl.BlockSpec((N, output_size), lambda i: (0, 0)),
    )

    return pl.pallas_call(
        functools.partial(lsnn_kernel, T=T, N=N, alpha=alpha),
        out_shape=jax.ShapeDtypeStruct((N, output_size), jnp.float32),
        grid_spec=grid_spec,
        compiler_params=pltpu.CompilerParams(dimension_semantics=("arbitrary",)),
    )(*args)


def lsnn_reference(x, params, *, input_size, cfg_fc, output_size):
    """Pure-JAX mirror of the PyTorch forward (same per-layer recurrence structure),
    using bf16 matmul operands with f32 accumulation to match the kernel's MXU
    precision choice (spikes are exactly 0/1, so only the pixel matmul is affected)."""
    N = x.shape[0]
    T = 784 // input_size
    f32, bf16 = jnp.float32, jnp.bfloat16
    xv = x.reshape(N, input_size, T).astype(f32)
    alpha = math.exp(-DT / TAU_M)

    H1, H2, H3 = cfg_fc
    mem1 = spk1 = jnp.zeros((N, H1), f32)
    mem2 = spk2 = jnp.zeros((N, H2), f32)
    mem3 = spk3 = jnp.zeros((N, H3), f32)
    b1 = b2 = b3 = B_J0
    ro1 = jnp.exp(-DT / params['tau1'])
    ro2 = jnp.exp(-DT / params['tau2'])
    ro3 = jnp.exp(-DT / params['tau3'])

    def dot16(a, w):
        return jnp.dot(a.astype(bf16), w.astype(bf16), preferred_element_type=f32)

    def upd(z, mem, spike, b, ro):
        b = ro * b + (1.0 - ro) * spike
        Bth = B_J0 + BETA * b
        mem = mem * alpha + (1.0 - alpha) * R_M * z - Bth * spike * DT
        spike = (mem - Bth > 0.0).astype(f32)
        return mem, spike, b

    out = jnp.zeros((N, output_size), f32)
    for t in range(T):
        xt = xv[:, :, t]
        h1 = dot16(xt, params['wi1']) + params['bi1'] + dot16(spk1, params['wh1']) + params['bh1']
        mem1, spk1, b1 = upd(h1, mem1, spk1, b1, ro1)
        h2 = dot16(spk1, params['wi2']) + params['bi2'] + dot16(spk2, params['wh2']) + params['bh2']
        mem2, spk2, b2 = upd(h2, mem2, spk2, b2, ro2)
        h3 = dot16(spk2, params['wi3']) + params['bi3'] + dot16(spk3, params['wh3']) + params['bh3']
        mem3, spk3, b3 = upd(h3, mem3, spk3, b3, ro3)
        out = out + dot16(spk3, params['wo']) + params['bo']
    return out


def init_params(key, input_size, cfg_fc, output_size):
    """Deterministic parameter init matching LSNN_noBP.__init__ shapes.

    Linear weights are stored pre-transposed as (fan_in, fan_out); biases and
    tau_adp as (1, H) rows for clean 2-D broadcasting.
    """
    H1, H2, H3 = cfg_fc
    ks = jax.random.split(key, 8)
    glorot = jax.nn.initializers.glorot_uniform()
    orth = jax.nn.initializers.orthogonal()
    f32 = jnp.float32
    p = {
        'wi1': glorot(ks[0], (input_size, H1), f32),
        'wh1': orth(ks[1], (H1, H1), f32),
        'wi2': glorot(ks[2], (H1, H2), f32),
        'wh2': orth(ks[3], (H2, H2), f32),
        'wi3': glorot(ks[4], (H2, H3), f32),
        'wh3': orth(ks[5], (H3, H3), f32),
        'wo':  glorot(ks[6], (H3, output_size), f32),
        'bi1': jnp.zeros((1, H1), f32), 'bh1': jnp.zeros((1, H1), f32),
        'bi2': jnp.zeros((1, H2), f32), 'bh2': jnp.zeros((1, H2), f32),
        'bi3': jnp.zeros((1, H3), f32), 'bh3': jnp.zeros((1, H3), f32),
        # h2o_3.bias keeps the default PyTorch Linear init (uniform +-1/sqrt(fan_in))
        'bo': jax.random.uniform(ks[7], (1, output_size), f32,
                                 -1.0 / (H3 ** 0.5), 1.0 / (H3 ** 0.5)),
        'tau1': jnp.full((1, H1), 700.0, f32),
        'tau2': jnp.full((1, H2), 700.0, f32),
        'tau3': jnp.full((1, H3), 700.0, f32),
        # tau_adp_o exists in __init__ but is unused in forward.
    }
    return p


if __name__ == "__main__":
    key = jax.random.PRNGKey(0)
    k_params, k_x = jax.random.split(key)

    N = 2
    INPUT_SIZE = 98            # T = 784 // 98 = 8 timesteps (small seq)
    CFG_FC = (32, 32, 32)
    OUTPUT_SIZE = 10

    params = init_params(k_params, INPUT_SIZE, CFG_FC, OUTPUT_SIZE)
    x = jax.random.uniform(k_x, (N, 784), dtype=jnp.float32)

    out = lsnn_forward(x, params, input_size=INPUT_SIZE, cfg_fc=CFG_FC,
                       output_size=OUTPUT_SIZE)
    out = jax.block_until_ready(out)

    ref = lsnn_reference(x, params, input_size=INPUT_SIZE, cfg_fc=CFG_FC,
                         output_size=OUTPUT_SIZE)
    assert out.shape == (N, OUTPUT_SIZE)
    assert jnp.allclose(out, ref, atol=1e-3, rtol=1e-3), (out, ref)

    print("KERNEL_OK")
</pallas_src>

<mosaic_0001>
module attributes {stable_mosaic.version = 11 : i64} {
  func.func @lsnn_kernel(%arg0: i32, %arg1: memref<16x128xbf16, #tpu.memory_space<vmem>>, %arg2: memref<128x32xbf16, #tpu.memory_space<vmem>>, %arg3: memref<32x32xbf16, #tpu.memory_space<vmem>>, %arg4: memref<1x32xf32, #tpu.memory_space<vmem>>, %arg5: memref<1x32xf32, #tpu.memory_space<vmem>>, %arg6: memref<32x32xbf16, #tpu.memory_space<vmem>>, %arg7: memref<32x32xbf16, #tpu.memory_space<vmem>>, %arg8: memref<1x32xf32, #tpu.memory_space<vmem>>, %arg9: memref<1x32xf32, #tpu.memory_space<vmem>>, %arg10: memref<32x32xbf16, #tpu.memory_space<vmem>>, %arg11: memref<32x32xbf16, #tpu.memory_space<vmem>>, %arg12: memref<1x32xf32, #tpu.memory_space<vmem>>, %arg13: memref<1x32xf32, #tpu.memory_space<vmem>>, %arg14: memref<32x10xbf16, #tpu.memory_space<vmem>>, %arg15: memref<1x10xf32, #tpu.memory_space<vmem>>, %arg16: memref<2x10xf32, #tpu.memory_space<vmem>>) attributes {dimension_semantics = [#tpu.dimension_semantics<arbitrary>], iteration_bounds = array<i64: 1>, scalar_prefetch = 0 : i64, scratch_operands = 0 : i64, tpu.core_type = #tpu.core_type<tc>, window_params = [{pipeline_mode = #tpu.pipeline_mode<synchronous>, transform_indices = @transform_0, window_bounds = array<i64: 16, 128>}, {pipeline_mode = #tpu.pipeline_mode<synchronous>, transform_indices = @transform_1, window_bounds = array<i64: 128, 32>}, {pipeline_mode = #tpu.pipeline_mode<synchronous>, transform_indices = @transform_2, window_bounds = array<i64: 32, 32>}, {pipeline_mode = #tpu.pipeline_mode<synchronous>, transform_indices = @transform_3, window_bounds = array<i64: 1, 32>}, {pipeline_mode = #tpu.pipeline_mode<synchronous>, transform_indices = @transform_4, window_bounds = array<i64: 1, 32>}, {pipeline_mode = #tpu.pipeline_mode<synchronous>, transform_indices = @transform_5, window_bounds = array<i64: 32, 32>}, {pipeline_mode = #tpu.pipeline_mode<synchronous>, transform_indices = @transform_6, window_bounds = array<i64: 32, 32>}, {pipeline_mode = #tpu.pipeline_mode<synchronous>, transform_indices = @transform_7, window_bounds = array<i64: 1, 32>}, {pipeline_mode = #tpu.pipeline_mode<synchronous>, transform_indices = @transform_8, window_bounds = array<i64: 1, 32>}, {pipeline_mode = #tpu.pipeline_mode<synchronous>, transform_indices = @transform_9, window_bounds = array<i64: 32, 32>}, {pipeline_mode = #tpu.pipeline_mode<synchronous>, transform_indices = @transform_10, window_bounds = array<i64: 32, 32>}, {pipeline_mode = #tpu.pipeline_mode<synchronous>, transform_indices = @transform_11, window_bounds = array<i64: 1, 32>}, {pipeline_mode = #tpu.pipeline_mode<synchronous>, transform_indices = @transform_12, window_bounds = array<i64: 1, 32>}, {pipeline_mode = #tpu.pipeline_mode<synchronous>, transform_indices = @transform_13, window_bounds = array<i64: 32, 10>}, {pipeline_mode = #tpu.pipeline_mode<synchronous>, transform_indices = @transform_14, window_bounds = array<i64: 1, 10>}, {pipeline_mode = #tpu.pipeline_mode<synchronous>, transform_indices = @transform_15, window_bounds = array<i64: 2, 10>}]} {
    %c0 = arith.constant 0 : index
    %c0_0 = arith.constant 0 : index
    %0 = vector.load %arg1[%c0, %c0_0] : memref<16x128xbf16, #tpu.memory_space<vmem>>, vector<16x128xbf16>
    %c0_1 = arith.constant 0 : index
    %c0_2 = arith.constant 0 : index
    %1 = vector.load %arg2[%c0_1, %c0_2] : memref<128x32xbf16, #tpu.memory_space<vmem>>, vector<128x32xbf16>
    %cst = arith.constant dense<0.000000e+00> : vector<16x32xf32>
    %2 = tpu.matmul %0, %1, %cst {dimension_numbers = #tpu.dot_dimension_numbers<[1], [0], [0], [1], [0, 0, 1, 1], [], []>} : vector<16x128xbf16>, vector<128x32xbf16>, vector<16x32xf32> -> vector<16x32xf32>
    %c0_3 = arith.constant 0 : index
    %c0_4 = arith.constant 0 : index
    %3 = vector.load %arg4[%c0_3, %c0_4] : memref<1x32xf32, #tpu.memory_space<vmem>>, vector<1x32xf32>
    %4 = vector.shape_cast %3 : vector<1x32xf32> to vector<1x32xf32>
    %5 = vector.broadcast %4 : vector<1x32xf32> to vector<16x32xf32>
    %6 = arith.addf %2, %5 : vector<16x32xf32>
    %c0_5 = arith.constant 0 : index
    %c0_6 = arith.constant 0 : index
    %7 = vector.load %arg3[%c0_5, %c0_6] : memref<32x32xbf16, #tpu.memory_space<vmem>>, vector<32x32xbf16>
    %c0_7 = arith.constant 0 : index
    %c0_8 = arith.constant 0 : index
    %8 = vector.load %arg6[%c0_7, %c0_8] : memref<32x32xbf16, #tpu.memory_space<vmem>>, vector<32x32xbf16>
    %c0_9 = arith.constant 0 : index
    %c0_10 = arith.constant 0 : index
    %9 = vector.load %arg7[%c0_9, %c0_10] : memref<32x32xbf16, #tpu.memory_space<vmem>>, vector<32x32xbf16>
    %c0_11 = arith.constant 0 : index
    %c0_12 = arith.constant 0 : index
    %10 = vector.load %arg10[%c0_11, %c0_12] : memref<32x32xbf16, #tpu.memory_space<vmem>>, vector<32x32xbf16>
    %c0_13 = arith.constant 0 : index
    %c0_14 = arith.constant 0 : index
    %11 = vector.load %arg11[%c0_13, %c0_14] : memref<32x32xbf16, #tpu.memory_space<vmem>>, vector<32x32xbf16>
    %c0_15 = arith.constant 0 : index
    %c0_16 = arith.constant 0 : index
    %12 = vector.load %arg14[%c0_15, %c0_16] : memref<32x10xbf16, #tpu.memory_space<vmem>>, vector<32x10xbf16>
    %c0_17 = arith.constant 0 : index
    %c0_18 = arith.constant 0 : index
    %13 = vector.load %arg8[%c0_17, %c0_18] : memref<1x32xf32, #tpu.memory_space<vmem>>, vector<1x32xf32>
    %14 = vector.shape_cast %13 : vector<1x32xf32> to vector<1x32xf32>
    %15 = vector.broadcast %14 : vector<1x32xf32> to vector<2x32xf32>
    %c0_19 = arith.constant 0 : index
    %c0_20 = arith.constant 0 : index
    %16 = vector.load %arg12[%c0_19, %c0_20] : memref<1x32xf32, #tpu.memory_space<vmem>>, vector<1x32xf32>
    %17 = vector.shape_cast %16 : vector<1x32xf32> to vector<1x32xf32>
    %18 = vector.broadcast %17 : vector<1x32xf32> to vector<2x32xf32>
    %c0_21 = arith.constant 0 : index
    %c0_22 = arith.constant 0 : index
    %19 = vector.load %arg5[%c0_21, %c0_22] : memref<1x32xf32, #tpu.memory_space<vmem>>, vector<1x32xf32>
    %20 = vector.shape_cast %19 : vector<1x32xf32> to vector<1x32xf32>
    %21 = vector.broadcast %20 : vector<1x32xf32> to vector<2x32xf32>
    %cst_23 = arith.constant 1.000000e+00 : f32
    %22 = vector.broadcast %cst_23 : f32 to vector<2x32xf32>
    %23 = arith.subf %22, %21 : vector<2x32xf32>
    %c0_24 = arith.constant 0 : index
    %c0_25 = arith.constant 0 : index
    %24 = vector.load %arg9[%c0_24, %c0_25] : memref<1x32xf32, #tpu.memory_space<vmem>>, vector<1x32xf32>
    %25 = vector.shape_cast %24 : vector<1x32xf32> to vector<1x32xf32>
    %26 = vector.broadcast %25 : vector<1x32xf32> to vector<2x32xf32>
    %cst_26 = arith.constant 1.000000e+00 : f32
    %27 = vector.broadcast %cst_26 : f32 to vector<2x32xf32>
    %28 = arith.subf %27, %26 : vector<2x32xf32>
    %c0_27 = arith.constant 0 : index
    %c0_28 = arith.constant 0 : index
    %29 = vector.load %arg13[%c0_27, %c0_28] : memref<1x32xf32, #tpu.memory_space<vmem>>, vector<1x32xf32>
    %30 = vector.shape_cast %29 : vector<1x32xf32> to vector<1x32xf32>
    %31 = vector.broadcast %30 : vector<1x32xf32> to vector<2x32xf32>
    %cst_29 = arith.constant 1.000000e+00 : f32
    %32 = vector.broadcast %cst_29 : f32 to vector<2x32xf32>
    %33 = arith.subf %32, %31 : vector<2x32xf32>
    %cst_30 = arith.constant 0.000000e+00 : f32
    %34 = vector.broadcast %cst_30 : f32 to vector<2x32xf32>
    %cst_31 = arith.constant 0.000000e+00 : f32
    %35 = vector.broadcast %cst_31 : f32 to vector<2x32xf32>
    %cst_32 = arith.constant 0.000000e+00 : f32
    %36 = vector.broadcast %cst_32 : f32 to vector<2x32xf32>
    %cst_33 = arith.constant 0.000000e+00 : f32
    %37 = vector.broadcast %cst_33 : f32 to vector<2x32xf32>
    %cst_34 = arith.constant 0.000000e+00 : f32
    %38 = vector.broadcast %cst_34 : f32 to vector<2x32xf32>
    %cst_35 = arith.constant 0.000000e+00 : f32
    %39 = vector.broadcast %cst_35 : f32 to vector<2x32xf32>
    %cst_36 = arith.constant 0.00999999977 : f32
    %40 = vector.broadcast %cst_36 : f32 to vector<2x32xf32>
    %cst_37 = arith.constant 0.00999999977 : f32
    %41 = vector.broadcast %cst_37 : f32 to vector<2x32xf32>
    %cst_38 = arith.constant 0.00999999977 : f32
    %42 = vector.broadcast %cst_38 : f32 to vector<2x32xf32>
    %cst_39 = arith.constant 0.000000e+00 : f32
    %43 = vector.broadcast %cst_39 : f32 to vector<2x32xf32>
    %44 = vector.extract_strided_slice %6 {offsets = [0, 0], sizes = [2, 32], strides = [1, 1]} : vector<16x32xf32> to vector<2x32xf32>
    %45 = arith.truncf %35 : vector<2x32xf32> to vector<2x32xbf16>
    %cst_40 = arith.constant dense<0.000000e+00> : vector<2x32xf32>
    %46 = tpu.matmul %45, %7, %cst_40 {dimension_numbers = #tpu.dot_dimension_numbers<[1], [0], [0], [1], [0, 0, 1, 1], [], []>} : vector<2x32xbf16>, vector<32x32xbf16>, vector<2x32xf32> -> vector<2x32xf32>
    %47 = arith.addf %44, %46 : vector<2x32xf32>
    %48 = arith.mulf %21, %40 : vector<2x32xf32>
    %49 = arith.mulf %23, %35 : vector<2x32xf32>
    %50 = arith.addf %48, %49 : vector<2x32xf32>
    %cst_41 = arith.constant 1.800000e+00 : f32
    %51 = vector.broadcast %cst_41 : f32 to vector<2x32xf32>
    %52 = arith.mulf %51, %50 : vector<2x32xf32>
    %cst_42 = arith.constant 0.00999999977 : f32
    %53 = vector.broadcast %cst_42 : f32 to vector<2x32xf32>
    %54 = arith.addf %53, %52 : vector<2x32xf32>
    %cst_43 = arith.constant 0.951229453 : f32
    %55 = vector.broadcast %cst_43 : f32 to vector<2x32xf32>
    %56 = arith.mulf %34, %55 : vector<2x32xf32>
    %cst_44 = arith.constant 0.0487705767 : f32
    %57 = vector.broadcast %cst_44 : f32 to vector<2x32xf32>
    %58 = arith.mulf %57, %47 : vector<2x32xf32>
    %59 = arith.addf %56, %58 : vector<2x32xf32>
    %60 = arith.mulf %54, %35 : vector<2x32xf32>
    %cst_45 = arith.constant 1.000000e+00 : f32
    %61 = vector.broadcast %cst_45 : f32 to vector<2x32xf32>
    %62 = arith.mulf %60, %61 : vector<2x32xf32>
    %63 = arith.subf %59, %62 : vector<2x32xf32>
    %64 = arith.subf %63, %54 : vector<2x32xf32>
    %cst_46 = arith.constant 0.000000e+00 : f32
    %65 = vector.broadcast %cst_46 : f32 to vector<2x32xf32>
    %66 = arith.cmpf ogt, %64, %65 : vector<2x32xf32>
    %67 = arith.extui %66 : vector<2x32xi1> to vector<2x32xi32>
    %68 = arith.sitofp %67 : vector<2x32xi32> to vector<2x32xf32>
    %69 = arith.truncf %68 : vector<2x32xf32> to vector<2x32xbf16>
    %cst_47 = arith.constant dense<0.000000e+00> : vector<2x32xf32>
    %70 = tpu.matmul %69, %8, %cst_47 {dimension_numbers = #tpu.dot_dimension_numbers<[1], [0], [0], [1], [0, 0, 1, 1], [], []>} : vector<2x32xbf16>, vector<32x32xbf16>, vector<2x32xf32> -> vector<2x32xf32>
    %71 = arith.truncf %37 : vector<2x32xf32> to vector<2x32xbf16>
    %cst_48 = arith.constant dense<0.000000e+00> : vector<2x32xf32>
    %72 = tpu.matmul %71, %9, %cst_48 {dimension_numbers = #tpu.dot_dimension_numbers<[1], [0], [0], [1], [0, 0, 1, 1], [], []>} : vector<2x32xbf16>, vector<32x32xbf16>, vector<2x32xf32> -> vector<2x32xf32>
    %73 = arith.addf %70, %72 : vector<2x32xf32>
    %74 = arith.addf %73, %15 : vector<2x32xf32>
    %75 = arith.mulf %26, %41 : vector<2x32xf32>
    %76 = arith.mulf %28, %37 : vector<2x32xf32>
    %77 = arith.addf %75, %76 : vector<2x32xf32>
    %cst_49 = arith.constant 1.800000e+00 : f32
    %78 = vector.broadcast %cst_49 : f32 to vector<2x32xf32>
    %79 = arith.mulf %78, %77 : vector<2x32xf32>
    %cst_50 = arith.constant 0.00999999977 : f32
    %80 = vector.broadcast %cst_50 : f32 to vector<2x32xf32>
    %81 = arith.addf %80, %79 : vector<2x32xf32>
    %cst_51 = arith.constant 0.951229453 : f32
    %82 = vector.broadcast %cst_51 : f32 to vector<2x32xf32>
    %83 = arith.mulf %36, %82 : vector<2x32xf32>
    %cst_52 = arith.constant 0.0487705767 : f32
    %84 = vector.broadcast %cst_52 : f32 to vector<2x32xf32>
    %85 = arith.mulf %84, %74 : vector<2x32xf32>
    %86 = arith.addf %83, %85 : vector<2x32xf32>
    %87 = arith.mulf %81, %37 : vector<2x32xf32>
    %cst_53 = arith.constant 1.000000e+00 : f32
    %88 = vector.broadcast %cst_53 : f32 to vector<2x32xf32>
    %89 = arith.mulf %87, %88 : vector<2x32xf32>
    %90 = arith.subf %86, %89 : vector<2x32xf32>
    %91 = arith.subf %90, %81 : vector<2x32xf32>
    %cst_54 = arith.constant 0.000000e+00 : f32
    %92 = vector.broadcast %cst_54 : f32 to vector<2x32xf32>
    %93 = arith.cmpf ogt, %91, %92 : vector<2x32xf32>
    %94 = arith.extui %93 : vector<2x32xi1> to vector<2x32xi32>
    %95 = arith.sitofp %94 : vector<2x32xi32> to vector<2x32xf32>
    %96 = arith.truncf %95 : vector<2x32xf32> to vector<2x32xbf16>
    %cst_55 = arith.constant dense<0.000000e+00> : vector<2x32xf32>
    %97 = tpu.matmul %96, %10, %cst_55 {dimension_numbers = #tpu.dot_dimension_numbers<[1], [0], [0], [1], [0, 0, 1, 1], [], []>} : vector<2x32xbf16>, vector<32x32xbf16>, vector<2x32xf32> -> vector<2x32xf32>
    %98 = arith.truncf %39 : vector<2x32xf32> to vector<2x32xbf16>
    %cst_56 = arith.constant dense<0.000000e+00> : vector<2x32xf32>
    %99 = tpu.matmul %98, %11, %cst_56 {dimension_numbers = #tpu.dot_dimension_numbers<[1], [0], [0], [1], [0, 0, 1, 1], [], []>} : vector<2x32xbf16>, vector<32x32xbf16>, vector<2x32xf32> -> vector<2x32xf32>
    %100 = arith.addf %97, %99 : vector<2x32xf32>
    %101 = arith.addf %100, %18 : vector<2x32xf32>
    %102 = arith.mulf %31, %42 : vector<2x32xf32>
    %103 = arith.mulf %33, %39 : vector<2x32xf32>
    %104 = arith.addf %102, %103 : vector<2x32xf32>
    %cst_57 = arith.constant 1.800000e+00 : f32
    %105 = vector.broadcast %cst_57 : f32 to vector<2x32xf32>
    %106 = arith.mulf %105, %104 : vector<2x32xf32>
    %cst_58 = arith.constant 0.00999999977 : f32
    %107 = vector.broadcast %cst_58 : f32 to vector<2x32xf32>
    %108 = arith.addf %107, %106 : vector<2x32xf32>
    %cst_59 = arith.constant 0.951229453 : f32
    %109 = vector.broadcast %cst_59 : f32 to vector<2x32xf32>
    %110 = arith.mulf %38, %109 : vector<2x32xf32>
    %cst_60 = arith.constant 0.0487705767 : f32
    %111 = vector.broadcast %cst_60 : f32 to vector<2x32xf32>
    %112 = arith.mulf %111, %101 : vector<2x32xf32>
    %113 = arith.addf %110, %112 : vector<2x32xf32>
    %114 = arith.mulf %108, %39 : vector<2x32xf32>
    %cst_61 = arith.constant 1.000000e+00 : f32
    %115 = vector.broadcast %cst_61 : f32 to vector<2x32xf32>
    %116 = arith.mulf %114, %115 : vector<2x32xf32>
    %117 = arith.subf %113, %116 : vector<2x32xf32>
    %118 = arith.subf %117, %108 : vector<2x32xf32>
    %cst_62 = arith.constant 0.000000e+00 : f32
    %119 = vector.broadcast %cst_62 : f32 to vector<2x32xf32>
    %120 = arith.cmpf ogt, %118, %119 : vector<2x32xf32>
    %121 = arith.extui %120 : vector<2x32xi1> to vector<2x32xi32>
    %122 = arith.sitofp %121 : vector<2x32xi32> to vector<2x32xf32>
    %123 = arith.addf %43, %122 : vector<2x32xf32>
    %124 = vector.extract_strided_slice %6 {offsets = [2, 0], sizes = [2, 32], strides = [1, 1]} : vector<16x32xf32> to vector<2x32xf32>
    %125 = arith.truncf %68 : vector<2x32xf32> to vector<2x32xbf16>
    %cst_63 = arith.constant dense<0.000000e+00> : vector<2x32xf32>
    %126 = tpu.matmul %125, %7, %cst_63 {dimension_numbers = #tpu.dot_dimension_numbers<[1], [0], [0], [1], [0, 0, 1, 1], [], []>} : vector<2x32xbf16>, vector<32x32xbf16>, vector<2x32xf32> -> vector<2x32xf32>
    %127 = arith.addf %124, %126 : vector<2x32xf32>
    %128 = arith.mulf %21, %50 : vector<2x32xf32>
    %129 = arith.mulf %23, %68 : vector<2x32xf32>
    %130 = arith.addf %128, %129 : vector<2x32xf32>
    %cst_64 = arith.constant 1.800000e+00 : f32
    %131 = vector.broadcast %cst_64 : f32 to vector<2x32xf32>
    %132 = arith.mulf %131, %130 : vector<2x32xf32>
    %cst_65 = arith.constant 0.00999999977 : f32
    %133 = vector.broadcast %cst_65 : f32 to vector<2x32xf32>
    %134 = arith.addf %133, %132 : vector<2x32xf32>
    %cst_66 = arith.constant 0.951229453 : f32
    %135 = vector.broadcast %cst_66 : f32 to vector<2x32xf32>
    %136 = arith.mulf %63, %135 : vector<2x32xf32>
    %cst_67 = arith.constant 0.0487705767 : f32
    %137 = vector.broadcast %cst_67 : f32 to vector<2x32xf32>
    %138 = arith.mulf %137, %127 : vector<2x32xf32>
    %139 = arith.addf %136, %138 : vector<2x32xf32>
    %140 = arith.mulf %134, %68 : vector<2x32xf32>
    %cst_68 = arith.constant 1.000000e+00 : f32
    %141 = vector.broadcast %cst_68 : f32 to vector<2x32xf32>
    %142 = arith.mulf %140, %141 : vector<2x32xf32>
    %143 = arith.subf %139, %142 : vector<2x32xf32>
    %144 = arith.subf %143, %134 : vector<2x32xf32>
    %cst_69 = arith.constant 0.000000e+00 : f32
    %145 = vector.broadcast %cst_69 : f32 to vector<2x32xf32>
    %146 = arith.cmpf ogt, %144, %145 : vector<2x32xf32>
    %147 = arith.extui %146 : vector<2x32xi1> to vector<2x32xi32>
    %148 = arith.sitofp %147 : vector<2x32xi32> to vector<2x32xf32>
    %149 = arith.truncf %148 : vector<2x32xf32> to vector<2x32xbf16>
    %cst_70 = arith.constant dense<0.000000e+00> : vector<2x32xf32>
    %150 = tpu.matmul %149, %8, %cst_70 {dimension_numbers = #tpu.dot_dimension_numbers<[1], [0], [0], [1], [0, 0, 1, 1], [], []>} : vector<2x32xbf16>, vector<32x32xbf16>, vector<2x32xf32> -> vector<2x32xf32>
    %151 = arith.truncf %95 : vector<2x32xf32> to vector<2x32xbf16>
    %cst_71 = arith.constant dense<0.000000e+00> : vector<2x32xf32>
    %152 = tpu.matmul %151, %9, %cst_71 {dimension_numbers = #tpu.dot_dimension_numbers<[1], [0], [0], [1], [0, 0, 1, 1], [], []>} : vector<2x32xbf16>, vector<32x32xbf16>, vector<2x32xf32> -> vector<2x32xf32>
    %153 = arith.addf %150, %152 : vector<2x32xf32>
    %154 = arith.addf %153, %15 : vector<2x32xf32>
    %155 = arith.mulf %26, %77 : vector<2x32xf32>
    %156 = arith.mulf %28, %95 : vector<2x32xf32>
    %157 = arith.addf %155, %156 : vector<2x32xf32>
    %cst_72 = arith.constant 1.800000e+00 : f32
    %158 = vector.broadcast %cst_72 : f32 to vector<2x32xf32>
    %159 = arith.mulf %158, %157 : vector<2x32xf32>
    %cst_73 = arith.constant 0.00999999977 : f32
    %160 = vector.broadcast %cst_73 : f32 to vector<2x32xf32>
    %161 = arith.addf %160, %159 : vector<2x32xf32>
    %cst_74 = arith.constant 0.951229453 : f32
    %162 = vector.broadcast %cst_74 : f32 to vector<2x32xf32>
    %163 = arith.mulf %90, %162 : vector<2x32xf32>
    %cst_75 = arith.constant 0.0487705767 : f32
    %164 = vector.broadcast %cst_75 : f32 to vector<2x32xf32>
    %165 = arith.mulf %164, %154 : vector<2x32xf32>
    %166 = arith.addf %163, %165 : vector<2x32xf32>
    %167 = arith.mulf %161, %95 : vector<2x32xf32>
    %cst_76 = arith.constant 1.000000e+00 : f32
    %168 = vector.broadcast %cst_76 : f32 to vector<2x32xf32>
    %169 = arith.mulf %167, %168 : vector<2x32xf32>
    %170 = arith.subf %166, %169 : vector<2x32xf32>
    %171 = arith.subf %170, %161 : vector<2x32xf32>
    %cst_77 = arith.constant 0.000000e+00 : f32
    %172 = vector.broadcast %cst_77 : f32 to vector<2x32xf32>
    %173 = arith.cmpf ogt, %171, %172 : vector<2x32xf32>
    %174 = arith.extui %173 : vector<2x32xi1> to vector<2x32xi32>
    %175 = arith.sitofp %174 : vector<2x32xi32> to vector<2x32xf32>
    %176 = arith.truncf %175 : vector<2x32xf32> to vector<2x32xbf16>
    %cst_78 = arith.constant dense<0.000000e+00> : vector<2x32xf32>
    %177 = tpu.matmul %176, %10, %cst_78 {dimension_numbers = #tpu.dot_dimension_numbers<[1], [0], [0], [1], [0, 0, 1, 1], [], []>} : vector<2x32xbf16>, vector<32x32xbf16>, vector<2x32xf32> -> vector<2x32xf32>
    %178 = arith.truncf %122 : vector<2x32xf32> to vector<2x32xbf16>
    %cst_79 = arith.constant dense<0.000000e+00> : vector<2x32xf32>
    %179 = tpu.matmul %178, %11, %cst_79 {dimension_numbers = #tpu.dot_dimension_numbers<[1], [0], [0], [1], [0, 0, 1, 1], [], []>} : vector<2x32xbf16>, vector<32x32xbf16>, vector<2x32xf32> -> vector<2x32xf32>
    %180 = arith.addf %177, %179 : vector<2x32xf32>
    %181 = arith.addf %180, %18 : vector<2x32xf32>
    %182 = arith.mulf %31, %104 : vector<2x32xf32>
    %183 = arith.mulf %33, %122 : vector<2x32xf32>
    %184 = arith.addf %182, %183 : vector<2x32xf32>
    %cst_80 = arith.constant 1.800000e+00 : f32
    %185 = vector.broadcast %cst_80 : f32 to vector<2x32xf32>
    %186 = arith.mulf %185, %184 : vector<2x32xf32>
    %cst_81 = arith.constant 0.00999999977 : f32
    %187 = vector.broadcast %cst_81 : f32 to vector<2x32xf32>
    %188 = arith.addf %187, %186 : vector<2x32xf32>
    %cst_82 = arith.constant 0.951229453 : f32
    %189 = vector.broadcast %cst_82 : f32 to vector<2x32xf32>
    %190 = arith.mulf %117, %189 : vector<2x32xf32>
    %cst_83 = arith.constant 0.0487705767 : f32
    %191 = vector.broadcast %cst_83 : f32 to vector<2x32xf32>
    %192 = arith.mulf %191, %181 : vector<2x32xf32>
    %193 = arith.addf %190, %192 : vector<2x32xf32>
    %194 = arith.mulf %188, %122 : vector<2x32xf32>
    %cst_84 = arith.constant 1.000000e+00 : f32
    %195 = vector.broadcast %cst_84 : f32 to vector<2x32xf32>
    %196 = arith.mulf %194, %195 : vector<2x32xf32>
    %197 = arith.subf %193, %196 : vector<2x32xf32>
    %198 = arith.subf %197, %188 : vector<2x32xf32>
    %cst_85 = arith.constant 0.000000e+00 : f32
    %199 = vector.broadcast %cst_85 : f32 to vector<2x32xf32>
    %200 = arith.cmpf ogt, %198, %199 : vector<2x32xf32>
    %201 = arith.extui %200 : vector<2x32xi1> to vector<2x32xi32>
    %202 = arith.sitofp %201 : vector<2x32xi32> to vector<2x32xf32>
    %203 = arith.addf %123, %202 : vector<2x32xf32>
    %204 = vector.extract_strided_slice %6 {offsets = [4, 0], sizes = [2, 32], strides = [1, 1]} : vector<16x32xf32> to vector<2x32xf32>
    %205 = arith.truncf %148 : vector<2x32xf32> to vector<2x32xbf16>
    %cst_86 = arith.constant dense<0.000000e+00> : vector<2x32xf32>
    %206 = tpu.matmul %205, %7, %cst_86 {dimension_numbers = #tpu.dot_dimension_numbers<[1], [0], [0], [1], [0, 0, 1, 1], [], []>} : vector<2x32xbf16>, vector<32x32xbf16>, vector<2x32xf32> -> vector<2x32xf32>
    %207 = arith.addf %204, %206 : vector<2x32xf32>
    %208 = arith.mulf %21, %130 : vector<2x32xf32>
    %209 = arith.mulf %23, %148 : vector<2x32xf32>
    %210 = arith.addf %208, %209 : vector<2x32xf32>
    %cst_87 = arith.constant 1.800000e+00 : f32
    %211 = vector.broadcast %cst_87 : f32 to vector<2x32xf32>
    %212 = arith.mulf %211, %210 : vector<2x32xf32>
    %cst_88 = arith.constant 0.00999999977 : f32
    %213 = vector.broadcast %cst_88 : f32 to vector<2x32xf32>
    %214 = arith.addf %213, %212 : vector<2x32xf32>
    %cst_89 = arith.constant 0.951229453 : f32
    %215 = vector.broadcast %cst_89 : f32 to vector<2x32xf32>
    %216 = arith.mulf %143, %215 : vector<2x32xf32>
    %cst_90 = arith.constant 0.0487705767 : f32
    %217 = vector.broadcast %cst_90 : f32 to vector<2x32xf32>
    %218 = arith.mulf %217, %207 : vector<2x32xf32>
    %219 = arith.addf %216, %218 : vector<2x32xf32>
    %220 = arith.mulf %214, %148 : vector<2x32xf32>
    %cst_91 = arith.constant 1.000000e+00 : f32
    %221 = vector.broadcast %cst_91 : f32 to vector<2x32xf32>
    %222 = arith.mulf %220, %221 : vector<2x32xf32>
    %223 = arith.subf %219, %222 : vector<2x32xf32>
    %224 = arith.subf %223, %214 : vector<2x32xf32>
    %cst_92 = arith.constant 0.000000e+00 : f32
    %225 = vector.broadcast %cst_92 : f32 to vector<2x32xf32>
    %226 = arith.cmpf ogt, %224, %225 : vector<2x32xf32>
    %227 = arith.extui %226 : vector<2x32xi1> to vector<2x32xi32>
    %228 = arith.sitofp %227 : vector<2x32xi32> to vector<2x32xf32>
    %229 = arith.truncf %228 : vector<2x32xf32> to vector<2x32xbf16>
    %cst_93 = arith.constant dense<0.000000e+00> : vector<2x32xf32>
    %230 = tpu.matmul %229, %8, %cst_93 {dimension_numbers = #tpu.dot_dimension_numbers<[1], [0], [0], [1], [0, 0, 1, 1], [], []>} : vector<2x32xbf16>, vector<32x32xbf16>, vector<2x32xf32> -> vector<2x32xf32>
    %231 = arith.truncf %175 : vector<2x32xf32> to vector<2x32xbf16>
    %cst_94 = arith.constant dense<0.000000e+00> : vector<2x32xf32>
    %232 = tpu.matmul %231, %9, %cst_94 {dimension_numbers = #tpu.dot_dimension_numbers<[1], [0], [0], [1], [0, 0, 1, 1], [], []>} : vector<2x32xbf16>, vector<32x32xbf16>, vector<2x32xf32> -> vector<2x32xf32>
    %233 = arith.addf %230, %232 : vector<2x32xf32>
    %234 = arith.addf %233, %15 : vector<2x32xf32>
    %235 = arith.mulf %26, %157 : vector<2x32xf32>
    %236 = arith.mulf %28, %175 : vector<2x32xf32>
    %237 = arith.addf %235, %236 : vector<2x32xf32>
    %cst_95 = arith.constant 1.800000e+00 : f32
    %238 = vector.broadcast %cst_95 : f32 to vector<2x32xf32>
    %239 = arith.mulf %238, %237 : vector<2x32xf32>
    %cst_96 = arith.constant 0.00999999977 : f32
    %240 = vector.broadcast %cst_96 : f32 to vector<2x32xf32>
    %241 = arith.addf %240, %239 : vector<2x32xf32>
    %cst_97 = arith.constant 0.951229453 : f32
    %242 = vector.broadcast %cst_97 : f32 to vector<2x32xf32>
    %243 = arith.mulf %170, %242 : vector<2x32xf32>
    %cst_98 = arith.constant 0.0487705767 : f32
    %244 = vector.broadcast %cst_98 : f32 to vector<2x32xf32>
    %245 = arith.mulf %244, %234 : vector<2x32xf32>
    %246 = arith.addf %243, %245 : vector<2x32xf32>
    %247 = arith.mulf %241, %175 : vector<2x32xf32>
    %cst_99 = arith.constant 1.000000e+00 : f32
    %248 = vector.broadcast %cst_99 : f32 to vector<2x32xf32>
    %249 = arith.mulf %247, %248 : vector<2x32xf32>
    %250 = arith.subf %246, %249 : vector<2x32xf32>
    %251 = arith.subf %250, %241 : vector<2x32xf32>
    %cst_100 = arith.constant 0.000000e+00 : f32
    %252 = vector.broadcast %cst_100 : f32 to vector<2x32xf32>
    %253 = arith.cmpf ogt, %251, %252 : vector<2x32xf32>
    %254 = arith.extui %253 : vector<2x32xi1> to vector<2x32xi32>
    %255 = arith.sitofp %254 : vector<2x32xi32> to vector<2x32xf32>
    %256 = arith.truncf %255 : vector<2x32xf32> to vector<2x32xbf16>
    %cst_101 = arith.constant dense<0.000000e+00> : vector<2x32xf32>
    %257 = tpu.matmul %256, %10, %cst_101 {dimension_numbers = #tpu.dot_dimension_numbers<[1], [0], [0], [1], [0, 0, 1, 1], [], []>} : vector<2x32xbf16>, vector<32x32xbf16>, vector<2x32xf32> -> vector<2x32xf32>
    %258 = arith.truncf %202 : vector<2x32xf32> to vector<2x32xbf16>
    %cst_102 = arith.constant dense<0.000000e+00> : vector<2x32xf32>
    %259 = tpu.matmul %258, %11, %cst_102 {dimension_numbers = #tpu.dot_dimension_numbers<[1], [0], [0], [1], [0, 0, 1, 1], [], []>} : vector<2x32xbf16>, vector<32x32xbf16>, vector<2x32xf32> -> vector<2x32xf32>
    %260 = arith.addf %257, %259 : vector<2x32xf32>
    %261 = arith.addf %260, %18 : vector<2x32xf32>
    %262 = arith.mulf %31, %184 : vector<2x32xf32>
    %263 = arith.mulf %33, %202 : vector<2x32xf32>
    %264 = arith.addf %262, %263 : vector<2x32xf32>
    %cst_103 = arith.constant 1.800000e+00 : f32
    %265 = vector.broadcast %cst_103 : f32 to vector<2x32xf32>
    %266 = arith.mulf %265, %264 : vector<2x32xf32>
    %cst_104 = arith.constant 0.00999999977 : f32
    %267 = vector.broadcast %cst_104 : f32 to vector<2x32xf32>
    %268 = arith.addf %267, %266 : vector<2x32xf32>
    %cst_105 = arith.constant 0.951229453 : f32
    %269 = vector.broadcast %cst_105 : f32 to vector<2x32xf32>
    %270 = arith.mulf %197, %269 : vector<2x32xf32>
    %cst_106 = arith.constant 0.0487705767 : f32
    %271 = vector.broadcast %cst_106 : f32 to vector<2x32xf32>
    %272 = arith.mulf %271, %261 : vector<2x32xf32>
    %273 = arith.addf %270, %272 : vector<2x32xf32>
    %274 = arith.mulf %268, %202 : vector<2x32xf32>
    %cst_107 = arith.constant 1.000000e+00 : f32
    %275 = vector.broadcast %cst_107 : f32 to vector<2x32xf32>
    %276 = arith.mulf %274, %275 : vector<2x32xf32>
    %277 = arith.subf %273, %276 : vector<2x32xf32>
    %278 = arith.subf %277, %268 : vector<2x32xf32>
    %cst_108 = arith.constant 0.000000e+00 : f32
    %279 = vector.broadcast %cst_108 : f32 to vector<2x32xf32>
    %280 = arith.cmpf ogt, %278, %279 : vector<2x32xf32>
    %281 = arith.extui %280 : vector<2x32xi1> to vector<2x32xi32>
    %282 = arith.sitofp %281 : vector<2x32xi32> to vector<2x32xf32>
    %283 = arith.addf %203, %282 : vector<2x32xf32>
    %284 = vector.extract_strided_slice %6 {offsets = [6, 0], sizes = [2, 32], strides = [1, 1]} : vector<16x32xf32> to vector<2x32xf32>
    %285 = arith.truncf %228 : vector<2x32xf32> to vector<2x32xbf16>
    %cst_109 = arith.constant dense<0.000000e+00> : vector<2x32xf32>
    %286 = tpu.matmul %285, %7, %cst_109 {dimension_numbers = #tpu.dot_dimension_numbers<[1], [0], [0], [1], [0, 0, 1, 1], [], []>} : vector<2x32xbf16>, vector<32x32xbf16>, vector<2x32xf32> -> vector<2x32xf32>
    %287 = arith.addf %284, %286 : vector<2x32xf32>
    %288 = arith.mulf %21, %210 : vector<2x32xf32>
    %289 = arith.mulf %23, %228 : vector<2x32xf32>
    %290 = arith.addf %288, %289 : vector<2x32xf32>
    %cst_110 = arith.constant 1.800000e+00 : f32
    %291 = vector.broadcast %cst_110 : f32 to vector<2x32xf32>
    %292 = arith.mulf %291, %290 : vector<2x32xf32>
    %cst_111 = arith.constant 0.00999999977 : f32
    %293 = vector.broadcast %cst_111 : f32 to vector<2x32xf32>
    %294 = arith.addf %293, %292 : vector<2x32xf32>
    %cst_112 = arith.constant 0.951229453 : f32
    %295 = vector.broadcast %cst_112 : f32 to vector<2x32xf32>
    %296 = arith.mulf %223, %295 : vector<2x32xf32>
    %cst_113 = arith.constant 0.0487705767 : f32
    %297 = vector.broadcast %cst_113 : f32 to vector<2x32xf32>
    %298 = arith.mulf %297, %287 : vector<2x32xf32>
    %299 = arith.addf %296, %298 : vector<2x32xf32>
    %300 = arith.mulf %294, %228 : vector<2x32xf32>
    %cst_114 = arith.constant 1.000000e+00 : f32
    %301 = vector.broadcast %cst_114 : f32 to vector<2x32xf32>
    %302 = arith.mulf %300, %301 : vector<2x32xf32>
    %303 = arith.subf %299, %302 : vector<2x32xf32>
    %304 = arith.subf %303, %294 : vector<2x32xf32>
    %cst_115 = arith.constant 0.000000e+00 : f32
    %305 = vector.broadcast %cst_115 : f32 to vector<2x32xf32>
    %306 = arith.cmpf ogt, %304, %305 : vector<2x32xf32>
    %307 = arith.extui %306 : vector<2x32xi1> to vector<2x32xi32>
    %308 = arith.sitofp %307 : vector<2x32xi32> to vector<2x32xf32>
    %309 = arith.truncf %308 : vector<2x32xf32> to vector<2x32xbf16>
    %cst_116 = arith.constant dense<0.000000e+00> : vector<2x32xf32>
    %310 = tpu.matmul %309, %8, %cst_116 {dimension_numbers = #tpu.dot_dimension_numbers<[1], [0], [0], [1], [0, 0, 1, 1], [], []>} : vector<2x32xbf16>, vector<32x32xbf16>, vector<2x32xf32> -> vector<2x32xf32>
    %311 = arith.truncf %255 : vector<2x32xf32> to vector<2x32xbf16>
    %cst_117 = arith.constant dense<0.000000e+00> : vector<2x32xf32>
    %312 = tpu.matmul %311, %9, %cst_117 {dimension_numbers = #tpu.dot_dimension_numbers<[1], [0], [0], [1], [0, 0, 1, 1], [], []>} : vector<2x32xbf16>, vector<32x32xbf16>, vector<2x32xf32> -> vector<2x32xf32>
    %313 = arith.addf %310, %312 : vector<2x32xf32>
    %314 = arith.addf %313, %15 : vector<2x32xf32>
    %315 = arith.mulf %26, %237 : vector<2x32xf32>
    %316 = arith.mulf %28, %255 : vector<2x32xf32>
    %317 = arith.addf %315, %316 : vector<2x32xf32>
    %cst_118 = arith.constant 1.800000e+00 : f32
    %318 = vector.broadcast %cst_118 : f32 to vector<2x32xf32>
    %319 = arith.mulf %318, %317 : vector<2x32xf32>
    %cst_119 = arith.constant 0.00999999977 : f32
    %320 = vector.broadcast %cst_119 : f32 to vector<2x32xf32>
    %321 = arith.addf %320, %319 : vector<2x32xf32>
    %cst_120 = arith.constant 0.951229453 : f32
    %322 = vector.broadcast %cst_120 : f32 to vector<2x32xf32>
    %323 = arith.mulf %250, %322 : vector<2x32xf32>
    %cst_121 = arith.constant 0.0487705767 : f32
    %324 = vector.broadcast %cst_121 : f32 to vector<2x32xf32>
    %325 = arith.mulf %324, %314 : vector<2x32xf32>
    %326 = arith.addf %323, %325 : vector<2x32xf32>
    %327 = arith.mulf %321, %255 : vector<2x32xf32>
    %cst_122 = arith.constant 1.000000e+00 : f32
    %328 = vector.broadcast %cst_122 : f32 to vector<2x32xf32>
    %329 = arith.mulf %327, %328 : vector<2x32xf32>
    %330 = arith.subf %326, %329 : vector<2x32xf32>
    %331 = arith.subf %330, %321 : vector<2x32xf32>
    %cst_123 = arith.constant 0.000000e+00 : f32
    %332 = vector.broadcast %cst_123 : f32 to vector<2x32xf32>
    %333 = arith.cmpf ogt, %331, %332 : vector<2x32xf32>
    %334 = arith.extui %333 : vector<2x32xi1> to vector<2x32xi32>
    %335 = arith.sitofp %334 : vector<2x32xi32> to vector<2x32xf32>
    %336 = arith.truncf %335 : vector<2x32xf32> to vector<2x32xbf16>
    %cst_124 = arith.constant dense<0.000000e+00> : vector<2x32xf32>
    %337 = tpu.matmul %336, %10, %cst_124 {dimension_numbers = #tpu.dot_dimension_numbers<[1], [0], [0], [1], [0, 0, 1, 1], [], []>} : vector<2x32xbf16>, vector<32x32xbf16>, vector<2x32xf32> -> vector<2x32xf32>
    %338 = arith.truncf %282 : vector<2x32xf32> to vector<2x32xbf16>
    %cst_125 = arith.constant dense<0.000000e+00> : vector<2x32xf32>
    %339 = tpu.matmul %338, %11, %cst_125 {dimension_numbers = #tpu.dot_dimension_numbers<[1], [0], [0], [1], [0, 0, 1, 1], [], []>} : vector<2x32xbf16>, vector<32x32xbf16>, vector<2x32xf32> -> vector<2x32xf32>
    %340 = arith.addf %337, %339 : vector<2x32xf32>
    %341 = arith.addf %340, %18 : vector<2x32xf32>
    %342 = arith.mulf %31, %264 : vector<2x32xf32>
    %343 = arith.mulf %33, %282 : vector<2x32xf32>
    %344 = arith.addf %342, %343 : vector<2x32xf32>
    %cst_126 = arith.constant 1.800000e+00 : f32
    %345 = vector.broadcast %cst_126 : f32 to vector<2x32xf32>
    %346 = arith.mulf %345, %344 : vector<2x32xf32>
    %cst_127 = arith.constant 0.00999999977 : f32
    %347 = vector.broadcast %cst_127 : f32 to vector<2x32xf32>
    %348 = arith.addf %347, %346 : vector<2x32xf32>
    %cst_128 = arith.constant 0.951229453 : f32
    %349 = vector.broadcast %cst_128 : f32 to vector<2x32xf32>
    %350 = arith.mulf %277, %349 : vector<2x32xf32>
    %cst_129 = arith.constant 0.0487705767 : f32
    %351 = vector.broadcast %cst_129 : f32 to vector<2x32xf32>
    %352 = arith.mulf %351, %341 : vector<2x32xf32>
    %353 = arith.addf %350, %352 : vector<2x32xf32>
    %354 = arith.mulf %348, %282 : vector<2x32xf32>
    %cst_130 = arith.constant 1.000000e+00 : f32
    %355 = vector.broadcast %cst_130 : f32 to vector<2x32xf32>
    %356 = arith.mulf %354, %355 : vector<2x32xf32>
    %357 = arith.subf %353, %356 : vector<2x32xf32>
    %358 = arith.subf %357, %348 : vector<2x32xf32>
    %cst_131 = arith.constant 0.000000e+00 : f32
    %359 = vector.broadcast %cst_131 : f32 to vector<2x32xf32>
    %360 = arith.cmpf ogt, %358, %359 : vector<2x32xf32>
    %361 = arith.extui %360 : vector<2x32xi1> to vector<2x32xi32>
    %362 = arith.sitofp %361 : vector<2x32xi32> to vector<2x32xf32>
    %363 = arith.addf %283, %362 : vector<2x32xf32>
    %364 = vector.extract_strided_slice %6 {offsets = [8, 0], sizes = [2, 32], strides = [1, 1]} : vector<16x32xf32> to vector<2x32xf32>
    %365 = arith.truncf %308 : vector<2x32xf32> to vector<2x32xbf16>
    %cst_132 = arith.constant dense<0.000000e+00> : vector<2x32xf32>
    %366 = tpu.matmul %365, %7, %cst_132 {dimension_numbers = #tpu.dot_dimension_numbers<[1], [0], [0], [1], [0, 0, 1, 1], [], []>} : vector<2x32xbf16>, vector<32x32xbf16>, vector<2x32xf32> -> vector<2x32xf32>
    %367 = arith.addf %364, %366 : vector<2x32xf32>
    %368 = arith.mulf %21, %290 : vector<2x32xf32>
    %369 = arith.mulf %23, %308 : vector<2x32xf32>
    %370 = arith.addf %368, %369 : vector<2x32xf32>
    %cst_133 = arith.constant 1.800000e+00 : f32
    %371 = vector.broadcast %cst_133 : f32 to vector<2x32xf32>
    %372 = arith.mulf %371, %370 : vector<2x32xf32>
    %cst_134 = arith.constant 0.00999999977 : f32
    %373 = vector.broadcast %cst_134 : f32 to vector<2x32xf32>
    %374 = arith.addf %373, %372 : vector<2x32xf32>
    %cst_135 = arith.constant 0.951229453 : f32
    %375 = vector.broadcast %cst_135 : f32 to vector<2x32xf32>
    %376 = arith.mulf %303, %375 : vector<2x32xf32>
    %cst_136 = arith.constant 0.0487705767 : f32
    %377 = vector.broadcast %cst_136 : f32 to vector<2x32xf32>
    %378 = arith.mulf %377, %367 : vector<2x32xf32>
    %379 = arith.addf %376, %378 : vector<2x32xf32>
    %380 = arith.mulf %374, %308 : vector<2x32xf32>
    %cst_137 = arith.constant 1.000000e+00 : f32
    %381 = vector.broadcast %cst_137 : f32 to vector<2x32xf32>
    %382 = arith.mulf %380, %381 : vector<2x32xf32>
    %383 = arith.subf %379, %382 : vector<2x32xf32>
    %384 = arith.subf %383, %374 : vector<2x32xf32>
    %cst_138 = arith.constant 0.000000e+00 : f32
    %385 = vector.broadcast %cst_138 : f32 to vector<2x32xf32>
    %386 = arith.cmpf ogt, %384, %385 : vector<2x32xf32>
    %387 = arith.extui %386 : vector<2x32xi1> to vector<2x32xi32>
    %388 = arith.sitofp %387 : vector<2x32xi32> to vector<2x32xf32>
    %389 = arith.truncf %388 : vector<2x32xf32> to vector<2x32xbf16>
    %cst_139 = arith.constant dense<0.000000e+00> : vector<2x32xf32>
    %390 = tpu.matmul %389, %8, %cst_139 {dimension_numbers = #tpu.dot_dimension_numbers<[1], [0], [0], [1], [0, 0, 1, 1], [], []>} : vector<2x32xbf16>, vector<32x32xbf16>, vector<2x32xf32> -> vector<2x32xf32>
    %391 = arith.truncf %335 : vector<2x32xf32> to vector<2x32xbf16>
    %cst_140 = arith.constant dense<0.000000e+00> : vector<2x32xf32>
    %392 = tpu.matmul %391, %9, %cst_140 {dimension_numbers = #tpu.dot_dimension_numbers<[1], [0], [0], [1], [0, 0, 1, 1], [], []>} : vector<2x32xbf16>, vector<32x32xbf16>, vector<2x32xf32> -> vector<2x32xf32>
    %393 = arith.addf %390, %392 : vector<2x32xf32>
    %394 = arith.addf %393, %15 : vector<2x32xf32>
    %395 = arith.mulf %26, %317 : vector<2x32xf32>
    %396 = arith.mulf %28, %335 : vector<2x32xf32>
    %397 = arith.addf %395, %396 : vector<2x32xf32>
    %cst_141 = arith.constant 1.800000e+00 : f32
    %398 = vector.broadcast %cst_141 : f32 to vector<2x32xf32>
    %399 = arith.mulf %398, %397 : vector<2x32xf32>
    %cst_142 = arith.constant 0.00999999977 : f32
    %400 = vector.broadcast %cst_142 : f32 to vector<2x32xf32>
    %401 = arith.addf %400, %399 : vector<2x32xf32>
    %cst_143 = arith.constant 0.951229453 : f32
    %402 = vector.broadcast %cst_143 : f32 to vector<2x32xf32>
    %403 = arith.mulf %330, %402 : vector<2x32xf32>
    %cst_144 = arith.constant 0.0487705767 : f32
    %404 = vector.broadcast %cst_144 : f32 to vector<2x32xf32>
    %405 = arith.mulf %404, %394 : vector<2x32xf32>
    %406 = arith.addf %403, %405 : vector<2x32xf32>
    %407 = arith.mulf %401, %335 : vector<2x32xf32>
    %cst_145 = arith.constant 1.000000e+00 : f32
    %408 = vector.broadcast %cst_145 : f32 to vector<2x32xf32>
    %409 = arith.mulf %407, %408 : vector<2x32xf32>
    %410 = arith.subf %406, %409 : vector<2x32xf32>
    %411 = arith.subf %410, %401 : vector<2x32xf32>
    %cst_146 = arith.constant 0.000000e+00 : f32
    %412 = vector.broadcast %cst_146 : f32 to vector<2x32xf32>
    %413 = arith.cmpf ogt, %411, %412 : vector<2x32xf32>
    %414 = arith.extui %413 : vector<2x32xi1> to vector<2x32xi32>
    %415 = arith.sitofp %414 : vector<2x32xi32> to vector<2x32xf32>
    %416 = arith.truncf %415 : vector<2x32xf32> to vector<2x32xbf16>
    %cst_147 = arith.constant dense<0.000000e+00> : vector<2x32xf32>
    %417 = tpu.matmul %416, %10, %cst_147 {dimension_numbers = #tpu.dot_dimension_numbers<[1], [0], [0], [1], [0, 0, 1, 1], [], []>} : vector<2x32xbf16>, vector<32x32xbf16>, vector<2x32xf32> -> vector<2x32xf32>
    %418 = arith.truncf %362 : vector<2x32xf32> to vector<2x32xbf16>
    %cst_148 = arith.constant dense<0.000000e+00> : vector<2x32xf32>
    %419 = tpu.matmul %418, %11, %cst_148 {dimension_numbers = #tpu.dot_dimension_numbers<[1], [0], [0], [1], [0, 0, 1, 1], [], []>} : vector<2x32xbf16>, vector<32x32xbf16>, vector<2x32xf32> -> vector<2x32xf32>
    %420 = arith.addf %417, %419 : vector<2x32xf32>
    %421 = arith.addf %420, %18 : vector<2x32xf32>
    %422 = arith.mulf %31, %344 : vector<2x32xf32>
    %423 = arith.mulf %33, %362 : vector<2x32xf32>
    %424 = arith.addf %422, %423 : vector<2x32xf32>
    %cst_149 = arith.constant 1.800000e+00 : f32
    %425 = vector.broadcast %cst_149 : f32 to vector<2x32xf32>
    %426 = arith.mulf %425, %424 : vector<2x32xf32>
    %cst_150 = arith.constant 0.00999999977 : f32
    %427 = vector.broadcast %cst_150 : f32 to vector<2x32xf32>
    %428 = arith.addf %427, %426 : vector<2x32xf32>
    %cst_151 = arith.constant 0.951229453 : f32
    %429 = vector.broadcast %cst_151 : f32 to vector<2x32xf32>
    %430 = arith.mulf %357, %429 : vector<2x32xf32>
    %cst_152 = arith.constant 0.0487705767 : f32
    %431 = vector.broadcast %cst_152 : f32 to vector<2x32xf32>
    %432 = arith.mulf %431, %421 : vector<2x32xf32>
    %433 = arith.addf %430, %432 : vector<2x32xf32>
    %434 = arith.mulf %428, %362 : vector<2x32xf32>
    %cst_153 = arith.constant 1.000000e+00 : f32
    %435 = vector.broadcast %cst_153 : f32 to vector<2x32xf32>
    %436 = arith.mulf %434, %435 : vector<2x32xf32>
    %437 = arith.subf %433, %436 : vector<2x32xf32>
    %438 = arith.subf %437, %428 : vector<2x32xf32>
    %cst_154 = arith.constant 0.000000e+00 : f32
    %439 = vector.broadcast %cst_154 : f32 to vector<2x32xf32>
    %440 = arith.cmpf ogt, %438, %439 : vector<2x32xf32>
    %441 = arith.extui %440 : vector<2x32xi1> to vector<2x32xi32>
    %442 = arith.sitofp %441 : vector<2x32xi32> to vector<2x32xf32>
    %443 = arith.addf %363, %442 : vector<2x32xf32>
    %444 = vector.extract_strided_slice %6 {offsets = [10, 0], sizes = [2, 32], strides = [1, 1]} : vector<16x32xf32> to vector<2x32xf32>
    %445 = arith.truncf %388 : vector<2x32xf32> to vector<2x32xbf16>
    %cst_155 = arith.constant dense<0.000000e+00> : vector<2x32xf32>
    %446 = tpu.matmul %445, %7, %cst_155 {dimension_numbers = #tpu.dot_dimension_numbers<[1], [0], [0], [1], [0, 0, 1, 1], [], []>} : vector<2x32xbf16>, vector<32x32xbf16>, vector<2x32xf32> -> vector<2x32xf32>
    %447 = arith.addf %444, %446 : vector<2x32xf32>
    %448 = arith.mulf %21, %370 : vector<2x32xf32>
    %449 = arith.mulf %23, %388 : vector<2x32xf32>
    %450 = arith.addf %448, %449 : vector<2x32xf32>
    %cst_156 = arith.constant 1.800000e+00 : f32
    %451 = vector.broadcast %cst_156 : f32 to vector<2x32xf32>
    %452 = arith.mulf %451, %450 : vector<2x32xf32>
    %cst_157 = arith.constant 0.00999999977 : f32
    %453 = vector.broadcast %cst_157 : f32 to vector<2x32xf32>
    %454 = arith.addf %453, %452 : vector<2x32xf32>
    %cst_158 = arith.constant 0.951229453 : f32
    %455 = vector.broadcast %cst_158 : f32 to vector<2x32xf32>
    %456 = arith.mulf %383, %455 : vector<2x32xf32>
    %cst_159 = arith.constant 0.0487705767 : f32
    %457 = vector.broadcast %cst_159 : f32 to vector<2x32xf32>
    %458 = arith.mulf %457, %447 : vector<2x32xf32>
    %459 = arith.addf %456, %458 : vector<2x32xf32>
    %460 = arith.mulf %454, %388 : vector<2x32xf32>
    %cst_160 = arith.constant 1.000000e+00 : f32
    %461 = vector.broadcast %cst_160 : f32 to vector<2x32xf32>
    %462 = arith.mulf %460, %461 : vector<2x32xf32>
    %463 = arith.subf %459, %462 : vector<2x32xf32>
    %464 = arith.subf %463, %454 : vector<2x32xf32>
    %cst_161 = arith.constant 0.000000e+00 : f32
    %465 = vector.broadcast %cst_161 : f32 to vector<2x32xf32>
    %466 = arith.cmpf ogt, %464, %465 : vector<2x32xf32>
    %467 = arith.extui %466 : vector<2x32xi1> to vector<2x32xi32>
    %468 = arith.sitofp %467 : vector<2x32xi32> to vector<2x32xf32>
    %469 = arith.truncf %468 : vector<2x32xf32> to vector<2x32xbf16>
    %cst_162 = arith.constant dense<0.000000e+00> : vector<2x32xf32>
    %470 = tpu.matmul %469, %8, %cst_162 {dimension_numbers = #tpu.dot_dimension_numbers<[1], [0], [0], [1], [0, 0, 1, 1], [], []>} : vector<2x32xbf16>, vector<32x32xbf16>, vector<2x32xf32> -> vector<2x32xf32>
    %471 = arith.truncf %415 : vector<2x32xf32> to vector<2x32xbf16>
    %cst_163 = arith.constant dense<0.000000e+00> : vector<2x32xf32>
    %472 = tpu.matmul %471, %9, %cst_163 {dimension_numbers = #tpu.dot_dimension_numbers<[1], [0], [0], [1], [0, 0, 1, 1], [], []>} : vector<2x32xbf16>, vector<32x32xbf16>, vector<2x32xf32> -> vector<2x32xf32>
    %473 = arith.addf %470, %472 : vector<2x32xf32>
    %474 = arith.addf %473, %15 : vector<2x32xf32>
    %475 = arith.mulf %26, %397 : vector<2x32xf32>
    %476 = arith.mulf %28, %415 : vector<2x32xf32>
    %477 = arith.addf %475, %476 : vector<2x32xf32>
    %cst_164 = arith.constant 1.800000e+00 : f32
    %478 = vector.broadcast %cst_164 : f32 to vector<2x32xf32>
    %479 = arith.mulf %478, %477 : vector<2x32xf32>
    %cst_165 = arith.constant 0.00999999977 : f32
    %480 = vector.broadcast %cst_165 : f32 to vector<2x32xf32>
    %481 = arith.addf %480, %479 : vector<2x32xf32>
    %cst_166 = arith.constant 0.951229453 : f32
    %482 = vector.broadcast %cst_166 : f32 to vector<2x32xf32>
    %483 = arith.mulf %410, %482 : vector<2x32xf32>
    %cst_167 = arith.constant 0.0487705767 : f32
    %484 = vector.broadcast %cst_167 : f32 to vector<2x32xf32>
    %485 = arith.mulf %484, %474 : vector<2x32xf32>
    %486 = arith.addf %483, %485 : vector<2x32xf32>
    %487 = arith.mulf %481, %415 : vector<2x32xf32>
    %cst_168 = arith.constant 1.000000e+00 : f32
    %488 = vector.broadcast %cst_168 : f32 to vector<2x32xf32>
    %489 = arith.mulf %487, %488 : vector<2x32xf32>
    %490 = arith.subf %486, %489 : vector<2x32xf32>
    %491 = arith.subf %490, %481 : vector<2x32xf32>
    %cst_169 = arith.constant 0.000000e+00 : f32
    %492 = vector.broadcast %cst_169 : f32 to vector<2x32xf32>
    %493 = arith.cmpf ogt, %491, %492 : vector<2x32xf32>
    %494 = arith.extui %493 : vector<2x32xi1> to vector<2x32xi32>
    %495 = arith.sitofp %494 : vector<2x32xi32> to vector<2x32xf32>
    %496 = arith.truncf %495 : vector<2x32xf32> to vector<2x32xbf16>
    %cst_170 = arith.constant dense<0.000000e+00> : vector<2x32xf32>
    %497 = tpu.matmul %496, %10, %cst_170 {dimension_numbers = #tpu.dot_dimension_numbers<[1], [0], [0], [1], [0, 0, 1, 1], [], []>} : vector<2x32xbf16>, vector<32x32xbf16>, vector<2x32xf32> -> vector<2x32xf32>
    %498 = arith.truncf %442 : vector<2x32xf32> to vector<2x32xbf16>
    %cst_171 = arith.constant dense<0.000000e+00> : vector<2x32xf32>
    %499 = tpu.matmul %498, %11, %cst_171 {dimension_numbers = #tpu.dot_dimension_numbers<[1], [0], [0], [1], [0, 0, 1, 1], [], []>} : vector<2x32xbf16>, vector<32x32xbf16>, vector<2x32xf32> -> vector<2x32xf32>
    %500 = arith.addf %497, %499 : vector<2x32xf32>
    %501 = arith.addf %500, %18 : vector<2x32xf32>
    %502 = arith.mulf %31, %424 : vector<2x32xf32>
    %503 = arith.mulf %33, %442 : vector<2x32xf32>
    %504 = arith.addf %502, %503 : vector<2x32xf32>
    %cst_172 = arith.constant 1.800000e+00 : f32
    %505 = vector.broadcast %cst_172 : f32 to vector<2x32xf32>
    %506 = arith.mulf %505, %504 : vector<2x32xf32>
    %cst_173 = arith.constant 0.00999999977 : f32
    %507 = vector.broadcast %cst_173 : f32 to vector<2x32xf32>
    %508 = arith.addf %507, %506 : vector<2x32xf32>
    %cst_174 = arith.constant 0.951229453 : f32
    %509 = vector.broadcast %cst_174 : f32 to vector<2x32xf32>
    %510 = arith.mulf %437, %509 : vector<2x32xf32>
    %cst_175 = arith.constant 0.0487705767 : f32
    %511 = vector.broadcast %cst_175 : f32 to vector<2x32xf32>
    %512 = arith.mulf %511, %501 : vector<2x32xf32>
    %513 = arith.addf %510, %512 : vector<2x32xf32>
    %514 = arith.mulf %508, %442 : vector<2x32xf32>
    %cst_176 = arith.constant 1.000000e+00 : f32
    %515 = vector.broadcast %cst_176 : f32 to vector<2x32xf32>
    %516 = arith.mulf %514, %515 : vector<2x32xf32>
    %517 = arith.subf %513, %516 : vector<2x32xf32>
    %518 = arith.subf %517, %508 : vector<2x32xf32>
    %cst_177 = arith.constant 0.000000e+00 : f32
    %519 = vector.broadcast %cst_177 : f32 to vector<2x32xf32>
    %520 = arith.cmpf ogt, %518, %519 : vector<2x32xf32>
    %521 = arith.extui %520 : vector<2x32xi1> to vector<2x32xi32>
    %522 = arith.sitofp %521 : vector<2x32xi32> to vector<2x32xf32>
    %523 = arith.addf %443, %522 : vector<2x32xf32>
    %524 = vector.extract_strided_slice %6 {offsets = [12, 0], sizes = [2, 32], strides = [1, 1]} : vector<16x32xf32> to vector<2x32xf32>
    %525 = arith.truncf %468 : vector<2x32xf32> to vector<2x32xbf16>
    %cst_178 = arith.constant dense<0.000000e+00> : vector<2x32xf32>
    %526 = tpu.matmul %525, %7, %cst_178 {dimension_numbers = #tpu.dot_dimension_numbers<[1], [0], [0], [1], [0, 0, 1, 1], [], []>} : vector<2x32xbf16>, vector<32x32xbf16>, vector<2x32xf32> -> vector<2x32xf32>
    %527 = arith.addf %524, %526 : vector<2x32xf32>
    %528 = arith.mulf %21, %450 : vector<2x32xf32>
    %529 = arith.mulf %23, %468 : vector<2x32xf32>
    %530 = arith.addf %528, %529 : vector<2x32xf32>
    %cst_179 = arith.constant 1.800000e+00 : f32
    %531 = vector.broadcast %cst_179 : f32 to vector<2x32xf32>
    %532 = arith.mulf %531, %530 : vector<2x32xf32>
    %cst_180 = arith.constant 0.00999999977 : f32
    %533 = vector.broadcast %cst_180 : f32 to vector<2x32xf32>
    %534 = arith.addf %533, %532 : vector<2x32xf32>
    %cst_181 = arith.constant 0.951229453 : f32
    %535 = vector.broadcast %cst_181 : f32 to vector<2x32xf32>
    %536 = arith.mulf %463, %535 : vector<2x32xf32>
    %cst_182 = arith.constant 0.0487705767 : f32
    %537 = vector.broadcast %cst_182 : f32 to vector<2x32xf32>
    %538 = arith.mulf %537, %527 : vector<2x32xf32>
    %539 = arith.addf %536, %538 : vector<2x32xf32>
    %540 = arith.mulf %534, %468 : vector<2x32xf32>
    %cst_183 = arith.constant 1.000000e+00 : f32
    %541 = vector.broadcast %cst_183 : f32 to vector<2x32xf32>
    %542 = arith.mulf %540, %541 : vector<2x32xf32>
    %543 = arith.subf %539, %542 : vector<2x32xf32>
    %544 = arith.subf %543, %534 : vector<2x32xf32>
    %cst_184 = arith.constant 0.000000e+00 : f32
    %545 = vector.broadcast %cst_184 : f32 to vector<2x32xf32>
    %546 = arith.cmpf ogt, %544, %545 : vector<2x32xf32>
    %547 = arith.extui %546 : vector<2x32xi1> to vector<2x32xi32>
    %548 = arith.sitofp %547 : vector<2x32xi32> to vector<2x32xf32>
    %549 = arith.truncf %548 : vector<2x32xf32> to vector<2x32xbf16>
    %cst_185 = arith.constant dense<0.000000e+00> : vector<2x32xf32>
    %550 = tpu.matmul %549, %8, %cst_185 {dimension_numbers = #tpu.dot_dimension_numbers<[1], [0], [0], [1], [0, 0, 1, 1], [], []>} : vector<2x32xbf16>, vector<32x32xbf16>, vector<2x32xf32> -> vector<2x32xf32>
    %551 = arith.truncf %495 : vector<2x32xf32> to vector<2x32xbf16>
    %cst_186 = arith.constant dense<0.000000e+00> : vector<2x32xf32>
    %552 = tpu.matmul %551, %9, %cst_186 {dimension_numbers = #tpu.dot_dimension_numbers<[1], [0], [0], [1], [0, 0, 1, 1], [], []>} : vector<2x32xbf16>, vector<32x32xbf16>, vector<2x32xf32> -> vector<2x32xf32>
    %553 = arith.addf %550, %552 : vector<2x32xf32>
    %554 = arith.addf %553, %15 : vector<2x32xf32>
    %555 = arith.mulf %26, %477 : vector<2x32xf32>
    %556 = arith.mulf %28, %495 : vector<2x32xf32>
    %557 = arith.addf %555, %556 : vector<2x32xf32>
    %cst_187 = arith.constant 1.800000e+00 : f32
    %558 = vector.broadcast %cst_187 : f32 to vector<2x32xf32>
    %559 = arith.mulf %558, %557 : vector<2x32xf32>
    %cst_188 = arith.constant 0.00999999977 : f32
    %560 = vector.broadcast %cst_188 : f32 to vector<2x32xf32>
    %561 = arith.addf %560, %559 : vector<2x32xf32>
    %cst_189 = arith.constant 0.951229453 : f32
    %562 = vector.broadcast %cst_189 : f32 to vector<2x32xf32>
    %563 = arith.mulf %490, %562 : vector<2x32xf32>
    %cst_190 = arith.constant 0.0487705767 : f32
    %564 = vector.broadcast %cst_190 : f32 to vector<2x32xf32>
    %565 = arith.mulf %564, %554 : vector<2x32xf32>
    %566 = arith.addf %563, %565 : vector<2x32xf32>
    %567 = arith.mulf %561, %495 : vector<2x32xf32>
    %cst_191 = arith.constant 1.000000e+00 : f32
    %568 = vector.broadcast %cst_191 : f32 to vector<2x32xf32>
    %569 = arith.mulf %567, %568 : vector<2x32xf32>
    %570 = arith.subf %566, %569 : vector<2x32xf32>
    %571 = arith.subf %570, %561 : vector<2x32xf32>
    %cst_192 = arith.constant 0.000000e+00 : f32
    %572 = vector.broadcast %cst_192 : f32 to vector<2x32xf32>
    %573 = arith.cmpf ogt, %571, %572 : vector<2x32xf32>
    %574 = arith.extui %573 : vector<2x32xi1> to vector<2x32xi32>
    %575 = arith.sitofp %574 : vector<2x32xi32> to vector<2x32xf32>
    %576 = arith.truncf %575 : vector<2x32xf32> to vector<2x32xbf16>
    %cst_193 = arith.constant dense<0.000000e+00> : vector<2x32xf32>
    %577 = tpu.matmul %576, %10, %cst_193 {dimension_numbers = #tpu.dot_dimension_numbers<[1], [0], [0], [1], [0, 0, 1, 1], [], []>} : vector<2x32xbf16>, vector<32x32xbf16>, vector<2x32xf32> -> vector<2x32xf32>
    %578 = arith.truncf %522 : vector<2x32xf32> to vector<2x32xbf16>
    %cst_194 = arith.constant dense<0.000000e+00> : vector<2x32xf32>
    %579 = tpu.matmul %578, %11, %cst_194 {dimension_numbers = #tpu.dot_dimension_numbers<[1], [0], [0], [1], [0, 0, 1, 1], [], []>} : vector<2x32xbf16>, vector<32x32xbf16>, vector<2x32xf32> -> vector<2x32xf32>
    %580 = arith.addf %577, %579 : vector<2x32xf32>
    %581 = arith.addf %580, %18 : vector<2x32xf32>
    %582 = arith.mulf %31, %504 : vector<2x32xf32>
    %583 = arith.mulf %33, %522 : vector<2x32xf32>
    %584 = arith.addf %582, %583 : vector<2x32xf32>
    %cst_195 = arith.constant 1.800000e+00 : f32
    %585 = vector.broadcast %cst_195 : f32 to vector<2x32xf32>
    %586 = arith.mulf %585, %584 : vector<2x32xf32>
    %cst_196 = arith.constant 0.00999999977 : f32
    %587 = vector.broadcast %cst_196 : f32 to vector<2x32xf32>
    %588 = arith.addf %587, %586 : vector<2x32xf32>
    %cst_197 = arith.constant 0.951229453 : f32
    %589 = vector.broadcast %cst_197 : f32 to vector<2x32xf32>
    %590 = arith.mulf %517, %589 : vector<2x32xf32>
    %cst_198 = arith.constant 0.0487705767 : f32
    %591 = vector.broadcast %cst_198 : f32 to vector<2x32xf32>
    %592 = arith.mulf %591, %581 : vector<2x32xf32>
    %593 = arith.addf %590, %592 : vector<2x32xf32>
    %594 = arith.mulf %588, %522 : vector<2x32xf32>
    %cst_199 = arith.constant 1.000000e+00 : f32
    %595 = vector.broadcast %cst_199 : f32 to vector<2x32xf32>
    %596 = arith.mulf %594, %595 : vector<2x32xf32>
    %597 = arith.subf %593, %596 : vector<2x32xf32>
    %598 = arith.subf %597, %588 : vector<2x32xf32>
    %cst_200 = arith.constant 0.000000e+00 : f32
    %599 = vector.broadcast %cst_200 : f32 to vector<2x32xf32>
    %600 = arith.cmpf ogt, %598, %599 : vector<2x32xf32>
    %601 = arith.extui %600 : vector<2x32xi1> to vector<2x32xi32>
    %602 = arith.sitofp %601 : vector<2x32xi32> to vector<2x32xf32>
    %603 = arith.addf %523, %602 : vector<2x32xf32>
    %604 = vector.extract_strided_slice %6 {offsets = [14, 0], sizes = [2, 32], strides = [1, 1]} : vector<16x32xf32> to vector<2x32xf32>
    %605 = arith.truncf %548 : vector<2x32xf32> to vector<2x32xbf16>
    %cst_201 = arith.constant dense<0.000000e+00> : vector<2x32xf32>
    %606 = tpu.matmul %605, %7, %cst_201 {dimension_numbers = #tpu.dot_dimension_numbers<[1], [0], [0], [1], [0, 0, 1, 1], [], []>} : vector<2x32xbf16>, vector<32x32xbf16>, vector<2x32xf32> -> vector<2x32xf32>
    %607 = arith.addf %604, %606 : vector<2x32xf32>
    %608 = arith.mulf %21, %530 : vector<2x32xf32>
    %609 = arith.mulf %23, %548 : vector<2x32xf32>
    %610 = arith.addf %608, %609 : vector<2x32xf32>
    %cst_202 = arith.constant 1.800000e+00 : f32
    %611 = vector.broadcast %cst_202 : f32 to vector<2x32xf32>
    %612 = arith.mulf %611, %610 : vector<2x32xf32>
    %cst_203 = arith.constant 0.00999999977 : f32
    %613 = vector.broadcast %cst_203 : f32 to vector<2x32xf32>
    %614 = arith.addf %613, %612 : vector<2x32xf32>
    %cst_204 = arith.constant 0.951229453 : f32
    %615 = vector.broadcast %cst_204 : f32 to vector<2x32xf32>
    %616 = arith.mulf %543, %615 : vector<2x32xf32>
    %cst_205 = arith.constant 0.0487705767 : f32
    %617 = vector.broadcast %cst_205 : f32 to vector<2x32xf32>
    %618 = arith.mulf %617, %607 : vector<2x32xf32>
    %619 = arith.addf %616, %618 : vector<2x32xf32>
    %620 = arith.mulf %614, %548 : vector<2x32xf32>
    %cst_206 = arith.constant 1.000000e+00 : f32
    %621 = vector.broadcast %cst_206 : f32 to vector<2x32xf32>
    %622 = arith.mulf %620, %621 : vector<2x32xf32>
    %623 = arith.subf %619, %622 : vector<2x32xf32>
    %624 = arith.subf %623, %614 : vector<2x32xf32>
    %cst_207 = arith.constant 0.000000e+00 : f32
    %625 = vector.broadcast %cst_207 : f32 to vector<2x32xf32>
    %626 = arith.cmpf ogt, %624, %625 : vector<2x32xf32>
    %627 = arith.extui %626 : vector<2x32xi1> to vector<2x32xi32>
    %628 = arith.sitofp %627 : vector<2x32xi32> to vector<2x32xf32>
    %629 = arith.truncf %628 : vector<2x32xf32> to vector<2x32xbf16>
    %cst_208 = arith.constant dense<0.000000e+00> : vector<2x32xf32>
    %630 = tpu.matmul %629, %8, %cst_208 {dimension_numbers = #tpu.dot_dimension_numbers<[1], [0], [0], [1], [0, 0, 1, 1], [], []>} : vector<2x32xbf16>, vector<32x32xbf16>, vector<2x32xf32> -> vector<2x32xf32>
    %631 = arith.truncf %575 : vector<2x32xf32> to vector<2x32xbf16>
    %cst_209 = arith.constant dense<0.000000e+00> : vector<2x32xf32>
    %632 = tpu.matmul %631, %9, %cst_209 {dimension_numbers = #tpu.dot_dimension_numbers<[1], [0], [0], [1], [0, 0, 1, 1], [], []>} : vector<2x32xbf16>, vector<32x32xbf16>, vector<2x32xf32> -> vector<2x32xf32>
    %633 = arith.addf %630, %632 : vector<2x32xf32>
    %634 = arith.addf %633, %15 : vector<2x32xf32>
    %635 = arith.mulf %26, %557 : vector<2x32xf32>
    %636 = arith.mulf %28, %575 : vector<2x32xf32>
    %637 = arith.addf %635, %636 : vector<2x32xf32>
    %cst_210 = arith.constant 1.800000e+00 : f32
    %638 = vector.broadcast %cst_210 : f32 to vector<2x32xf32>
    %639 = arith.mulf %638, %637 : vector<2x32xf32>
    %cst_211 = arith.constant 0.00999999977 : f32
    %640 = vector.broadcast %cst_211 : f32 to vector<2x32xf32>
    %641 = arith.addf %640, %639 : vector<2x32xf32>
    %cst_212 = arith.constant 0.951229453 : f32
    %642 = vector.broadcast %cst_212 : f32 to vector<2x32xf32>
    %643 = arith.mulf %570, %642 : vector<2x32xf32>
    %cst_213 = arith.constant 0.0487705767 : f32
    %644 = vector.broadcast %cst_213 : f32 to vector<2x32xf32>
    %645 = arith.mulf %644, %634 : vector<2x32xf32>
    %646 = arith.addf %643, %645 : vector<2x32xf32>
    %647 = arith.mulf %641, %575 : vector<2x32xf32>
    %cst_214 = arith.constant 1.000000e+00 : f32
    %648 = vector.broadcast %cst_214 : f32 to vector<2x32xf32>
    %649 = arith.mulf %647, %648 : vector<2x32xf32>
    %650 = arith.subf %646, %649 : vector<2x32xf32>
    %651 = arith.subf %650, %641 : vector<2x32xf32>
    %cst_215 = arith.constant 0.000000e+00 : f32
    %652 = vector.broadcast %cst_215 : f32 to vector<2x32xf32>
    %653 = arith.cmpf ogt, %651, %652 : vector<2x32xf32>
    %654 = arith.extui %653 : vector<2x32xi1> to vector<2x32xi32>
    %655 = arith.sitofp %654 : vector<2x32xi32> to vector<2x32xf32>
    %656 = arith.truncf %655 : vector<2x32xf32> to vector<2x32xbf16>
    %cst_216 = arith.constant dense<0.000000e+00> : vector<2x32xf32>
    %657 = tpu.matmul %656, %10, %cst_216 {dimension_numbers = #tpu.dot_dimension_numbers<[1], [0], [0], [1], [0, 0, 1, 1], [], []>} : vector<2x32xbf16>, vector<32x32xbf16>, vector<2x32xf32> -> vector<2x32xf32>
    %658 = arith.truncf %602 : vector<2x32xf32> to vector<2x32xbf16>
    %cst_217 = arith.constant dense<0.000000e+00> : vector<2x32xf32>
    %659 = tpu.matmul %658, %11, %cst_217 {dimension_numbers = #tpu.dot_dimension_numbers<[1], [0], [0], [1], [0, 0, 1, 1], [], []>} : vector<2x32xbf16>, vector<32x32xbf16>, vector<2x32xf32> -> vector<2x32xf32>
    %660 = arith.addf %657, %659 : vector<2x32xf32>
    %661 = arith.addf %660, %18 : vector<2x32xf32>
    %662 = arith.mulf %31, %584 : vector<2x32xf32>
    %663 = arith.mulf %33, %602 : vector<2x32xf32>
    %664 = arith.addf %662, %663 : vector<2x32xf32>
    %cst_218 = arith.constant 1.800000e+00 : f32
    %665 = vector.broadcast %cst_218 : f32 to vector<2x32xf32>
    %666 = arith.mulf %665, %664 : vector<2x32xf32>
    %cst_219 = arith.constant 0.00999999977 : f32
    %667 = vector.broadcast %cst_219 : f32 to vector<2x32xf32>
    %668 = arith.addf %667, %666 : vector<2x32xf32>
    %cst_220 = arith.constant 0.951229453 : f32
    %669 = vector.broadcast %cst_220 : f32 to vector<2x32xf32>
    %670 = arith.mulf %597, %669 : vector<2x32xf32>
    %cst_221 = arith.constant 0.0487705767 : f32
    %671 = vector.broadcast %cst_221 : f32 to vector<2x32xf32>
    %672 = arith.mulf %671, %661 : vector<2x32xf32>
    %673 = arith.addf %670, %672 : vector<2x32xf32>
    %674 = arith.mulf %668, %602 : vector<2x32xf32>
    %cst_222 = arith.constant 1.000000e+00 : f32
    %675 = vector.broadcast %cst_222 : f32 to vector<2x32xf32>
    %676 = arith.mulf %674, %675 : vector<2x32xf32>
    %677 = arith.subf %673, %676 : vector<2x32xf32>
    %678 = arith.subf %677, %668 : vector<2x32xf32>
    %cst_223 = arith.constant 0.000000e+00 : f32
    %679 = vector.broadcast %cst_223 : f32 to vector<2x32xf32>
    %680 = arith.cmpf ogt, %678, %679 : vector<2x32xf32>
    %681 = arith.extui %680 : vector<2x32xi1> to vector<2x32xi32>
    %682 = arith.sitofp %681 : vector<2x32xi32> to vector<2x32xf32>
    %683 = arith.addf %603, %682 : vector<2x32xf32>
    %684 = arith.truncf %683 : vector<2x32xf32> to vector<2x32xbf16>
    %cst_224 = arith.constant dense<0.000000e+00> : vector<2x10xf32>
    %685 = tpu.matmul %684, %12, %cst_224 {dimension_numbers = #tpu.dot_dimension_numbers<[1], [0], [0], [1], [0, 0, 1, 1], [], []>} : vector<2x32xbf16>, vector<32x10xbf16>, vector<2x10xf32> -> vector<2x10xf32>
    %c0_225 = arith.constant 0 : index
    %c0_226 = arith.constant 0 : index
    %686 = vector.load %arg15[%c0_225, %c0_226] : memref<1x10xf32, #tpu.memory_space<vmem>>, vector<1x10xf32>
    %687 = vector.shape_cast %686 : vector<1x10xf32> to vector<1x10xf32>
    %688 = vector.broadcast %687 : vector<1x10xf32> to vector<2x10xf32>
    %cst_227 = arith.constant 8.000000e+00 : f32
    %689 = vector.broadcast %cst_227 : f32 to vector<2x10xf32>
    %690 = arith.mulf %689, %688 : vector<2x10xf32>
    %691 = arith.addf %685, %690 : vector<2x10xf32>
    %c0_228 = arith.constant 0 : index
    %c0_229 = arith.constant 0 : index
    %692 = vector.load %arg16[%c0_228, %c0_229] : memref<2x10xf32, #tpu.memory_space<vmem>>, vector<2x10xf32>
    tpu.vector_store %arg16[%c0_228, %c0_229], %691 {strides = array<i32>} : memref<2x10xf32, #tpu.memory_space<vmem>>, vector<2x10xf32>,
    return
  }
  func.func @transform_0(%arg0: i32) -> (i32, i32) {
    %c0_i32 = arith.constant 0 : i32
    %c0_i32_0 = arith.constant 0 : i32
    %c0_i32_1 = arith.constant 0 : i32
    return %c0_i32, %c0_i32_0 : i32, i32
  }
  func.func @transform_1(%arg0: i32) -> (i32, i32) {
    %c0_i32 = arith.constant 0 : i32
    %c0_i32_0 = arith.constant 0 : i32
    %c0_i32_1 = arith.constant 0 : i32
    return %c0_i32, %c0_i32_0 : i32, i32
  }
  func.func @transform_2(%arg0: i32) -> (i32, i32) {
    %c0_i32 = arith.constant 0 : i32
    %c0_i32_0 = arith.constant 0 : i32
    %c0_i32_1 = arith.constant 0 : i32
    return %c0_i32, %c0_i32_0 : i32, i32
  }
  func.func @transform_3(%arg0: i32) -> (i32, i32) {
    %c0_i32 = arith.constant 0 : i32
    %c0_i32_0 = arith.constant 0 : i32
    %c0_i32_1 = arith.constant 0 : i32
    return %c0_i32, %c0_i32_0 : i32, i32
  }
  func.func @transform_4(%arg0: i32) -> (i32, i32) {
    %c0_i32 = arith.constant 0 : i32
    %c0_i32_0 = arith.constant 0 : i32
    %c0_i32_1 = arith.constant 0 : i32
    return %c0_i32, %c0_i32_0 : i32, i32
  }
  func.func @transform_5(%arg0: i32) -> (i32, i32) {
    %c0_i32 = arith.constant 0 : i32
    %c0_i32_0 = arith.constant 0 : i32
    %c0_i32_1 = arith.constant 0 : i32
    return %c0_i32, %c0_i32_0 : i32, i32
  }
  func.func @transform_6(%arg0: i32) -> (i32, i32) {
    %c0_i32 = arith.constant 0 : i32
    %c0_i32_0 = arith.constant 0 : i32
    %c0_i32_1 = arith.constant 0 : i32
    return %c0_i32, %c0_i32_0 : i32, i32
  }
  func.func @transform_7(%arg0: i32) -> (i32, i32) {
    %c0_i32 = arith.constant 0 : i32
    %c0_i32_0 = arith.constant 0 : i32
    %c0_i32_1 = arith.constant 0 : i32
    return %c0_i32, %c0_i32_0 : i32, i32
  }
  func.func @transform_8(%arg0: i32) -> (i32, i32) {
    %c0_i32 = arith.constant 0 : i32
    %c0_i32_0 = arith.constant 0 : i32
    %c0_i32_1 = arith.constant 0 : i32
    return %c0_i32, %c0_i32_0 : i32, i32
  }
  func.func @transform_9(%arg0: i32) -> (i32, i32) {
    %c0_i32 = arith.constant 0 : i32
    %c0_i32_0 = arith.constant 0 : i32
    %c0_i32_1 = arith.constant 0 : i32
    return %c0_i32, %c0_i32_0 : i32, i32
  }
  func.func @transform_10(%arg0: i32) -> (i32, i32) {
    %c0_i32 = arith.constant 0 : i32
    %c0_i32_0 = arith.constant 0 : i32
    %c0_i32_1 = arith.constant 0 : i32
    return %c0_i32, %c0_i32_0 : i32, i32
  }
  func.func @transform_11(%arg0: i32) -> (i32, i32) {
    %c0_i32 = arith.constant 0 : i32
    %c0_i32_0 = arith.constant 0 : i32
    %c0_i32_1 = arith.constant 0 : i32
    return %c0_i32, %c0_i32_0 : i32, i32
  }
  func.func @transform_12(%arg0: i32) -> (i32, i32) {
    %c0_i32 = arith.constant 0 : i32
    %c0_i32_0 = arith.constant 0 : i32
    %c0_i32_1 = arith.constant 0 : i32
    return %c0_i32, %c0_i32_0 : i32, i32
  }
  func.func @transform_13(%arg0: i32) -> (i32, i32) {
    %c0_i32 = arith.constant 0 : i32
    %c0_i32_0 = arith.constant 0 : i32
    %c0_i32_1 = arith.constant 0 : i32
    return %c0_i32, %c0_i32_0 : i32, i32
  }
  func.func @transform_14(%arg0: i32) -> (i32, i32) {
    %c0_i32 = arith.constant 0 : i32
    %c0_i32_0 = arith.constant 0 : i32
    %c0_i32_1 = arith.constant 0 : i32
    return %c0_i32, %c0_i32_0 : i32, i32
  }
  func.func @transform_15(%arg0: i32) -> (i32, i32) {
    %c0_i32 = arith.constant 0 : i32
    %c0_i32_0 = arith.constant 0 : i32
    %c0_i32_1 = arith.constant 0 : i32
    return %c0_i32, %c0_i32_0 : i32, i32
  }
}

</mosaic_0001>

<llo_original>
// kernel: tpu_custom_call.1
$region0: #{tpu_custom_call.1}
  #allocation0 [shape = 'u32[]', space=smem, size = 0x4, offset = 0x4, fixed_abs, tag = 'smem constant byte address 0x4 - core index']
  #allocation1 [shape = 'u32[144,128]{1,0:T(1,128)}', space=vmem, size = 0x12000, scoped, tag = 'internal scratch']
  %s0 = inlined_call_operand.vmem [shape: bf16[16,128], index: 0, kind: input, shape index: {}]
  %s1 = inlined_call_operand.vmem [shape: bf16[128,32], index: 1, kind: input, shape index: {}]
  %s2 = inlined_call_operand.vmem [shape: bf16[32,32], index: 2, kind: input, shape index: {}]
  %s3 = inlined_call_operand.vmem [shape: f32[1,32], index: 3, kind: input, shape index: {}]
  %s4 = inlined_call_operand.vmem [shape: f32[1,32], index: 4, kind: input, shape index: {}]
  %s5 = inlined_call_operand.vmem [shape: bf16[32,32], index: 5, kind: input, shape index: {}]
  %s6 = inlined_call_operand.vmem [shape: bf16[32,32], index: 6, kind: input, shape index: {}]
  %s7 = inlined_call_operand.vmem [shape: f32[1,32], index: 7, kind: input, shape index: {}]
  %s8 = inlined_call_operand.vmem [shape: f32[1,32], index: 8, kind: input, shape index: {}]
  %s9 = inlined_call_operand.vmem [shape: bf16[32,32], index: 9, kind: input, shape index: {}]
  %s10 = inlined_call_operand.vmem [shape: bf16[32,32], index: 10, kind: input, shape index: {}]
  %s11 = inlined_call_operand.vmem [shape: f32[1,32], index: 11, kind: input, shape index: {}]
  %s12 = inlined_call_operand.vmem [shape: f32[1,32], index: 12, kind: input, shape index: {}]
  %s13 = inlined_call_operand.vmem [shape: bf16[32,10], index: 13, kind: input, shape index: {}]
  %s14 = inlined_call_operand.vmem [shape: f32[1,10], index: 14, kind: input, shape index: {}]
  %s15 = inlined_call_operand.hbm [shape: f32[2,10], index: 15, kind: output, shape index: {}]
  %s16 = sld [smem:[#allocation0]]
  $region70: #{tpu_custom_call.1} parent=0
    _
  %s18 = ssub.s32 1, %s16
  %s19 = scalar_select 0, %s18, %s16
  $region1: #{tpu_custom_call.1} parent=0
    #allocation2 [shape = 'u8[1024]{0}', space=vmem, size = 0x400, scoped, tag = 'output window, operand 0, single buffered']
    #allocation3 [shape = 's32[1]{0}', space=sflag, size = 0x4, scoped, tag = 'scoped memory for tpu_custom_call.1']
    %20 = vsyncpa [#allocation3], 0
    // Predicated region
    $region2: #{tpu_custom_call.1} parent=1 // pred_check
      _
    $region3: #{tpu_custom_call.1} parent=1 // pred_check_branch
      %22 = sbr.rel (0) target = $region5
    $region4: #{tpu_custom_call.1} parent=1 // pred_region
      _
    $region5: #{tpu_custom_call.1} parent=1 // pred_fallthru
      _
    // Predicated region
    $region6: #{tpu_custom_call.1} parent=1 // pred_check
      _
    $region7: #{tpu_custom_call.1} parent=1 // pred_check_branch
      %24 = sbr.rel (0) target = $region9
    $region8: #{tpu_custom_call.1} parent=1 // pred_region
      _
    $region9: #{tpu_custom_call.1} parent=1 // pred_fallthru
      _
    // Predicated region
    $region10: #{tpu_custom_call.1} parent=1 // pred_check
      _
    $region11: #{tpu_custom_call.1} parent=1 // pred_check_branch
      %26 = sbr.rel (0) target = $region13
    $region12: #{tpu_custom_call.1} parent=1 // pred_region
      _
    $region13: #{tpu_custom_call.1} parent=1 // pred_fallthru
      _
    // Predicated region
    $region14: #{tpu_custom_call.1} parent=1 // pred_check
      _
    $region15: #{tpu_custom_call.1} parent=1 // pred_check_branch
      %28 = sbr.rel (0) target = $region17
    $region16: #{tpu_custom_call.1} parent=1 // pred_region
      _
    $region17: #{tpu_custom_call.1} parent=1 // pred_fallthru
      _
    // Predicated region
    $region18: #{tpu_custom_call.1} parent=1 // pred_check
      _
    $region19: #{tpu_custom_call.1} parent=1 // pred_check_branch
      %30 = sbr.rel (0) target = $region21
    $region20: #{tpu_custom_call.1} parent=1 // pred_region
      _
    $region21: #{tpu_custom_call.1} parent=1 // pred_fallthru
      _
    // Predicated region
    $region22: #{tpu_custom_call.1} parent=1 // pred_check
      _
    $region23: #{tpu_custom_call.1} parent=1 // pred_check_branch
      %32 = sbr.rel (0) target = $region25
    $region24: #{tpu_custom_call.1} parent=1 // pred_region
      _
    $region25: #{tpu_custom_call.1} parent=1 // pred_fallthru
      _
    // Predicated region
    $region26: #{tpu_custom_call.1} parent=1 // pred_check
      _
    $region27: #{tpu_custom_call.1} parent=1 // pred_check_branch
      %34 = sbr.rel (0) target = $region29
    $region28: #{tpu_custom_call.1} parent=1 // pred_region
      _
    $region29: #{tpu_custom_call.1} parent=1 // pred_fallthru
      _
    // Predicated region
    $region30: #{tpu_custom_call.1} parent=1 // pred_check
      _
    $region31: #{tpu_custom_call.1} parent=1 // pred_check_branch
      %36 = sbr.rel (0) target = $region33
    $region32: #{tpu_custom_call.1} parent=1 // pred_region
      _
    $region33: #{tpu_custom_call.1} parent=1 // pred_fallthru
      _
    // Predicated region
    $region34: #{tpu_custom_call.1} parent=1 // pred_check
      _
    $region35: #{tpu_custom_call.1} parent=1 // pred_check_branch
      %38 = sbr.rel (0) target = $region37
    $region36: #{tpu_custom_call.1} parent=1 // pred_region
      _
    $region37: #{tpu_custom_call.1} parent=1 // pred_fallthru
      _
    // Predicated region
    $region38: #{tpu_custom_call.1} parent=1 // pred_check
      _
    $region39: #{tpu_custom_call.1} parent=1 // pred_check_branch
      %40 = sbr.rel (0) target = $region41
    $region40: #{tpu_custom_call.1} parent=1 // pred_region
      _
    $region41: #{tpu_custom_call.1} parent=1 // pred_fallthru
      _
    // Predicated region
    $region42: #{tpu_custom_call.1} parent=1 // pred_check
      _
    $region43: #{tpu_custom_call.1} parent=1 // pred_check_branch
      %42 = sbr.rel (0) target = $region45
    $region44: #{tpu_custom_call.1} parent=1 // pred_region
      _
    $region45: #{tpu_custom_call.1} parent=1 // pred_fallthru
      _
    // Predicated region
    $region46: #{tpu_custom_call.1} parent=1 // pred_check
      _
    $region47: #{tpu_custom_call.1} parent=1 // pred_check_branch
      %44 = sbr.rel (0) target = $region49
    $region48: #{tpu_custom_call.1} parent=1 // pred_region
      _
    $region49: #{tpu_custom_call.1} parent=1 // pred_fallthru
      _
    // Predicated region
    $region50: #{tpu_custom_call.1} parent=1 // pred_check
      _
    $region51: #{tpu_custom_call.1} parent=1 // pred_check_branch
      %46 = sbr.rel (0) target = $region53
    $region52: #{tpu_custom_call.1} parent=1 // pred_region
      _
    $region53: #{tpu_custom_call.1} parent=1 // pred_fallthru
      _
    // Predicated region
    $region54: #{tpu_custom_call.1} parent=1 // pred_check
      _
    $region55: #{tpu_custom_call.1} parent=1 // pred_check_branch
      %48 = sbr.rel (0) target = $region57
    $region56: #{tpu_custom_call.1} parent=1 // pred_region
      _
    $region57: #{tpu_custom_call.1} parent=1 // pred_fallthru
      _
    // Predicated region
    $region58: #{tpu_custom_call.1} parent=1 // pred_check
      _
    $region59: #{tpu_custom_call.1} parent=1 // pred_check_branch
      %50 = sbr.rel (0) target = $region61
    $region60: #{tpu_custom_call.1} parent=1 // pred_region
      _
    $region61: #{tpu_custom_call.1} parent=1 // pred_fallthru
      _
    %v52 = vld [vmem:[%s0] sm:$0xf]
    %v53 = vld [vmem:[%s0 + $0x4] sm:$0xf]
    %v54 = vld [vmem:[%s1] sm:$0xf]
    %v55 = vld [vmem:[%s1 + $0x4] sm:$0xf]
    %v56 = vld [vmem:[%s1 + $0x8] sm:$0xf]
    %v57 = vld [vmem:[%s1 + $0xc] sm:$0xf]
    %v58 = vld [vmem:[%s1 + $0x10] sm:$0xf]
    %v59 = vld [vmem:[%s1 + $0x14] sm:$0xf]
    %v60 = vld [vmem:[%s1 + $0x18] sm:$0xf]
    %v61 = vld [vmem:[%s1 + $0x1c] sm:$0xf]
    %v62 = vld [vmem:[%s1 + $0x20] sm:$0xf]
    %v63 = vld [vmem:[%s1 + $0x24] sm:$0xf]
    %v64 = vld [vmem:[%s1 + $0x28] sm:$0xf]
    %v65 = vld [vmem:[%s1 + $0x2c] sm:$0xf]
    %v66 = vld [vmem:[%s1 + $0x30] sm:$0xf]
    %v67 = vld [vmem:[%s1 + $0x34] sm:$0xf]
    %v68 = vld [vmem:[%s1 + $0x38] sm:$0xf]
    %v69 = vld [vmem:[%s1 + $0x3c] sm:$0xf]
    %v70 = vld [vmem:[%s3] sm:$0x1]
    %v72 = vlaneseq
    %v73 = vshrl.u32 %v72, 7
    %v74 = vsub.s32 0, %v73
    %v75 = vrot.slane %v70, %v74
    %v79 = vunpack.c.l.b16 %v52
    %v80 = vunpack.c.l.b16 %v53
    %v81 = vpack.c.b16 %v80, %v79
    %v99 = vunpack.c.l.b16 %v54
    %v100 = vunpack.c.l.b16 %v55
    %v101 = vunpack.c.l.b16 %v56
    %v102 = vunpack.c.l.b16 %v57
    %v103 = vunpack.c.l.b16 %v58
    %v104 = vunpack.c.l.b16 %v59
    %v105 = vunpack.c.l.b16 %v60
    %v106 = vunpack.c.l.b16 %v61
    %v107 = vunpack.c.l.b16 %v62
    %v108 = vunpack.c.l.b16 %v63
    %v109 = vunpack.c.l.b16 %v64
    %v110 = vunpack.c.l.b16 %v65
    %v111 = vunpack.c.l.b16 %v66
    %v112 = vunpack.c.l.b16 %v67
    %v113 = vunpack.c.l.b16 %v68
    %v114 = vunpack.c.l.b16 %v69
    %v115 = vpack.c.b16 %v100, %v99
    %v116 = vpack.c.b16 %v102, %v101
    %v117 = vpack.c.b16 %v104, %v103
    %v118 = vpack.c.b16 %v106, %v105
    %v119 = vpack.c.b16 %v108, %v107
    %v120 = vpack.c.b16 %v110, %v109
    %v121 = vpack.c.b16 %v112, %v111
    %v122 = vpack.c.b16 %v114, %v113
    %131 = vmatprep.subr.bf16.mxu0 0
    %132 = vmatpush1.bf16.msra.mxu0 %v115
    %133 = vmatprep.subr.bf16.mxu0 0
    %134 = vmatpush1.bf16.msra.mxu0 %v116
    %135 = vmatprep.subr.bf16.mxu0 0
    %136 = vmatpush1.bf16.msra.mxu0 %v117
    %137 = vmatprep.subr.bf16.mxu0 0
    %138 = vmatpush1.bf16.msra.mxu0 %v118
    %139 = vmatprep.subr.bf16.mxu0 0
    %140 = vmatpush1.bf16.msra.mxu0 %v119
    %141 = vmatprep.subr.bf16.mxu0 0
    %142 = vmatpush1.bf16.msra.mxu0 %v120
    %143 = vmatprep.subr.bf16.mxu0 0
    %144 = vmatpush1.bf16.msra.mxu0 %v121
    %145 = vmatprep.subr.bf16.mxu0 0
    %146 = vmatpush1.bf16.msra.mxu0 %v122
    %147 = vmatprep.subr.bf16.mxu0 0
    %148 = vmatpush1.bf16.msra.mxu0 0
    %149 = vmatprep.subr.bf16.mxu0 0
    %150 = vmatpush1.bf16.msra.mxu0 0
    %151 = vmatprep.subr.bf16.mxu0 0
    %152 = vmatpush1.bf16.msra.mxu0 0
    %153 = vmatprep.subr.bf16.mxu0 0
    %154 = vmatpush1.bf16.msra.mxu0 0
    %155 = vmatprep.subr.bf16.mxu0 0
    %156 = vmatpush1.bf16.msra.mxu0 0
    %157 = vmatprep.subr.bf16.mxu0 0
    %158 = vmatpush1.bf16.msra.mxu0 0
    %159 = vmatprep.subr.bf16.mxu0 0
    %160 = vmatpush1.bf16.msra.mxu0 0
    %161 = vmatprep.subr.bf16.mxu0 0
    %162 = vmatpush1.bf16.msra.mxu0 0
    %163 = vmatprep.mubr.bf16.mxu0 0
    %164 = vmatmul.mubr.bf16.gmra.mrb[0].mxu0 %v81
    %v165 = vpop.f32.mrb[0].mxu0
    %v166 = vadd.f32 %v75, %v165
    %v167 = vpop.f32.mrb[0].mxu0
    %v168 = vpop.f32.mrb[0].mxu0
    %v169 = vadd.f32 %v75, %v168
    %v170 = vpop.f32.mrb[0].mxu0
    %171 = vdwg.mxu0
    %v172 = vld [vmem:[%s2] sm:$0xf]
    %v173 = vld [vmem:[%s2 + $0x4] sm:$0xf]
    %v174 = vld [vmem:[%s2 + $0x8] sm:$0xf]
    %v175 = vld [vmem:[%s2 + $0xc] sm:$0xf]
    %v176 = vld [vmem:[%s5] sm:$0xf]
    %v177 = vld [vmem:[%s5 + $0x4] sm:$0xf]
    %v178 = vld [vmem:[%s5 + $0x8] sm:$0xf]
    %v179 = vld [vmem:[%s5 + $0xc] sm:$0xf]
    %v180 = vld [vmem:[%s6] sm:$0xf]
    %v181 = vld [vmem:[%s6 + $0x4] sm:$0xf]
    %v182 = vld [vmem:[%s6 + $0x8] sm:$0xf]
    %v183 = vld [vmem:[%s6 + $0xc] sm:$0xf]
    %v184 = vld [vmem:[%s9] sm:$0xf]
    %v185 = vld [vmem:[%s9 + $0x4] sm:$0xf]
    %v186 = vld [vmem:[%s9 + $0x8] sm:$0xf]
    %v187 = vld [vmem:[%s9 + $0xc] sm:$0xf]
    %v188 = vld [vmem:[%s10] sm:$0xf]
    %v189 = vld [vmem:[%s10 + $0x4] sm:$0xf]
    %v190 = vld [vmem:[%s10 + $0x8] sm:$0xf]
    %v191 = vld [vmem:[%s10 + $0xc] sm:$0xf]
    %v192 = vld [vmem:[%s13] sm:$0xf]
    %v193 = vld [vmem:[%s13 + $0x4] sm:$0xf]
    %v194 = vld [vmem:[%s13 + $0x8] sm:$0xf]
    %v195 = vld [vmem:[%s13 + $0xc] sm:$0xf]
    %v196 = vld [vmem:[%s7] sm:$0x1]
    %v198 = vlaneseq
    %v199 = vshrl.u32 %v198, 7
    %v200 = vsub.s32 0, %v199
    %v201 = vrot.slane %v196, %v200
    %v203 = vld [vmem:[%s11] sm:$0x1]
    %v205 = vlaneseq
    %v206 = vshrl.u32 %v205, 7
    %v207 = vsub.s32 0, %v206
    %v208 = vrot.slane %v203, %v207
    %v210 = vld [vmem:[%s4] sm:$0x1]
    %v212 = vlaneseq
    %v213 = vshrl.u32 %v212, 7
    %v214 = vsub.s32 0, %v213
    %v215 = vrot.slane %v210, %v214
    %v217 = vsub.f32 1.0, %v215
    %v218 = vld [vmem:[%s8] sm:$0x1]
    %v220 = vlaneseq
    %v221 = vshrl.u32 %v220, 7
    %v222 = vsub.s32 0, %v221
    %v223 = vrot.slane %v218, %v222
    %v225 = vsub.f32 1.0, %v223
    %v226 = vld [vmem:[%s12] sm:$0x1]
    %v228 = vlaneseq
    %v229 = vshrl.u32 %v228, 7
    %v230 = vsub.s32 0, %v229
    %v231 = vrot.slane %v226, %v230
    %v233 = vsub.f32 1.0, %v231
    %v238 = vunpack.c.l.b16 %v172
    %v239 = vunpack.c.l.b16 %v173
    %v240 = vunpack.c.l.b16 %v174
    %v241 = vunpack.c.l.b16 %v175
    %v242 = vpack.c.b16 %v239, %v238
    %v243 = vpack.c.b16 %v241, %v240
    %vm246 = vcmask 261120
    %v248 = vsel %vm246, 0, 0
    %250 = vmatprep.subr.bf16.mxu0 0
    %251 = vmatpush1.bf16.msra.mxu0 %v242
    %252 = vmatprep.subr.bf16.mxu0 0
    %253 = vmatpush1.bf16.msra.mxu0 %v243
    %254 = vmatprep.subr.bf16.mxu0 0
    %255 = vmatpush1.bf16.msra.mxu0 0
    %256 = vmatprep.subr.bf16.mxu0 0
    %257 = vmatpush1.bf16.msra.mxu0 0
    %258 = vmatprep.subr.bf16.mxu0 0
    %259 = vmatpush1.bf16.msra.mxu0 0
    %260 = vmatprep.subr.bf16.mxu0 0
    %261 = vmatpush1.bf16.msra.mxu0 0
    %262 = vmatprep.subr.bf16.mxu0 0
    %263 = vmatpush1.bf16.msra.mxu0 0
    %264 = vmatprep.subr.bf16.mxu0 0
    %265 = vmatpush1.bf16.msra.mxu0 0
    %266 = vmatprep.subr.bf16.mxu0 0
    %267 = vmatpush1.bf16.msra.mxu0 0
    %268 = vmatprep.subr.bf16.mxu0 0
    %269 = vmatpush1.bf16.msra.mxu0 0
    %270 = vmatprep.subr.bf16.mxu0 0
    %271 = vmatpush1.bf16.msra.mxu0 0
    %272 = vmatprep.subr.bf16.mxu0 0
    %273 = vmatpush1.bf16.msra.mxu0 0
    %274 = vmatprep.subr.bf16.mxu0 0
    %275 = vmatpush1.bf16.msra.mxu0 0
    %276 = vmatprep.subr.bf16.mxu0 0
    %277 = vmatpush1.bf16.msra.mxu0 0
    %278 = vmatprep.subr.bf16.mxu0 0
    %279 = vmatpush1.bf16.msra.mxu0 0
    %280 = vmatprep.subr.bf16.mxu0 0
    %281 = vmatpush1.bf16.msra.mxu0 0
    %282 = vmatprep.mubr.bf16.mxu0 0
    %283 = vmatmul.mubr.bf16.gmra.mrb[0].mxu0 %v248
    %v284 = vpop.f32.mrb[0].mxu0
    %v285 = vadd.f32 0.0, %v284
    %v286 = vpop.f32.mrb[0].mxu0
    %v287 = vpop.f32.mrb[0].mxu0
    %v288 = vpop.f32.mrb[0].mxu0
    %289 = vdwg.mxu0
    %v290 = vadd.f32 %v166, %v285
    %v291 = vmul.f32 %v215, 0.01
    %v292 = vmul.f32 %v217, 0.0
    %v293 = vadd.f32 %v291, %v292
    %v294 = vmul.f32 %v293, 1.8
    %v295 = vadd.f32 %v294, 0.01
    %v296 = vmul.f32 %v290, 0.048770577
    %v297 = vadd.f32 %v296, 0.0
    %v298 = vmul.f32 %v295, 0.0
    %v299 = vsub.f32 %v297, %v298
    %v300 = vsub.f32 %v299, %v295
    %vm301 = vcmp.gt.f32.partialorder %v300, 0.0
    %v302 = vsel %vm301, 1, 0
    %v303 = vcvt.s32.f32 %v302
    %v304 = vpack.c.bf16 %v303, %v303
    %v309 = vunpack.c.l.b16 %v180
    %v310 = vunpack.c.l.b16 %v181
    %v311 = vunpack.c.l.b16 %v182
    %v312 = vunpack.c.l.b16 %v183
    %v313 = vpack.c.b16 %v310, %v309
    %v314 = vpack.c.b16 %v312, %v311
    %317 = vmatprep.subr.bf16.mxu0 0
    %318 = vmatpush1.bf16.msra.mxu0 %v313
    %319 = vmatprep.subr.bf16.mxu0 0
    %320 = vmatpush1.bf16.msra.mxu0 %v314
    %321 = vmatprep.subr.bf16.mxu0 0
    %322 = vmatpush1.bf16.msra.mxu0 0
    %323 = vmatprep.subr.bf16.mxu0 0
    %324 = vmatpush1.bf16.msra.mxu0 0
    %325 = vmatprep.subr.bf16.mxu0 0
    %326 = vmatpush1.bf16.msra.mxu0 0
    %327 = vmatprep.subr.bf16.mxu0 0
    %328 = vmatpush1.bf16.msra.mxu0 0
    %329 = vmatprep.subr.bf16.mxu0 0
    %330 = vmatpush1.bf16.msra.mxu0 0
    %331 = vmatprep.subr.bf16.mxu0 0
    %332 = vmatpush1.bf16.msra.mxu0 0
    %333 = vmatprep.subr.bf16.mxu0 0
    %334 = vmatpush1.bf16.msra.mxu0 0
    %335 = vmatprep.subr.bf16.mxu0 0
    %336 = vmatpush1.bf16.msra.mxu0 0
    %337 = vmatprep.subr.bf16.mxu0 0
    %338 = vmatpush1.bf16.msra.mxu0 0
    %339 = vmatprep.subr.bf16.mxu0 0
    %340 = vmatpush1.bf16.msra.mxu0 0
    %341 = vmatprep.subr.bf16.mxu0 0
    %342 = vmatpush1.bf16.msra.mxu0 0
    %343 = vmatprep.subr.bf16.mxu0 0
    %344 = vmatpush1.bf16.msra.mxu0 0
    %345 = vmatprep.subr.bf16.mxu0 0
    %346 = vmatpush1.bf16.msra.mxu0 0
    %347 = vmatprep.subr.bf16.mxu0 0
    %348 = vmatpush1.bf16.msra.mxu0 0
    %349 = vmatprep.mubr.bf16.mxu0 0
    %350 = vmatmul.mubr.bf16.gmra.mrb[0].mxu0 %v248
    %v351 = vpop.f32.mrb[0].mxu0
    %v352 = vadd.f32 0.0, %v351
    %v353 = vpop.f32.mrb[0].mxu0
    %v354 = vpop.f32.mrb[0].mxu0
    %v355 = vpop.f32.mrb[0].mxu0
    %356 = vdwg.mxu0
    %v361 = vunpack.c.l.b16 %v176
    %v362 = vunpack.c.l.b16 %v177
    %v363 = vunpack.c.l.b16 %v178
    %v364 = vunpack.c.l.b16 %v179
    %v365 = vpack.c.b16 %v362, %v361
    %v366 = vpack.c.b16 %v364, %v363
    %v370 = vsel %vm246, %v304, 0
    %372 = vmatprep.subr.bf16.mxu0 0
    %373 = vmatpush1.bf16.msra.mxu0 %v365
    %374 = vmatprep.subr.bf16.mxu0 0
    %375 = vmatpush1.bf16.msra.mxu0 %v366
    %376 = vmatprep.subr.bf16.mxu0 0
    %377 = vmatpush1.bf16.msra.mxu0 0
    %378 = vmatprep.subr.bf16.mxu0 0
    %379 = vmatpush1.bf16.msra.mxu0 0
    %380 = vmatprep.subr.bf16.mxu0 0
    %381 = vmatpush1.bf16.msra.mxu0 0
    %382 = vmatprep.subr.bf16.mxu0 0
    %383 = vmatpush1.bf16.msra.mxu0 0
    %384 = vmatprep.subr.bf16.mxu0 0
    %385 = vmatpush1.bf16.msra.mxu0 0
    %386 = vmatprep.subr.bf16.mxu0 0
    %387 = vmatpush1.bf16.msra.mxu0 0
    %388 = vmatprep.subr.bf16.mxu0 0
    %389 = vmatpush1.bf16.msra.mxu0 0
    %390 = vmatprep.subr.bf16.mxu0 0
    %391 = vmatpush1.bf16.msra.mxu0 0
    %392 = vmatprep.subr.bf16.mxu0 0
    %393 = vmatpush1.bf16.msra.mxu0 0
    %394 = vmatprep.subr.bf16.mxu0 0
    %395 = vmatpush1.bf16.msra.mxu0 0
    %396 = vmatprep.subr.bf16.mxu0 0
    %397 = vmatpush1.bf16.msra.mxu0 0
    %398 = vmatprep.subr.bf16.mxu0 0
    %399 = vmatpush1.bf16.msra.mxu0 0
    %400 = vmatprep.subr.bf16.mxu0 0
    %401 = vmatpush1.bf16.msra.mxu0 0
    %402 = vmatprep.subr.bf16.mxu0 0
    %403 = vmatpush1.bf16.msra.mxu0 0
    %404 = vmatprep.mubr.bf16.mxu0 0
    %405 = vmatmul.mubr.bf16.gmra.mrb[0].mxu0 %v370
    %v406 = vpop.f32.mrb[0].mxu0
    %v407 = vadd.f32 %v352, %v406
    %v408 = vpop.f32.mrb[0].mxu0
    %v409 = vpop.f32.mrb[0].mxu0
    %v410 = vpop.f32.mrb[0].mxu0
    %411 = vdwg.mxu0
    %v412 = vadd.f32 %v407, %v201
    %v413 = vmul.f32 %v223, 0.01
    %v414 = vmul.f32 %v225, 0.0
    %v415 = vadd.f32 %v413, %v414
    %v416 = vmul.f32 %v415, 1.8
    %v417 = vadd.f32 %v416, 0.01
    %v418 = vmul.f32 %v412, 0.048770577
    %v419 = vadd.f32 %v418, 0.0
    %v420 = vmul.f32 %v417, 0.0
    %v421 = vsub.f32 %v419, %v420
    %v422 = vsub.f32 %v421, %v417
    %vm423 = vcmp.gt.f32.partialorder %v422, 0.0
    %v424 = vsel %vm423, 1, 0
    %v425 = vcvt.s32.f32 %v424
    %v426 = vpack.c.bf16 %v425, %v425
    %v431 = vunpack.c.l.b16 %v188
    %v432 = vunpack.c.l.b16 %v189
    %v433 = vunpack.c.l.b16 %v190
    %v434 = vunpack.c.l.b16 %v191
    %v435 = vpack.c.b16 %v432, %v431
    %v436 = vpack.c.b16 %v434, %v433
    %439 = vmatprep.subr.bf16.mxu0 0
    %440 = vmatpush1.bf16.msra.mxu0 %v435
    %441 = vmatprep.subr.bf16.mxu0 0
    %442 = vmatpush1.bf16.msra.mxu0 %v436
    %443 = vmatprep.subr.bf16.mxu0 0
    %444 = vmatpush1.bf16.msra.mxu0 0
    %445 = vmatprep.subr.bf16.mxu0 0
    %446 = vmatpush1.bf16.msra.mxu0 0
    %447 = vmatprep.subr.bf16.mxu0 0
    %448 = vmatpush1.bf16.msra.mxu0 0
    %449 = vmatprep.subr.bf16.mxu0 0
    %450 = vmatpush1.bf16.msra.mxu0 0
    %451 = vmatprep.subr.bf16.mxu0 0
    %452 = vmatpush1.bf16.msra.mxu0 0
    %453 = vmatprep.subr.bf16.mxu0 0
    %454 = vmatpush1.bf16.msra.mxu0 0
    %455 = vmatprep.subr.bf16.mxu0 0
    %456 = vmatpush1.bf16.msra.mxu0 0
    %457 = vmatprep.subr.bf16.mxu0 0
    %458 = vmatpush1.bf16.msra.mxu0 0
    %459 = vmatprep.subr.bf16.mxu0 0
    %460 = vmatpush1.bf16.msra.mxu0 0
    %461 = vmatprep.subr.bf16.mxu0 0
    %462 = vmatpush1.bf16.msra.mxu0 0
    %463 = vmatprep.subr.bf16.mxu0 0
    %464 = vmatpush1.bf16.msra.mxu0 0
    %465 = vmatprep.subr.bf16.mxu0 0
    %466 = vmatpush1.bf16.msra.mxu0 0
    %467 = vmatprep.subr.bf16.mxu0 0
    %468 = vmatpush1.bf16.msra.mxu0 0
    %469 = vmatprep.subr.bf16.mxu0 0
    %470 = vmatpush1.bf16.msra.mxu0 0
    %471 = vmatprep.mubr.bf16.mxu0 0
    %472 = vmatmul.mubr.bf16.gmra.mrb[0].mxu0 %v248
    %v473 = vpop.f32.mrb[0].mxu0
    %v474 = vadd.f32 0.0, %v473
    %v475 = vpop.f32.mrb[0].mxu0
    %v476 = vpop.f32.mrb[0].mxu0
    %v477 = vpop.f32.mrb[0].mxu0
    %478 = vdwg.mxu0
    %v483 = vunpack.c.l.b16 %v184
    %v484 = vunpack.c.l.b16 %v185
    %v485 = vunpack.c.l.b16 %v186
    %v486 = vunpack.c.l.b16 %v187
    %v487 = vpack.c.b16 %v484, %v483
    %v488 = vpack.c.b16 %v486, %v485
    %v492 = vsel %vm246, %v426, 0
    %494 = vmatprep.subr.bf16.mxu0 0
    %495 = vmatpush1.bf16.msra.mxu0 %v487
    %496 = vmatprep.subr.bf16.mxu0 0
    %497 = vmatpush1.bf16.msra.mxu0 %v488
    %498 = vmatprep.subr.bf16.mxu0 0
    %499 = vmatpush1.bf16.msra.mxu0 0
    %500 = vmatprep.subr.bf16.mxu0 0
    %501 = vmatpush1.bf16.msra.mxu0 0
    %502 = vmatprep.subr.bf16.mxu0 0
    %503 = vmatpush1.bf16.msra.mxu0 0
    %504 = vmatprep.subr.bf16.mxu0 0
    %505 = vmatpush1.bf16.msra.mxu0 0
    %506 = vmatprep.subr.bf16.mxu0 0
    %507 = vmatpush1.bf16.msra.mxu0 0
    %508 = vmatprep.subr.bf16.mxu0 0
    %509 = vmatpush1.bf16.msra.mxu0 0
    %510 = vmatprep.subr.bf16.mxu0 0
    %511 = vmatpush1.bf16.msra.mxu0 0
    %512 = vmatprep.subr.bf16.mxu0 0
    %513 = vmatpush1.bf16.msra.mxu0 0
    %514 = vmatprep.subr.bf16.mxu0 0
    %515 = vmatpush1.bf16.msra.mxu0 0
    %516 = vmatprep.subr.bf16.mxu0 0
    %517 = vmatpush1.bf16.msra.mxu0 0
    %518 = vmatprep.subr.bf16.mxu0 0
    %519 = vmatpush1.bf16.msra.mxu0 0
    %520 = vmatprep.subr.bf16.mxu0 0
    %521 = vmatpush1.bf16.msra.mxu0 0
    %522 = vmatprep.subr.bf16.mxu0 0
    %523 = vmatpush1.bf16.msra.mxu0 0
    %524 = vmatprep.subr.bf16.mxu0 0
    %525 = vmatpush1.bf16.msra.mxu0 0
    %526 = vmatprep.mubr.bf16.mxu0 0
    %527 = vmatmul.mubr.bf16.gmra.mrb[0].mxu0 %v492
    %v528 = vpop.f32.mrb[0].mxu0
    %v529 = vadd.f32 %v474, %v528
    %v530 = vpop.f32.mrb[0].mxu0
    %v531 = vpop.f32.mrb[0].mxu0
    %v532 = vpop.f32.mrb[0].mxu0
    %533 = vdwg.mxu0
    %v534 = vadd.f32 %v529, %v208
    %v535 = vmul.f32 %v231, 0.01
    %v536 = vmul.f32 %v233, 0.0
    %v537 = vadd.f32 %v535, %v536
    %v538 = vmul.f32 %v537, 1.8
    %v539 = vadd.f32 %v538, 0.01
    %v540 = vmul.f32 %v534, 0.048770577
    %v541 = vadd.f32 %v540, 0.0
    %v542 = vmul.f32 %v539, 0.0
    %v543 = vsub.f32 %v541, %v542
    %v544 = vsub.f32 %v543, %v539
    %vm545 = vcmp.gt.f32.partialorder %v544, 0.0
    %v546 = vsel %vm545, 1, 0
    %v547 = vcvt.s32.f32 %v546
    %v548 = vadd.f32 %v547, 0.0
    %549 = vmatprep.subr.bf16.mxu0 0
    %550 = vmatpush1.bf16.msra.mxu0 %v242
    %551 = vmatprep.subr.bf16.mxu0 0
    %552 = vmatpush1.bf16.msra.mxu0 %v243
    %553 = vmatprep.subr.bf16.mxu0 0
    %554 = vmatpush1.bf16.msra.mxu0 0
    %555 = vmatprep.subr.bf16.mxu0 0
    %556 = vmatpush1.bf16.msra.mxu0 0
    %557 = vmatprep.subr.bf16.mxu0 0
    %558 = vmatpush1.bf16.msra.mxu0 0
    %559 = vmatprep.subr.bf16.mxu0 0
    %560 = vmatpush1.bf16.msra.mxu0 0
    %561 = vmatprep.subr.bf16.mxu0 0
    %562 = vmatpush1.bf16.msra.mxu0 0
    %563 = vmatprep.subr.bf16.mxu0 0
    %564 = vmatpush1.bf16.msra.mxu0 0
    %565 = vmatprep.subr.bf16.mxu0 0
    %566 = vmatpush1.bf16.msra.mxu0 0
    %567 = vmatprep.subr.bf16.mxu0 0
    %568 = vmatpush1.bf16.msra.mxu0 0
    %569 = vmatprep.subr.bf16.mxu0 0
    %570 = vmatpush1.bf16.msra.mxu0 0
    %571 = vmatprep.subr.bf16.mxu0 0
    %572 = vmatpush1.bf16.msra.mxu0 0
    %573 = vmatprep.subr.bf16.mxu0 0
    %574 = vmatpush1.bf16.msra.mxu0 0
    %575 = vmatprep.subr.bf16.mxu0 0
    %576 = vmatpush1.bf16.msra.mxu0 0
    %577 = vmatprep.subr.bf16.mxu0 0
    %578 = vmatpush1.bf16.msra.mxu0 0
    %579 = vmatprep.subr.bf16.mxu0 0
    %580 = vmatpush1.bf16.msra.mxu0 0
    %581 = vmatprep.mubr.bf16.mxu0 0
    %582 = vmatmul.mubr.bf16.gmra.mrb[0].mxu0 %v370
    %v583 = vpop.f32.mrb[0].mxu0
    %v584 = vadd.f32 0.0, %v583
    %v585 = vpop.f32.mrb[0].mxu0
    %v586 = vpop.f32.mrb[0].mxu0
    %v587 = vpop.f32.mrb[0].mxu0
    %588 = vdwg.mxu0
    %v590 = vrot.slane %v584, 6
    %v592 = vadd.f32 %v166, %v590
    %v593 = vmul.f32 %v215, %v293
    %v594 = vmul.f32 %v217, %v303
    %v595 = vadd.f32 %v593, %v594
    %v596 = vmul.f32 %v595, 1.8
    %v597 = vadd.f32 %v596, 0.01
    %v598 = vmul.f32 %v299, 0.95122945
    %v599 = vmul.f32 %v592, 0.048770577
    %v601 = vrot.slane %v599, 2
    %v603 = vadd.f32 %v598, %v601
    %v604 = vmul.f32 %v597, %v303
    %v605 = vsub.f32 %v603, %v604
    %v606 = vsub.f32 %v605, %v597
    %vm607 = vcmp.gt.f32.partialorder %v606, 0.0
    %v608 = vsel %vm607, 1, 0
    %v609 = vcvt.s32.f32 %v608
    %v610 = vpack.c.bf16 %v609, %v609
    %611 = vmatprep.subr.bf16.mxu0 0
    %612 = vmatpush1.bf16.msra.mxu0 %v313
    %613 = vmatprep.subr.bf16.mxu0 0
    %614 = vmatpush1.bf16.msra.mxu0 %v314
    %615 = vmatprep.subr.bf16.mxu0 0
    %616 = vmatpush1.bf16.msra.mxu0 0
    %617 = vmatprep.subr.bf16.mxu0 0
    %618 = vmatpush1.bf16.msra.mxu0 0
    %619 = vmatprep.subr.bf16.mxu0 0
    %620 = vmatpush1.bf16.msra.mxu0 0
    %621 = vmatprep.subr.bf16.mxu0 0
    %622 = vmatpush1.bf16.msra.mxu0 0
    %623 = vmatprep.subr.bf16.mxu0 0
    %624 = vmatpush1.bf16.msra.mxu0 0
    %625 = vmatprep.subr.bf16.mxu0 0
    %626 = vmatpush1.bf16.msra.mxu0 0
    %627 = vmatprep.subr.bf16.mxu0 0
    %628 = vmatpush1.bf16.msra.mxu0 0
    %629 = vmatprep.subr.bf16.mxu0 0
    %630 = vmatpush1.bf16.msra.mxu0 0
    %631 = vmatprep.subr.bf16.mxu0 0
    %632 = vmatpush1.bf16.msra.mxu0 0
    %633 = vmatprep.subr.bf16.mxu0 0
    %634 = vmatpush1.bf16.msra.mxu0 0
    %635 = vmatprep.subr.bf16.mxu0 0
    %636 = vmatpush1.bf16.msra.mxu0 0
    %637 = vmatprep.subr.bf16.mxu0 0
    %638 = vmatpush1.bf16.msra.mxu0 0
    %639 = vmatprep.subr.bf16.mxu0 0
    %640 = vmatpush1.bf16.msra.mxu0 0
    %641 = vmatprep.subr.bf16.mxu0 0
    %642 = vmatpush1.bf16.msra.mxu0 0
    %643 = vmatprep.mubr.bf16.mxu0 0
    %644 = vmatmul.mubr.bf16.gmra.mrb[0].mxu0 %v492
    %v645 = vpop.f32.mrb[0].mxu0
    %v646 = vadd.f32 0.0, %v645
    %v647 = vpop.f32.mrb[0].mxu0
    %v648 = vpop.f32.mrb[0].mxu0
    %v649 = vpop.f32.mrb[0].mxu0
    %650 = vdwg.mxu0
    %v652 = vsel %vm246, %v610, 0
    %654 = vmatprep.subr.bf16.mxu0 0
    %655 = vmatpush1.bf16.msra.mxu0 %v365
    %656 = vmatprep.subr.bf16.mxu0 0
    %657 = vmatpush1.bf16.msra.mxu0 %v366
    %658 = vmatprep.subr.bf16.mxu0 0
    %659 = vmatpush1.bf16.msra.mxu0 0
    %660 = vmatprep.subr.bf16.mxu0 0
    %661 = vmatpush1.bf16.msra.mxu0 0
    %662 = vmatprep.subr.bf16.mxu0 0
    %663 = vmatpush1.bf16.msra.mxu0 0
    %664 = vmatprep.subr.bf16.mxu0 0
    %665 = vmatpush1.bf16.msra.mxu0 0
    %666 = vmatprep.subr.bf16.mxu0 0
    %667 = vmatpush1.bf16.msra.mxu0 0
    %668 = vmatprep.subr.bf16.mxu0 0
    %669 = vmatpush1.bf16.msra.mxu0 0
    %670 = vmatprep.subr.bf16.mxu0 0
    %671 = vmatpush1.bf16.msra.mxu0 0
    %672 = vmatprep.subr.bf16.mxu0 0
    %673 = vmatpush1.bf16.msra.mxu0 0
    %674 = vmatprep.subr.bf16.mxu0 0
    %675 = vmatpush1.bf16.msra.mxu0 0
    %676 = vmatprep.subr.bf16.mxu0 0
    %677 = vmatpush1.bf16.msra.mxu0 0
    %678 = vmatprep.subr.bf16.mxu0 0
    %679 = vmatpush1.bf16.msra.mxu0 0
    %680 = vmatprep.subr.bf16.mxu0 0
    %681 = vmatpush1.bf16.msra.mxu0 0
    %682 = vmatprep.subr.bf16.mxu0 0
    %683 = vmatpush1.bf16.msra.mxu0 0
    %684 = vmatprep.subr.bf16.mxu0 0
    %685 = vmatpush1.bf16.msra.mxu0 0
    %686 = vmatprep.mubr.bf16.mxu0 0
    %687 = vmatmul.mubr.bf16.gmra.mrb[0].mxu0 %v652
    %v688 = vpop.f32.mrb[0].mxu0
    %v689 = vadd.f32 %v646, %v688
    %v690 = vpop.f32.mrb[0].mxu0
    %v691 = vpop.f32.mrb[0].mxu0
    %v692 = vpop.f32.mrb[0].mxu0
    %693 = vdwg.mxu0
    %v694 = vadd.f32 %v689, %v201
    %v695 = vmul.f32 %v223, %v415
    %v696 = vmul.f32 %v225, %v425
    %v697 = vadd.f32 %v695, %v696
    %v698 = vmul.f32 %v697, 1.8
    %v699 = vadd.f32 %v698, 0.01
    %v700 = vmul.f32 %v421, 0.95122945
    %v701 = vmul.f32 %v694, 0.048770577
    %v702 = vadd.f32 %v700, %v701
    %v703 = vmul.f32 %v699, %v425
    %v704 = vsub.f32 %v702, %v703
    %v705 = vsub.f32 %v704, %v699
    %vm706 = vcmp.gt.f32.partialorder %v705, 0.0
    %v707 = vsel %vm706, 1, 0
    %v708 = vcvt.s32.f32 %v707
    %v709 = vpack.c.bf16 %v708, %v708
    %v710 = vpack.c.bf16 %v547, %v547
    %v712 = vsel %vm246, %v710, 0
    %714 = vmatprep.subr.bf16.mxu0 0
    %715 = vmatpush1.bf16.msra.mxu0 %v435
    %716 = vmatprep.subr.bf16.mxu0 0
    %717 = vmatpush1.bf16.msra.mxu0 %v436
    %718 = vmatprep.subr.bf16.mxu0 0
    %719 = vmatpush1.bf16.msra.mxu0 0
    %720 = vmatprep.subr.bf16.mxu0 0
    %721 = vmatpush1.bf16.msra.mxu0 0
    %722 = vmatprep.subr.bf16.mxu0 0
    %723 = vmatpush1.bf16.msra.mxu0 0
    %724 = vmatprep.subr.bf16.mxu0 0
    %725 = vmatpush1.bf16.msra.mxu0 0
    %726 = vmatprep.subr.bf16.mxu0 0
    %727 = vmatpush1.bf16.msra.mxu0 0
    %728 = vmatprep.subr.bf16.mxu0 0
    %729 = vmatpush1.bf16.msra.mxu0 0
    %730 = vmatprep.subr.bf16.mxu0 0
    %731 = vmatpush1.bf16.msra.mxu0 0
    %732 = vmatprep.subr.bf16.mxu0 0
    %733 = vmatpush1.bf16.msra.mxu0 0
    %734 = vmatprep.subr.bf16.mxu0 0
    %735 = vmatpush1.bf16.msra.mxu0 0
    %736 = vmatprep.subr.bf16.mxu0 0
    %737 = vmatpush1.bf16.msra.mxu0 0
    %738 = vmatprep.subr.bf16.mxu0 0
    %739 = vmatpush1.bf16.msra.mxu0 0
    %740 = vmatprep.subr.bf16.mxu0 0
    %741 = vmatpush1.bf16.msra.mxu0 0
    %742 = vmatprep.subr.bf16.mxu0 0
    %743 = vmatpush1.bf16.msra.mxu0 0
    %744 = vmatprep.subr.bf16.mxu0 0
    %745 = vmatpush1.bf16.msra.mxu0 0
    %746 = vmatprep.mubr.bf16.mxu0 0
    %747 = vmatmul.mubr.bf16.gmra.mrb[0].mxu0 %v712
    %v748 = vpop.f32.mrb[0].mxu0
    %v749 = vadd.f32 0.0, %v748
    %v750 = vpop.f32.mrb[0].mxu0
    %v751 = vpop.f32.mrb[0].mxu0
    %v752 = vpop.f32.mrb[0].mxu0
    %753 = vdwg.mxu0
    %v755 = vsel %vm246, %v709, 0
    %757 = vmatprep.subr.bf16.mxu0 0
    %758 = vmatpush1.bf16.msra.mxu0 %v487
    %759 = vmatprep.subr.bf16.mxu0 0
    %760 = vmatpush1.bf16.msra.mxu0 %v488
    %761 = vmatprep.subr.bf16.mxu0 0
    %762 = vmatpush1.bf16.msra.mxu0 0
    %763 = vmatprep.subr.bf16.mxu0 0
    %764 = vmatpush1.bf16.msra.mxu0 0
    %765 = vmatprep.subr.bf16.mxu0 0
    %766 = vmatpush1.bf16.msra.mxu0 0
    %767 = vmatprep.subr.bf16.mxu0 0
    %768 = vmatpush1.bf16.msra.mxu0 0
    %769 = vmatprep.subr.bf16.mxu0 0
    %770 = vmatpush1.bf16.msra.mxu0 0
    %771 = vmatprep.subr.bf16.mxu0 0
    %772 = vmatpush1.bf16.msra.mxu0 0
    %773 = vmatprep.subr.bf16.mxu0 0
    %774 = vmatpush1.bf16.msra.mxu0 0
    %775 = vmatprep.subr.bf16.mxu0 0
    %776 = vmatpush1.bf16.msra.mxu0 0
    %777 = vmatprep.subr.bf16.mxu0 0
    %778 = vmatpush1.bf16.msra.mxu0 0
    %779 = vmatprep.subr.bf16.mxu0 0
    %780 = vmatpush1.bf16.msra.mxu0 0
    %781 = vmatprep.subr.bf16.mxu0 0
    %782 = vmatpush1.bf16.msra.mxu0 0
    %783 = vmatprep.subr.bf16.mxu0 0
    %784 = vmatpush1.bf16.msra.mxu0 0
    %785 = vmatprep.subr.bf16.mxu0 0
    %786 = vmatpush1.bf16.msra.mxu0 0
    %787 = vmatprep.subr.bf16.mxu0 0
    %788 = vmatpush1.bf16.msra.mxu0 0
    %789 = vmatprep.mubr.bf16.mxu0 0
    %790 = vmatmul.mubr.bf16.gmra.mrb[0].mxu0 %v755
    %v791 = vpop.f32.mrb[0].mxu0
    %v792 = vadd.f32 %v749, %v791
    %v793 = vpop.f32.mrb[0].mxu0
    %v794 = vpop.f32.mrb[0].mxu0
    %v795 = vpop.f32.mrb[0].mxu0
    %796 = vdwg.mxu0
    %v797 = vadd.f32 %v792, %v208
    %v798 = vmul.f32 %v231, %v537
    %v799 = vmul.f32 %v233, %v547
    %v800 = vadd.f32 %v798, %v799
    %v801 = vmul.f32 %v800, 1.8
    %v802 = vadd.f32 %v801, 0.01
    %v803 = vmul.f32 %v543, 0.95122945
    %v804 = vmul.f32 %v797, 0.048770577
    %v805 = vadd.f32 %v803, %v804
    %v806 = vmul.f32 %v802, %v547
    %v807 = vsub.f32 %v805, %v806
    %v808 = vsub.f32 %v807, %v802
    %vm809 = vcmp.gt.f32.partialorder %v808, 0.0
    %v810 = vsel %vm809, 1, 0
    %v811 = vcvt.s32.f32 %v810
    %v812 = vadd.f32 %v548, %v811
    %813 = vmatprep.subr.bf16.mxu0 0
    %814 = vmatpush1.bf16.msra.mxu0 %v242
    %815 = vmatprep.subr.bf16.mxu0 0
    %816 = vmatpush1.bf16.msra.mxu0 %v243
    %817 = vmatprep.subr.bf16.mxu0 0
    %818 = vmatpush1.bf16.msra.mxu0 0
    %819 = vmatprep.subr.bf16.mxu0 0
    %820 = vmatpush1.bf16.msra.mxu0 0
    %821 = vmatprep.subr.bf16.mxu0 0
    %822 = vmatpush1.bf16.msra.mxu0 0
    %823 = vmatprep.subr.bf16.mxu0 0
    %824 = vmatpush1.bf16.msra.mxu0 0
    %825 = vmatprep.subr.bf16.mxu0 0
    %826 = vmatpush1.bf16.msra.mxu0 0
    %827 = vmatprep.subr.bf16.mxu0 0
    %828 = vmatpush1.bf16.msra.mxu0 0
    %829 = vmatprep.subr.bf16.mxu0 0
    %830 = vmatpush1.bf16.msra.mxu0 0
    %831 = vmatprep.subr.bf16.mxu0 0
    %832 = vmatpush1.bf16.msra.mxu0 0
    %833 = vmatprep.subr.bf16.mxu0 0
    %834 = vmatpush1.bf16.msra.mxu0 0
    %835 = vmatprep.subr.bf16.mxu0 0
    %836 = vmatpush1.bf16.msra.mxu0 0
    %837 = vmatprep.subr.bf16.mxu0 0
    %838 = vmatpush1.bf16.msra.mxu0 0
    %839 = vmatprep.subr.bf16.mxu0 0
    %840 = vmatpush1.bf16.msra.mxu0 0
    %841 = vmatprep.subr.bf16.mxu0 0
    %842 = vmatpush1.bf16.msra.mxu0 0
    %843 = vmatprep.subr.bf16.mxu0 0
    %844 = vmatpush1.bf16.msra.mxu0 0
    %845 = vmatprep.mubr.bf16.mxu0 0
    %846 = vmatmul.mubr.bf16.gmra.mrb[0].mxu0 %v652
    %v847 = vpop.f32.mrb[0].mxu0
    %v848 = vadd.f32 0.0, %v847
    %v849 = vpop.f32.mrb[0].mxu0
    %v850 = vpop.f32.mrb[0].mxu0
    %v851 = vpop.f32.mrb[0].mxu0
    %852 = vdwg.mxu0
    %v854 = vrot.slane %v848, 4
    %v856 = vadd.f32 %v166, %v854
    %v857 = vmul.f32 %v215, %v595
    %v858 = vmul.f32 %v217, %v609
    %v859 = vadd.f32 %v857, %v858
    %v860 = vmul.f32 %v859, 1.8
    %v861 = vadd.f32 %v860, 0.01
    %v862 = vmul.f32 %v605, 0.95122945
    %v863 = vmul.f32 %v856, 0.048770577
    %v865 = vrot.slane %v863, 4
    %v867 = vadd.f32 %v862, %v865
    %v868 = vmul.f32 %v861, %v609
    %v869 = vsub.f32 %v867, %v868
    %v870 = vsub.f32 %v869, %v861
    %vm871 = vcmp.gt.f32.partialorder %v870, 0.0
    %v872 = vsel %vm871, 1, 0
    %v873 = vcvt.s32.f32 %v872
    %v874 = vpack.c.bf16 %v873, %v873
    %875 = vmatprep.subr.bf16.mxu0 0
    %876 = vmatpush1.bf16.msra.mxu0 %v313
    %877 = vmatprep.subr.bf16.mxu0 0
    %878 = vmatpush1.bf16.msra.mxu0 %v314
    %879 = vmatprep.subr.bf16.mxu0 0
    %880 = vmatpush1.bf16.msra.mxu0 0
    %881 = vmatprep.subr.bf16.mxu0 0
    %882 = vmatpush1.bf16.msra.mxu0 0
    %883 = vmatprep.subr.bf16.mxu0 0
    %884 = vmatpush1.bf16.msra.mxu0 0
    %885 = vmatprep.subr.bf16.mxu0 0
    %886 = vmatpush1.bf16.msra.mxu0 0
    %887 = vmatprep.subr.bf16.mxu0 0
    %888 = vmatpush1.bf16.msra.mxu0 0
    %889 = vmatprep.subr.bf16.mxu0 0
    %890 = vmatpush1.bf16.msra.mxu0 0
    %891 = vmatprep.subr.bf16.mxu0 0
    %892 = vmatpush1.bf16.msra.mxu0 0
    %893 = vmatprep.subr.bf16.mxu0 0
    %894 = vmatpush1.bf16.msra.mxu0 0
    %895 = vmatprep.subr.bf16.mxu0 0
    %896 = vmatpush1.bf16.msra.mxu0 0
    %897 = vmatprep.subr.bf16.mxu0 0
    %898 = vmatpush1.bf16.msra.mxu0 0
    %899 = vmatprep.subr.bf16.mxu0 0
    %900 = vmatpush1.bf16.msra.mxu0 0
    %901 = vmatprep.subr.bf16.mxu0 0
    %902 = vmatpush1.bf16.msra.mxu0 0
    %903 = vmatprep.subr.bf16.mxu0 0
    %904 = vmatpush1.bf16.msra.mxu0 0
    %905 = vmatprep.subr.bf16.mxu0 0
    %906 = vmatpush1.bf16.msra.mxu0 0
    %907 = vmatprep.mubr.bf16.mxu0 0
    %908 = vmatmul.mubr.bf16.gmra.mrb[0].mxu0 %v755
    %v909 = vpop.f32.mrb[0].mxu0
    %v910 = vadd.f32 0.0, %v909
    %v911 = vpop.f32.mrb[0].mxu0
    %v912 = vpop.f32.mrb[0].mxu0
    %v913 = vpop.f32.mrb[0].mxu0
    %914 = vdwg.mxu0
    %v916 = vsel %vm246, %v874, 0
    %918 = vmatprep.subr.bf16.mxu0 0
    %919 = vmatpush1.bf16.msra.mxu0 %v365
    %920 = vmatprep.subr.bf16.mxu0 0
    %921 = vmatpush1.bf16.msra.mxu0 %v366
    %922 = vmatprep.subr.bf16.mxu0 0
    %923 = vmatpush1.bf16.msra.mxu0 0
    %924 = vmatprep.subr.bf16.mxu0 0
    %925 = vmatpush1.bf16.msra.mxu0 0
    %926 = vmatprep.subr.bf16.mxu0 0
    %927 = vmatpush1.bf16.msra.mxu0 0
    %928 = vmatprep.subr.bf16.mxu0 0
    %929 = vmatpush1.bf16.msra.mxu0 0
    %930 = vmatprep.subr.bf16.mxu0 0
    %931 = vmatpush1.bf16.msra.mxu0 0
    %932 = vmatprep.subr.bf16.mxu0 0
    %933 = vmatpush1.bf16.msra.mxu0 0
    %934 = vmatprep.subr.bf16.mxu0 0
    %935 = vmatpush1.bf16.msra.mxu0 0
    %936 = vmatprep.subr.bf16.mxu0 0
    %937 = vmatpush1.bf16.msra.mxu0 0
    %938 = vmatprep.subr.bf16.mxu0 0
    %939 = vmatpush1.bf16.msra.mxu0 0
    %940 = vmatprep.subr.bf16.mxu0 0
    %941 = vmatpush1.bf16.msra.mxu0 0
    %942 = vmatprep.subr.bf16.mxu0 0
    %943 = vmatpush1.bf16.msra.mxu0 0
    %944 = vmatprep.subr.bf16.mxu0 0
    %945 = vmatpush1.bf16.msra.mxu0 0
    %946 = vmatprep.subr.bf16.mxu0 0
    %947 = vmatpush1.bf16.msra.mxu0 0
    %948 = vmatprep.subr.bf16.mxu0 0
    %949 = vmatpush1.bf16.msra.mxu0 0
    %950 = vmatprep.mubr.bf16.mxu0 0
    %951 = vmatmul.mubr.bf16.gmra.mrb[0].mxu0 %v916
    %v952 = vpop.f32.mrb[0].mxu0
    %v953 = vadd.f32 %v910, %v952
    %v954 = vpop.f32.mrb[0].mxu0
    %v955 = vpop.f32.mrb[0].mxu0
    %v956 = vpop.f32.mrb[0].mxu0
    %957 = vdwg.mxu0
    %v958 = vadd.f32 %v953, %v201
    %v959 = vmul.f32 %v223, %v697
    %v960 = vmul.f32 %v225, %v708
    %v961 = vadd.f32 %v959, %v960
    %v962 = vmul.f32 %v961, 1.8
    %v963 = vadd.f32 %v962, 0.01
    %v964 = vmul.f32 %v704, 0.95122945
    %v965 = vmul.f32 %v958, 0.048770577
    %v966 = vadd.f32 %v964, %v965
    %v967 = vmul.f32 %v963, %v708
    %v968 = vsub.f32 %v966, %v967
    %v969 = vsub.f32 %v968, %v963
    %vm970 = vcmp.gt.f32.partialorder %v969, 0.0
    %v971 = vsel %vm970, 1, 0
    %v972 = vcvt.s32.f32 %v971
    %v973 = vpack.c.bf16 %v972, %v972
    %v974 = vpack.c.bf16 %v811, %v811
    %v976 = vsel %vm246, %v974, 0
    %978 = vmatprep.subr.bf16.mxu0 0
    %979 = vmatpush1.bf16.msra.mxu0 %v435
    %980 = vmatprep.subr.bf16.mxu0 0
    %981 = vmatpush1.bf16.msra.mxu0 %v436
    %982 = vmatprep.subr.bf16.mxu0 0
    %983 = vmatpush1.bf16.msra.mxu0 0
    %984 = vmatprep.subr.bf16.mxu0 0
    %985 = vmatpush1.bf16.msra.mxu0 0
    %986 = vmatprep.subr.bf16.mxu0 0
    %987 = vmatpush1.bf16.msra.mxu0 0
    %988 = vmatprep.subr.bf16.mxu0 0
    %989 = vmatpush1.bf16.msra.mxu0 0
    %990 = vmatprep.subr.bf16.mxu0 0
    %991 = vmatpush1.bf16.msra.mxu0 0
    %992 = vmatprep.subr.bf16.mxu0 0
    %993 = vmatpush1.bf16.msra.mxu0 0
    %994 = vmatprep.subr.bf16.mxu0 0
    %995 = vmatpush1.bf16.msra.mxu0 0
    %996 = vmatprep.subr.bf16.mxu0 0
    %997 = vmatpush1.bf16.msra.mxu0 0
    %998 = vmatprep.subr.bf16.mxu0 0
    %999 = vmatpush1.bf16.msra.mxu0 0
    %1000 = vmatprep.subr.bf16.mxu0 0
    %1001 = vmatpush1.bf16.msra.mxu0 0
    %1002 = vmatprep.subr.bf16.mxu0 0
    %1003 = vmatpush1.bf16.msra.mxu0 0
    %1004 = vmatprep.subr.bf16.mxu0 0
    %1005 = vmatpush1.bf16.msra.mxu0 0
    %1006 = vmatprep.subr.bf16.mxu0 0
    %1007 = vmatpush1.bf16.msra.mxu0 0
    %1008 = vmatprep.subr.bf16.mxu0 0
    %1009 = vmatpush1.bf16.msra.mxu0 0
    %1010 = vmatprep.mubr.bf16.mxu0 0
    %1011 = vmatmul.mubr.bf16.gmra.mrb[0].mxu0 %v976
    %v1012 = vpop.f32.mrb[0].mxu0
    %v1013 = vadd.f32 0.0, %v1012
    %v1014 = vpop.f32.mrb[0].mxu0
    %v1015 = vpop.f32.mrb[0].mxu0
    %v1016 = vpop.f32.mrb[0].mxu0
    %1017 = vdwg.mxu0
    %v1019 = vsel %vm246, %v973, 0
    %1021 = vmatprep.subr.bf16.mxu0 0
    %1022 = vmatpush1.bf16.msra.mxu0 %v487
    %1023 = vmatprep.subr.bf16.mxu0 0
    %1024 = vmatpush1.bf16.msra.mxu0 %v488
    %1025 = vmatprep.subr.bf16.mxu0 0
    %1026 = vmatpush1.bf16.msra.mxu0 0
    %1027 = vmatprep.subr.bf16.mxu0 0
    %1028 = vmatpush1.bf16.msra.mxu0 0
    %1029 = vmatprep.subr.bf16.mxu0 0
    %1030 = vmatpush1.bf16.msra.mxu0 0
    %1031 = vmatprep.subr.bf16.mxu0 0
    %1032 = vmatpush1.bf16.msra.mxu0 0
    %1033 = vmatprep.subr.bf16.mxu0 0
    %1034 = vmatpush1.bf16.msra.mxu0 0
    %1035 = vmatprep.subr.bf16.mxu0 0
    %1036 = vmatpush1.bf16.msra.mxu0 0
    %1037 = vmatprep.subr.bf16.mxu0 0
    %1038 = vmatpush1.bf16.msra.mxu0 0
    %1039 = vmatprep.subr.bf16.mxu0 0
    %1040 = vmatpush1.bf16.msra.mxu0 0
    %1041 = vmatprep.subr.bf16.mxu0 0
    %1042 = vmatpush1.bf16.msra.mxu0 0
    %1043 = vmatprep.subr.bf16.mxu0 0
    %1044 = vmatpush1.bf16.msra.mxu0 0
    %1045 = vmatprep.subr.bf16.mxu0 0
    %1046 = vmatpush1.bf16.msra.mxu0 0
    %1047 = vmatprep.subr.bf16.mxu0 0
    %1048 = vmatpush1.bf16.msra.mxu0 0
    %1049 = vmatprep.subr.bf16.mxu0 0
    %1050 = vmatpush1.bf16.msra.mxu0 0
    %1051 = vmatprep.subr.bf16.mxu0 0
    %1052 = vmatpush1.bf16.msra.mxu0 0
    %1053 = vmatprep.mubr.bf16.mxu0 0
    %1054 = vmatmul.mubr.bf16.gmra.mrb[0].mxu0 %v1019
    %v1055 = vpop.f32.mrb[0].mxu0
    %v1056 = vadd.f32 %v1013, %v1055
    %v1057 = vpop.f32.mrb[0].mxu0
    %v1058 = vpop.f32.mrb[0].mxu0
    %v1059 = vpop.f32.mrb[0].mxu0
    %1060 = vdwg.mxu0
    %v1061 = vadd.f32 %v1056, %v208
    %v1062 = vmul.f32 %v231, %v800
    %v1063 = vmul.f32 %v233, %v811
    %v1064 = vadd.f32 %v1062, %v1063
    %v1065 = vmul.f32 %v1064, 1.8
    %v1066 = vadd.f32 %v1065, 0.01
    %v1067 = vmul.f32 %v807, 0.95122945
    %v1068 = vmul.f32 %v1061, 0.048770577
    %v1069 = vadd.f32 %v1067, %v1068
    %v1070 = vmul.f32 %v1066, %v811
    %v1071 = vsub.f32 %v1069, %v1070
    %v1072 = vsub.f32 %v1071, %v1066
    %vm1073 = vcmp.gt.f32.partialorder %v1072, 0.0
    %v1074 = vsel %vm1073, 1, 0
    %v1075 = vcvt.s32.f32 %v1074
    %v1076 = vadd.f32 %v812, %v1075
    %1077 = vmatprep.subr.bf16.mxu0 0
    %1078 = vmatpush1.bf16.msra.mxu0 %v242
    %1079 = vmatprep.subr.bf16.mxu0 0
    %1080 = vmatpush1.bf16.msra.mxu0 %v243
    %1081 = vmatprep.subr.bf16.mxu0 0
    %1082 = vmatpush1.bf16.msra.mxu0 0
    %1083 = vmatprep.subr.bf16.mxu0 0
    %1084 = vmatpush1.bf16.msra.mxu0 0
    %1085 = vmatprep.subr.bf16.mxu0 0
    %1086 = vmatpush1.bf16.msra.mxu0 0
    %1087 = vmatprep.subr.bf16.mxu0 0
    %1088 = vmatpush1.bf16.msra.mxu0 0
    %1089 = vmatprep.subr.bf16.mxu0 0
    %1090 = vmatpush1.bf16.msra.mxu0 0
    %1091 = vmatprep.subr.bf16.mxu0 0
    %1092 = vmatpush1.bf16.msra.mxu0 0
    %1093 = vmatprep.subr.bf16.mxu0 0
    %1094 = vmatpush1.bf16.msra.mxu0 0
    %1095 = vmatprep.subr.bf16.mxu0 0
    %1096 = vmatpush1.bf16.msra.mxu0 0
    %1097 = vmatprep.subr.bf16.mxu0 0
    %1098 = vmatpush1.bf16.msra.mxu0 0
    %1099 = vmatprep.subr.bf16.mxu0 0
    %1100 = vmatpush1.bf16.msra.mxu0 0
    %1101 = vmatprep.subr.bf16.mxu0 0
    %1102 = vmatpush1.bf16.msra.mxu0 0
    %1103 = vmatprep.subr.bf16.mxu0 0
    %1104 = vmatpush1.bf16.msra.mxu0 0
    %1105 = vmatprep.subr.bf16.mxu0 0
    %1106 = vmatpush1.bf16.msra.mxu0 0
    %1107 = vmatprep.subr.bf16.mxu0 0
    %1108 = vmatpush1.bf16.msra.mxu0 0
    %1109 = vmatprep.mubr.bf16.mxu0 0
    %1110 = vmatmul.mubr.bf16.gmra.mrb[0].mxu0 %v916
    %v1111 = vpop.f32.mrb[0].mxu0
    %v1112 = vadd.f32 0.0, %v1111
    %v1113 = vpop.f32.mrb[0].mxu0
    %v1114 = vpop.f32.mrb[0].mxu0
    %v1115 = vpop.f32.mrb[0].mxu0
    %1116 = vdwg.mxu0
    %v1118 = vrot.slane %v1112, 2
    %v1120 = vadd.f32 %v166, %v1118
    %v1121 = vmul.f32 %v215, %v859
    %v1122 = vmul.f32 %v217, %v873
    %v1123 = vadd.f32 %v1121, %v1122
    %v1124 = vmul.f32 %v1123, 1.8
    %v1125 = vadd.f32 %v1124, 0.01
    %v1126 = vmul.f32 %v869, 0.95122945
    %v1127 = vmul.f32 %v1120, 0.048770577
    %v1129 = vrot.slane %v1127, 6
    %v1131 = vadd.f32 %v1126, %v1129
    %v1132 = vmul.f32 %v1125, %v873
    %v1133 = vsub.f32 %v1131, %v1132
    %v1134 = vsub.f32 %v1133, %v1125
    %vm1135 = vcmp.gt.f32.partialorder %v1134, 0.0
    %v1136 = vsel %vm1135, 1, 0
    %v1137 = vcvt.s32.f32 %v1136
    %v1138 = vpack.c.bf16 %v1137, %v1137
    %1139 = vmatprep.subr.bf16.mxu0 0
    %1140 = vmatpush1.bf16.msra.mxu0 %v313
    %1141 = vmatprep.subr.bf16.mxu0 0
    %1142 = vmatpush1.bf16.msra.mxu0 %v314
    %1143 = vmatprep.subr.bf16.mxu0 0
    %1144 = vmatpush1.bf16.msra.mxu0 0
    %1145 = vmatprep.subr.bf16.mxu0 0
    %1146 = vmatpush1.bf16.msra.mxu0 0
    %1147 = vmatprep.subr.bf16.mxu0 0
    %1148 = vmatpush1.bf16.msra.mxu0 0
    %1149 = vmatprep.subr.bf16.mxu0 0
    %1150 = vmatpush1.bf16.msra.mxu0 0
    %1151 = vmatprep.subr.bf16.mxu0 0
    %1152 = vmatpush1.bf16.msra.mxu0 0
    %1153 = vmatprep.subr.bf16.mxu0 0
    %1154 = vmatpush1.bf16.msra.mxu0 0
    %1155 = vmatprep.subr.bf16.mxu0 0
    %1156 = vmatpush1.bf16.msra.mxu0 0
    %1157 = vmatprep.subr.bf16.mxu0 0
    %1158 = vmatpush1.bf16.msra.mxu0 0
    %1159 = vmatprep.subr.bf16.mxu0 0
    %1160 = vmatpush1.bf16.msra.mxu0 0
    %1161 = vmatprep.subr.bf16.mxu0 0
    %1162 = vmatpush1.bf16.msra.mxu0 0
    %1163 = vmatprep.subr.bf16.mxu0 0
    %1164 = vmatpush1.bf16.msra.mxu0 0
    %1165 = vmatprep.subr.bf16.mxu0 0
    %1166 = vmatpush1.bf16.msra.mxu0 0
    %1167 = vmatprep.subr.bf16.mxu0 0
    %1168 = vmatpush1.bf16.msra.mxu0 0
    %1169 = vmatprep.subr.bf16.mxu0 0
    %1170 = vmatpush1.bf16.msra.mxu0 0
    %1171 = vmatprep.mubr.bf16.mxu0 0
    %1172 = vmatmul.mubr.bf16.gmra.mrb[0].mxu0 %v1019
    %v1173 = vpop.f32.mrb[0].mxu0
    %v1174 = vadd.f32 0.0, %v1173
    %v1175 = vpop.f32.mrb[0].mxu0
    %v1176 = vpop.f32.mrb[0].mxu0
    %v1177 = vpop.f32.mrb[0].mxu0
    %1178 = vdwg.mxu0
    %v1180 = vsel %vm246, %v1138, 0
    %1182 = vmatprep.subr.bf16.mxu0 0
    %1183 = vmatpush1.bf16.msra.mxu0 %v365
    %1184 = vmatprep.subr.bf16.mxu0 0
    %1185 = vmatpush1.bf16.msra.mxu0 %v366
    %1186 = vmatprep.subr.bf16.mxu0 0
    %1187 = vmatpush1.bf16.msra.mxu0 0
    %1188 = vmatprep.subr.bf16.mxu0 0
    %1189 = vmatpush1.bf16.msra.mxu0 0
    %1190 = vmatprep.subr.bf16.mxu0 0
    %1191 = vmatpush1.bf16.msra.mxu0 0
    %1192 = vmatprep.subr.bf16.mxu0 0
    %1193 = vmatpush1.bf16.msra.mxu0 0
    %1194 = vmatprep.subr.bf16.mxu0 0
    %1195 = vmatpush1.bf16.msra.mxu0 0
    %1196 = vmatprep.subr.bf16.mxu0 0
    %1197 = vmatpush1.bf16.msra.mxu0 0
    %1198 = vmatprep.subr.bf16.mxu0 0
    %1199 = vmatpush1.bf16.msra.mxu0 0
    %1200 = vmatprep.subr.bf16.mxu0 0
    %1201 = vmatpush1.bf16.msra.mxu0 0
    %1202 = vmatprep.subr.bf16.mxu0 0
    %1203 = vmatpush1.bf16.msra.mxu0 0
    %1204 = vmatprep.subr.bf16.mxu0 0
    %1205 = vmatpush1.bf16.msra.mxu0 0
    %1206 = vmatprep.subr.bf16.mxu0 0
    %1207 = vmatpush1.bf16.msra.mxu0 0
    %1208 = vmatprep.subr.bf16.mxu0 0
    %1209 = vmatpush1.bf16.msra.mxu0 0
    %1210 = vmatprep.subr.bf16.mxu0 0
    %1211 = vmatpush1.bf16.msra.mxu0 0
    %1212 = vmatprep.subr.bf16.mxu0 0
    %1213 = vmatpush1.bf16.msra.mxu0 0
    %1214 = vmatprep.mubr.bf16.mxu0 0
    %1215 = vmatmul.mubr.bf16.gmra.mrb[0].mxu0 %v1180
    %v1216 = vpop.f32.mrb[0].mxu0
    %v1217 = vadd.f32 %v1174, %v1216
    %v1218 = vpop.f32.mrb[0].mxu0
    %v1219 = vpop.f32.mrb[0].mxu0
    %v1220 = vpop.f32.mrb[0].mxu0
    %1221 = vdwg.mxu0
    %v1222 = vadd.f32 %v1217, %v201
    %v1223 = vmul.f32 %v223, %v961
    %v1224 = vmul.f32 %v225, %v972
    %v1225 = vadd.f32 %v1223, %v1224
    %v1226 = vmul.f32 %v1225, 1.8
    %v1227 = vadd.f32 %v1226, 0.01
    %v1228 = vmul.f32 %v968, 0.95122945
    %v1229 = vmul.f32 %v1222, 0.048770577
    %v1230 = vadd.f32 %v1228, %v1229
    %v1231 = vmul.f32 %v1227, %v972
    %v1232 = vsub.f32 %v1230, %v1231
    %v1233 = vsub.f32 %v1232, %v1227
    %vm1234 = vcmp.gt.f32.partialorder %v1233, 0.0
    %v1235 = vsel %vm1234, 1, 0
    %v1236 = vcvt.s32.f32 %v1235
    %v1237 = vpack.c.bf16 %v1236, %v1236
    %v1238 = vpack.c.bf16 %v1075, %v1075
    %v1240 = vsel %vm246, %v1238, 0
    %1242 = vmatprep.subr.bf16.mxu0 0
    %1243 = vmatpush1.bf16.msra.mxu0 %v435
    %1244 = vmatprep.subr.bf16.mxu0 0
    %1245 = vmatpush1.bf16.msra.mxu0 %v436
    %1246 = vmatprep.subr.bf16.mxu0 0
    %1247 = vmatpush1.bf16.msra.mxu0 0
    %1248 = vmatprep.subr.bf16.mxu0 0
    %1249 = vmatpush1.bf16.msra.mxu0 0
    %1250 = vmatprep.subr.bf16.mxu0 0
    %1251 = vmatpush1.bf16.msra.mxu0 0
    %1252 = vmatprep.subr.bf16.mxu0 0
    %1253 = vmatpush1.bf16.msra.mxu0 0
    %1254 = vmatprep.subr.bf16.mxu0 0
    %1255 = vmatpush1.bf16.msra.mxu0 0
    %1256 = vmatprep.subr.bf16.mxu0 0
    %1257 = vmatpush1.bf16.msra.mxu0 0
    %1258 = vmatprep.subr.bf16.mxu0 0
    %1259 = vmatpush1.bf16.msra.mxu0 0
    %1260 = vmatprep.subr.bf16.mxu0 0
    %1261 = vmatpush1.bf16.msra.mxu0 0
    %1262 = vmatprep.subr.bf16.mxu0 0
    %1263 = vmatpush1.bf16.msra.mxu0 0
    %1264 = vmatprep.subr.bf16.mxu0 0
    %1265 = vmatpush1.bf16.msra.mxu0 0
    %1266 = vmatprep.subr.bf16.mxu0 0
    %1267 = vmatpush1.bf16.msra.mxu0 0
    %1268 = vmatprep.subr.bf16.mxu0 0
    %1269 = vmatpush1.bf16.msra.mxu0 0
    %1270 = vmatprep.subr.bf16.mxu0 0
    %1271 = vmatpush1.bf16.msra.mxu0 0
    %1272 = vmatprep.subr.bf16.mxu0 0
    %1273 = vmatpush1.bf16.msra.mxu0 0
    %1274 = vmatprep.mubr.bf16.mxu0 0
    %1275 = vmatmul.mubr.bf16.gmra.mrb[0].mxu0 %v1240
    %v1276 = vpop.f32.mrb[0].mxu0
    %v1277 = vadd.f32 0.0, %v1276
    %v1278 = vpop.f32.mrb[0].mxu0
    %v1279 = vpop.f32.mrb[0].mxu0
    %v1280 = vpop.f32.mrb[0].mxu0
    %1281 = vdwg.mxu0
    %v1283 = vsel %vm246, %v1237, 0
    %1285 = vmatprep.subr.bf16.mxu0 0
    %1286 = vmatpush1.bf16.msra.mxu0 %v487
    %1287 = vmatprep.subr.bf16.mxu0 0
    %1288 = vmatpush1.bf16.msra.mxu0 %v488
    %1289 = vmatprep.subr.bf16.mxu0 0
    %1290 = vmatpush1.bf16.msra.mxu0 0
    %1291 = vmatprep.subr.bf16.mxu0 0
    %1292 = vmatpush1.bf16.msra.mxu0 0
    %1293 = vmatprep.subr.bf16.mxu0 0
    %1294 = vmatpush1.bf16.msra.mxu0 0
    %1295 = vmatprep.subr.bf16.mxu0 0
    %1296 = vmatpush1.bf16.msra.mxu0 0
    %1297 = vmatprep.subr.bf16.mxu0 0
    %1298 = vmatpush1.bf16.msra.mxu0 0
    %1299 = vmatprep.subr.bf16.mxu0 0
    %1300 = vmatpush1.bf16.msra.mxu0 0
    %1301 = vmatprep.subr.bf16.mxu0 0
    %1302 = vmatpush1.bf16.msra.mxu0 0
    %1303 = vmatprep.subr.bf16.mxu0 0
    %1304 = vmatpush1.bf16.msra.mxu0 0
    %1305 = vmatprep.subr.bf16.mxu0 0
    %1306 = vmatpush1.bf16.msra.mxu0 0
    %1307 = vmatprep.subr.bf16.mxu0 0
    %1308 = vmatpush1.bf16.msra.mxu0 0
    %1309 = vmatprep.subr.bf16.mxu0 0
    %1310 = vmatpush1.bf16.msra.mxu0 0
    %1311 = vmatprep.subr.bf16.mxu0 0
    %1312 = vmatpush1.bf16.msra.mxu0 0
    %1313 = vmatprep.subr.bf16.mxu0 0
    %1314 = vmatpush1.bf16.msra.mxu0 0
    %1315 = vmatprep.subr.bf16.mxu0 0
    %1316 = vmatpush1.bf16.msra.mxu0 0
    %1317 = vmatprep.mubr.bf16.mxu0 0
    %1318 = vmatmul.mubr.bf16.gmra.mrb[0].mxu0 %v1283
    %v1319 = vpop.f32.mrb[0].mxu0
    %v1320 = vadd.f32 %v1277, %v1319
    %v1321 = vpop.f32.mrb[0].mxu0
    %v1322 = vpop.f32.mrb[0].mxu0
    %v1323 = vpop.f32.mrb[0].mxu0
    %1324 = vdwg.mxu0
    %v1325 = vadd.f32 %v1320, %v208
    %v1326 = vmul.f32 %v231, %v1064
    %v1327 = vmul.f32 %v233, %v1075
    %v1328 = vadd.f32 %v1326, %v1327
    %v1329 = vmul.f32 %v1328, 1.8
    %v1330 = vadd.f32 %v1329, 0.01
    %v1331 = vmul.f32 %v1071, 0.95122945
    %v1332 = vmul.f32 %v1325, 0.048770577
    %v1333 = vadd.f32 %v1331, %v1332
    %v1334 = vmul.f32 %v1330, %v1075
    %v1335 = vsub.f32 %v1333, %v1334
    %v1336 = vsub.f32 %v1335, %v1330
    %vm1337 = vcmp.gt.f32.partialorder %v1336, 0.0
    %v1338 = vsel %vm1337, 1, 0
    %v1339 = vcvt.s32.f32 %v1338
    %v1340 = vadd.f32 %v1076, %v1339
    %1341 = vmatprep.subr.bf16.mxu0 0
    %1342 = vmatpush1.bf16.msra.mxu0 %v242
    %1343 = vmatprep.subr.bf16.mxu0 0
    %1344 = vmatpush1.bf16.msra.mxu0 %v243
    %1345 = vmatprep.subr.bf16.mxu0 0
    %1346 = vmatpush1.bf16.msra.mxu0 0
    %1347 = vmatprep.subr.bf16.mxu0 0
    %1348 = vmatpush1.bf16.msra.mxu0 0
    %1349 = vmatprep.subr.bf16.mxu0 0
    %1350 = vmatpush1.bf16.msra.mxu0 0
    %1351 = vmatprep.subr.bf16.mxu0 0
    %1352 = vmatpush1.bf16.msra.mxu0 0
    %1353 = vmatprep.subr.bf16.mxu0 0
    %1354 = vmatpush1.bf16.msra.mxu0 0
    %1355 = vmatprep.subr.bf16.mxu0 0
    %1356 = vmatpush1.bf16.msra.mxu0 0
    %1357 = vmatprep.subr.bf16.mxu0 0
    %1358 = vmatpush1.bf16.msra.mxu0 0
    %1359 = vmatprep.subr.bf16.mxu0 0
    %1360 = vmatpush1.bf16.msra.mxu0 0
    %1361 = vmatprep.subr.bf16.mxu0 0
    %1362 = vmatpush1.bf16.msra.mxu0 0
    %1363 = vmatprep.subr.bf16.mxu0 0
    %1364 = vmatpush1.bf16.msra.mxu0 0
    %1365 = vmatprep.subr.bf16.mxu0 0
    %1366 = vmatpush1.bf16.msra.mxu0 0
    %1367 = vmatprep.subr.bf16.mxu0 0
    %1368 = vmatpush1.bf16.msra.mxu0 0
    %1369 = vmatprep.subr.bf16.mxu0 0
    %1370 = vmatpush1.bf16.msra.mxu0 0
    %1371 = vmatprep.subr.bf16.mxu0 0
    %1372 = vmatpush1.bf16.msra.mxu0 0
    %1373 = vmatprep.mubr.bf16.mxu0 0
    %1374 = vmatmul.mubr.bf16.gmra.mrb[0].mxu0 %v1180
    %v1375 = vpop.f32.mrb[0].mxu0
    %v1376 = vadd.f32 0.0, %v1375
    %v1377 = vpop.f32.mrb[0].mxu0
    %v1378 = vpop.f32.mrb[0].mxu0
    %v1379 = vpop.f32.mrb[0].mxu0
    %1380 = vdwg.mxu0
    %v1381 = vadd.f32 %v169, %v1376
    %v1382 = vmul.f32 %v215, %v1123
    %v1383 = vmul.f32 %v217, %v1137
    %v1384 = vadd.f32 %v1382, %v1383
    %v1385 = vmul.f32 %v1384, 1.8
    %v1386 = vadd.f32 %v1385, 0.01
    %v1387 = vmul.f32 %v1133, 0.95122945
    %v1388 = vmul.f32 %v1381, 0.048770577
    %v1389 = vadd.f32 %v1387, %v1388
    %v1390 = vmul.f32 %v1386, %v1137
    %v1391 = vsub.f32 %v1389, %v1390
    %v1392 = vsub.f32 %v1391, %v1386
    %vm1393 = vcmp.gt.f32.partialorder %v1392, 0.0
    %v1394 = vsel %vm1393, 1, 0
    %v1395 = vcvt.s32.f32 %v1394
    %v1396 = vpack.c.bf16 %v1395, %v1395
    %1397 = vmatprep.subr.bf16.mxu0 0
    %1398 = vmatpush1.bf16.msra.mxu0 %v313
    %1399 = vmatprep.subr.bf16.mxu0 0
    %1400 = vmatpush1.bf16.msra.mxu0 %v314
    %1401 = vmatprep.subr.bf16.mxu0 0
    %1402 = vmatpush1.bf16.msra.mxu0 0
    %1403 = vmatprep.subr.bf16.mxu0 0
    %1404 = vmatpush1.bf16.msra.mxu0 0
    %1405 = vmatprep.subr.bf16.mxu0 0
    %1406 = vmatpush1.bf16.msra.mxu0 0
    %1407 = vmatprep.subr.bf16.mxu0 0
    %1408 = vmatpush1.bf16.msra.mxu0 0
    %1409 = vmatprep.subr.bf16.mxu0 0
    %1410 = vmatpush1.bf16.msra.mxu0 0
    %1411 = vmatprep.subr.bf16.mxu0 0
    %1412 = vmatpush1.bf16.msra.mxu0 0
    %1413 = vmatprep.subr.bf16.mxu0 0
    %1414 = vmatpush1.bf16.msra.mxu0 0
    %1415 = vmatprep.subr.bf16.mxu0 0
    %1416 = vmatpush1.bf16.msra.mxu0 0
    %1417 = vmatprep.subr.bf16.mxu0 0
    %1418 = vmatpush1.bf16.msra.mxu0 0
    %1419 = vmatprep.subr.bf16.mxu0 0
    %1420 = vmatpush1.bf16.msra.mxu0 0
    %1421 = vmatprep.subr.bf16.mxu0 0
    %1422 = vmatpush1.bf16.msra.mxu0 0
    %1423 = vmatprep.subr.bf16.mxu0 0
    %1424 = vmatpush1.bf16.msra.mxu0 0
    %1425 = vmatprep.subr.bf16.mxu0 0
    %1426 = vmatpush1.bf16.msra.mxu0 0
    %1427 = vmatprep.subr.bf16.mxu0 0
    %1428 = vmatpush1.bf16.msra.mxu0 0
    %1429 = vmatprep.mubr.bf16.mxu0 0
    %1430 = vmatmul.mubr.bf16.gmra.mrb[0].mxu0 %v1283
    %v1431 = vpop.f32.mrb[0].mxu0
    %v1432 = vadd.f32 0.0, %v1431
    %v1433 = vpop.f32.mrb[0].mxu0
    %v1434 = vpop.f32.mrb[0].mxu0
    %v1435 = vpop.f32.mrb[0].mxu0
    %1436 = vdwg.mxu0
    %v1438 = vsel %vm246, %v1396, 0
    %1440 = vmatprep.subr.bf16.mxu0 0
    %1441 = vmatpush1.bf16.msra.mxu0 %v365
    %1442 = vmatprep.subr.bf16.mxu0 0
    %1443 = vmatpush1.bf16.msra.mxu0 %v366
    %1444 = vmatprep.subr.bf16.mxu0 0
    %1445 = vmatpush1.bf16.msra.mxu0 0
    %1446 = vmatprep.subr.bf16.mxu0 0
    %1447 = vmatpush1.bf16.msra.mxu0 0
    %1448 = vmatprep.subr.bf16.mxu0 0
    %1449 = vmatpush1.bf16.msra.mxu0 0
    %1450 = vmatprep.subr.bf16.mxu0 0
    %1451 = vmatpush1.bf16.msra.mxu0 0
    %1452 = vmatprep.subr.bf16.mxu0 0
    %1453 = vmatpush1.bf16.msra.mxu0 0
    %1454 = vmatprep.subr.bf16.mxu0 0
    %1455 = vmatpush1.bf16.msra.mxu0 0
    %1456 = vmatprep.subr.bf16.mxu0 0
    %1457 = vmatpush1.bf16.msra.mxu0 0
    %1458 = vmatprep.subr.bf16.mxu0 0
    %1459 = vmatpush1.bf16.msra.mxu0 0
    %1460 = vmatprep.subr.bf16.mxu0 0
    %1461 = vmatpush1.bf16.msra.mxu0 0
    %1462 = vmatprep.subr.bf16.mxu0 0
    %1463 = vmatpush1.bf16.msra.mxu0 0
    %1464 = vmatprep.subr.bf16.mxu0 0
    %1465 = vmatpush1.bf16.msra.mxu0 0
    %1466 = vmatprep.subr.bf16.mxu0 0
    %1467 = vmatpush1.bf16.msra.mxu0 0
    %1468 = vmatprep.subr.bf16.mxu0 0
    %1469 = vmatpush1.bf16.msra.mxu0 0
    %1470 = vmatprep.subr.bf16.mxu0 0
    %1471 = vmatpush1.bf16.msra.mxu0 0
    %1472 = vmatprep.mubr.bf16.mxu0 0
    %1473 = vmatmul.mubr.bf16.gmra.mrb[0].mxu0 %v1438
    %v1474 = vpop.f32.mrb[0].mxu0
    %v1475 = vadd.f32 %v1432, %v1474
    %v1476 = vpop.f32.mrb[0].mxu0
    %v1477 = vpop.f32.mrb[0].mxu0
    %v1478 = vpop.f32.mrb[0].mxu0
    %1479 = vdwg.mxu0
    %v1480 = vadd.f32 %v1475, %v201
    %v1481 = vmul.f32 %v223, %v1225
    %v1482 = vmul.f32 %v225, %v1236
    %v1483 = vadd.f32 %v1481, %v1482
    %v1484 = vmul.f32 %v1483, 1.8
    %v1485 = vadd.f32 %v1484, 0.01
    %v1486 = vmul.f32 %v1232, 0.95122945
    %v1487 = vmul.f32 %v1480, 0.048770577
    %v1488 = vadd.f32 %v1486, %v1487
    %v1489 = vmul.f32 %v1485, %v1236
    %v1490 = vsub.f32 %v1488, %v1489
    %v1491 = vsub.f32 %v1490, %v1485
    %vm1492 = vcmp.gt.f32.partialorder %v1491, 0.0
    %v1493 = vsel %vm1492, 1, 0
    %v1494 = vcvt.s32.f32 %v1493
    %v1495 = vpack.c.bf16 %v1494, %v1494
    %v1496 = vpack.c.bf16 %v1339, %v1339
    %v1498 = vsel %vm246, %v1496, 0
    %1500 = vmatprep.subr.bf16.mxu0 0
    %1501 = vmatpush1.bf16.msra.mxu0 %v435
    %1502 = vmatprep.subr.bf16.mxu0 0
    %1503 = vmatpush1.bf16.msra.mxu0 %v436
    %1504 = vmatprep.subr.bf16.mxu0 0
    %1505 = vmatpush1.bf16.msra.mxu0 0
    %1506 = vmatprep.subr.bf16.mxu0 0
    %1507 = vmatpush1.bf16.msra.mxu0 0
    %1508 = vmatprep.subr.bf16.mxu0 0
    %1509 = vmatpush1.bf16.msra.mxu0 0
    %1510 = vmatprep.subr.bf16.mxu0 0
    %1511 = vmatpush1.bf16.msra.mxu0 0
    %1512 = vmatprep.subr.bf16.mxu0 0
    %1513 = vmatpush1.bf16.msra.mxu0 0
    %1514 = vmatprep.subr.bf16.mxu0 0
    %1515 = vmatpush1.bf16.msra.mxu0 0
    %1516 = vmatprep.subr.bf16.mxu0 0
    %1517 = vmatpush1.bf16.msra.mxu0 0
    %1518 = vmatprep.subr.bf16.mxu0 0
    %1519 = vmatpush1.bf16.msra.mxu0 0
    %1520 = vmatprep.subr.bf16.mxu0 0
    %1521 = vmatpush1.bf16.msra.mxu0 0
    %1522 = vmatprep.subr.bf16.mxu0 0
    %1523 = vmatpush1.bf16.msra.mxu0 0
    %1524 = vmatprep.subr.bf16.mxu0 0
    %1525 = vmatpush1.bf16.msra.mxu0 0
    %1526 = vmatprep.subr.bf16.mxu0 0
    %1527 = vmatpush1.bf16.msra.mxu0 0
    %1528 = vmatprep.subr.bf16.mxu0 0
    %1529 = vmatpush1.bf16.msra.mxu0 0
    %1530 = vmatprep.subr.bf16.mxu0 0
    %1531 = vmatpush1.bf16.msra.mxu0 0
    %1532 = vmatprep.mubr.bf16.mxu0 0
    %1533 = vmatmul.mubr.bf16.gmra.mrb[0].mxu0 %v1498
    %v1534 = vpop.f32.mrb[0].mxu0
    %v1535 = vadd.f32 0.0, %v1534
    %v1536 = vpop.f32.mrb[0].mxu0
    %v1537 = vpop.f32.mrb[0].mxu0
    %v1538 = vpop.f32.mrb[0].mxu0
    %1539 = vdwg.mxu0
    %v1541 = vsel %vm246, %v1495, 0
    %1543 = vmatprep.subr.bf16.mxu0 0
    %1544 = vmatpush1.bf16.msra.mxu0 %v487
    %1545 = vmatprep.subr.bf16.mxu0 0
    %1546 = vmatpush1.bf16.msra.mxu0 %v488
    %1547 = vmatprep.subr.bf16.mxu0 0
    %1548 = vmatpush1.bf16.msra.mxu0 0
    %1549 = vmatprep.subr.bf16.mxu0 0
    %1550 = vmatpush1.bf16.msra.mxu0 0
    %1551 = vmatprep.subr.bf16.mxu0 0
    %1552 = vmatpush1.bf16.msra.mxu0 0
    %1553 = vmatprep.subr.bf16.mxu0 0
    %1554 = vmatpush1.bf16.msra.mxu0 0
    %1555 = vmatprep.subr.bf16.mxu0 0
    %1556 = vmatpush1.bf16.msra.mxu0 0
    %1557 = vmatprep.subr.bf16.mxu0 0
    %1558 = vmatpush1.bf16.msra.mxu0 0
    %1559 = vmatprep.subr.bf16.mxu0 0
    %1560 = vmatpush1.bf16.msra.mxu0 0
    %1561 = vmatprep.subr.bf16.mxu0 0
    %1562 = vmatpush1.bf16.msra.mxu0 0
    %1563 = vmatprep.subr.bf16.mxu0 0
    %1564 = vmatpush1.bf16.msra.mxu0 0
    %1565 = vmatprep.subr.bf16.mxu0 0
    %1566 = vmatpush1.bf16.msra.mxu0 0
    %1567 = vmatprep.subr.bf16.mxu0 0
    %1568 = vmatpush1.bf16.msra.mxu0 0
    %1569 = vmatprep.subr.bf16.mxu0 0
    %1570 = vmatpush1.bf16.msra.mxu0 0
    %1571 = vmatprep.subr.bf16.mxu0 0
    %1572 = vmatpush1.bf16.msra.mxu0 0
    %1573 = vmatprep.subr.bf16.mxu0 0
    %1574 = vmatpush1.bf16.msra.mxu0 0
    %1575 = vmatprep.mubr.bf16.mxu0 0
    %1576 = vmatmul.mubr.bf16.gmra.mrb[0].mxu0 %v1541
    %v1577 = vpop.f32.mrb[0].mxu0
    %v1578 = vadd.f32 %v1535, %v1577
    %v1579 = vpop.f32.mrb[0].mxu0
    %v1580 = vpop.f32.mrb[0].mxu0
    %v1581 = vpop.f32.mrb[0].mxu0
    %1582 = vdwg.mxu0
    %v1583 = vadd.f32 %v1578, %v208
    %v1584 = vmul.f32 %v231, %v1328
    %v1585 = vmul.f32 %v233, %v1339
    %v1586 = vadd.f32 %v1584, %v1585
    %v1587 = vmul.f32 %v1586, 1.8
    %v1588 = vadd.f32 %v1587, 0.01
    %v1589 = vmul.f32 %v1335, 0.95122945
    %v1590 = vmul.f32 %v1583, 0.048770577
    %v1591 = vadd.f32 %v1589, %v1590
    %v1592 = vmul.f32 %v1588, %v1339
    %v1593 = vsub.f32 %v1591, %v1592
    %v1594 = vsub.f32 %v1593, %v1588
    %vm1595 = vcmp.gt.f32.partialorder %v1594, 0.0
    %v1596 = vsel %vm1595, 1, 0
    %v1597 = vcvt.s32.f32 %v1596
    %v1598 = vadd.f32 %v1340, %v1597
    %1599 = vmatprep.subr.bf16.mxu0 0
    %1600 = vmatpush1.bf16.msra.mxu0 %v242
    %1601 = vmatprep.subr.bf16.mxu0 0
    %1602 = vmatpush1.bf16.msra.mxu0 %v243
    %1603 = vmatprep.subr.bf16.mxu0 0
    %1604 = vmatpush1.bf16.msra.mxu0 0
    %1605 = vmatprep.subr.bf16.mxu0 0
    %1606 = vmatpush1.bf16.msra.mxu0 0
    %1607 = vmatprep.subr.bf16.mxu0 0
    %1608 = vmatpush1.bf16.msra.mxu0 0
    %1609 = vmatprep.subr.bf16.mxu0 0
    %1610 = vmatpush1.bf16.msra.mxu0 0
    %1611 = vmatprep.subr.bf16.mxu0 0
    %1612 = vmatpush1.bf16.msra.mxu0 0
    %1613 = vmatprep.subr.bf16.mxu0 0
    %1614 = vmatpush1.bf16.msra.mxu0 0
    %1615 = vmatprep.subr.bf16.mxu0 0
    %1616 = vmatpush1.bf16.msra.mxu0 0
    %1617 = vmatprep.subr.bf16.mxu0 0
    %1618 = vmatpush1.bf16.msra.mxu0 0
    %1619 = vmatprep.subr.bf16.mxu0 0
    %1620 = vmatpush1.bf16.msra.mxu0 0
    %1621 = vmatprep.subr.bf16.mxu0 0
    %1622 = vmatpush1.bf16.msra.mxu0 0
    %1623 = vmatprep.subr.bf16.mxu0 0
    %1624 = vmatpush1.bf16.msra.mxu0 0
    %1625 = vmatprep.subr.bf16.mxu0 0
    %1626 = vmatpush1.bf16.msra.mxu0 0
    %1627 = vmatprep.subr.bf16.mxu0 0
    %1628 = vmatpush1.bf16.msra.mxu0 0
    %1629 = vmatprep.subr.bf16.mxu0 0
    %1630 = vmatpush1.bf16.msra.mxu0 0
    %1631 = vmatprep.mubr.bf16.mxu0 0
    %1632 = vmatmul.mubr.bf16.gmra.mrb[0].mxu0 %v1438
    %v1633 = vpop.f32.mrb[0].mxu0
    %v1634 = vadd.f32 0.0, %v1633
    %v1635 = vpop.f32.mrb[0].mxu0
    %v1636 = vpop.f32.mrb[0].mxu0
    %v1637 = vpop.f32.mrb[0].mxu0
    %1638 = vdwg.mxu0
    %v1640 = vrot.slane %v1634, 6
    %v1642 = vadd.f32 %v169, %v1640
    %v1643 = vmul.f32 %v215, %v1384
    %v1644 = vmul.f32 %v217, %v1395
    %v1645 = vadd.f32 %v1643, %v1644
    %v1646 = vmul.f32 %v1645, 1.8
    %v1647 = vadd.f32 %v1646, 0.01
    %v1648 = vmul.f32 %v1391, 0.95122945
    %v1649 = vmul.f32 %v1642, 0.048770577
    %v1651 = vrot.slane %v1649, 2
    %v1653 = vadd.f32 %v1648, %v1651
    %v1654 = vmul.f32 %v1647, %v1395
    %v1655 = vsub.f32 %v1653, %v1654
    %v1656 = vsub.f32 %v1655, %v1647
    %vm1657 = vcmp.gt.f32.partialorder %v1656, 0.0
    %v1658 = vsel %vm1657, 1, 0
    %v1659 = vcvt.s32.f32 %v1658
    %v1660 = vpack.c.bf16 %v1659, %v1659
    %1661 = vmatprep.subr.bf16.mxu0 0
    %1662 = vmatpush1.bf16.msra.mxu0 %v313
    %1663 = vmatprep.subr.bf16.mxu0 0
    %1664 = vmatpush1.bf16.msra.mxu0 %v314
    %1665 = vmatprep.subr.bf16.mxu0 0
    %1666 = vmatpush1.bf16.msra.mxu0 0
    %1667 = vmatprep.subr.bf16.mxu0 0
    %1668 = vmatpush1.bf16.msra.mxu0 0
    %1669 = vmatprep.subr.bf16.mxu0 0
    %1670 = vmatpush1.bf16.msra.mxu0 0
    %1671 = vmatprep.subr.bf16.mxu0 0
    %1672 = vmatpush1.bf16.msra.mxu0 0
    %1673 = vmatprep.subr.bf16.mxu0 0
    %1674 = vmatpush1.bf16.msra.mxu0 0
    %1675 = vmatprep.subr.bf16.mxu0 0
    %1676 = vmatpush1.bf16.msra.mxu0 0
    %1677 = vmatprep.subr.bf16.mxu0 0
    %1678 = vmatpush1.bf16.msra.mxu0 0
    %1679 = vmatprep.subr.bf16.mxu0 0
    %1680 = vmatpush1.bf16.msra.mxu0 0
    %1681 = vmatprep.subr.bf16.mxu0 0
    %1682 = vmatpush1.bf16.msra.mxu0 0
    %1683 = vmatprep.subr.bf16.mxu0 0
    %1684 = vmatpush1.bf16.msra.mxu0 0
    %1685 = vmatprep.subr.bf16.mxu0 0
    %1686 = vmatpush1.bf16.msra.mxu0 0
    %1687 = vmatprep.subr.bf16.mxu0 0
    %1688 = vmatpush1.bf16.msra.mxu0 0
    %1689 = vmatprep.subr.bf16.mxu0 0
    %1690 = vmatpush1.bf16.msra.mxu0 0
    %1691 = vmatprep.subr.bf16.mxu0 0
    %1692 = vmatpush1.bf16.msra.mxu0 0
    %1693 = vmatprep.mubr.bf16.mxu0 0
    %1694 = vmatmul.mubr.bf16.gmra.mrb[0].mxu0 %v1541
    %v1695 = vpop.f32.mrb[0].mxu0
    %v1696 = vadd.f32 0.0, %v1695
    %v1697 = vpop.f32.mrb[0].mxu0
    %v1698 = vpop.f32.mrb[0].mxu0
    %v1699 = vpop.f32.mrb[0].mxu0
    %1700 = vdwg.mxu0
    %v1702 = vsel %vm246, %v1660, 0
    %1704 = vmatprep.subr.bf16.mxu0 0
    %1705 = vmatpush1.bf16.msra.mxu0 %v365
    %1706 = vmatprep.subr.bf16.mxu0 0
    %1707 = vmatpush1.bf16.msra.mxu0 %v366
    %1708 = vmatprep.subr.bf16.mxu0 0
    %1709 = vmatpush1.bf16.msra.mxu0 0
    %1710 = vmatprep.subr.bf16.mxu0 0
    %1711 = vmatpush1.bf16.msra.mxu0 0
    %1712 = vmatprep.subr.bf16.mxu0 0
    %1713 = vmatpush1.bf16.msra.mxu0 0
    %1714 = vmatprep.subr.bf16.mxu0 0
    %1715 = vmatpush1.bf16.msra.mxu0 0
    %1716 = vmatprep.subr.bf16.mxu0 0
    %1717 = vmatpush1.bf16.msra.mxu0 0
    %1718 = vmatprep.subr.bf16.mxu0 0
    %1719 = vmatpush1.bf16.msra.mxu0 0
    %1720 = vmatprep.subr.bf16.mxu0 0
    %1721 = vmatpush1.bf16.msra.mxu0 0
    %1722 = vmatprep.subr.bf16.mxu0 0
    %1723 = vmatpush1.bf16.msra.mxu0 0
    %1724 = vmatprep.subr.bf16.mxu0 0
    %1725 = vmatpush1.bf16.msra.mxu0 0
    %1726 = vmatprep.subr.bf16.mxu0 0
    %1727 = vmatpush1.bf16.msra.mxu0 0
    %1728 = vmatprep.subr.bf16.mxu0 0
    %1729 = vmatpush1.bf16.msra.mxu0 0
    %1730 = vmatprep.subr.bf16.mxu0 0
    %1731 = vmatpush1.bf16.msra.mxu0 0
    %1732 = vmatprep.subr.bf16.mxu0 0
    %1733 = vmatpush1.bf16.msra.mxu0 0
    %1734 = vmatprep.subr.bf16.mxu0 0
    %1735 = vmatpush1.bf16.msra.mxu0 0
    %1736 = vmatprep.mubr.bf16.mxu0 0
    %1737 = vmatmul.mubr.bf16.gmra.mrb[0].mxu0 %v1702
    %v1738 = vpop.f32.mrb[0].mxu0
    %v1739 = vadd.f32 %v1696, %v1738
    %v1740 = vpop.f32.mrb[0].mxu0
    %v1741 = vpop.f32.mrb[0].mxu0
    %v1742 = vpop.f32.mrb[0].mxu0
    %1743 = vdwg.mxu0
    %v1744 = vadd.f32 %v1739, %v201
    %v1745 = vmul.f32 %v223, %v1483
    %v1746 = vmul.f32 %v225, %v1494
    %v1747 = vadd.f32 %v1745, %v1746
    %v1748 = vmul.f32 %v1747, 1.8
    %v1749 = vadd.f32 %v1748, 0.01
    %v1750 = vmul.f32 %v1490, 0.95122945
    %v1751 = vmul.f32 %v1744, 0.048770577
    %v1752 = vadd.f32 %v1750, %v1751
    %v1753 = vmul.f32 %v1749, %v1494
    %v1754 = vsub.f32 %v1752, %v1753
    %v1755 = vsub.f32 %v1754, %v1749
    %vm1756 = vcmp.gt.f32.partialorder %v1755, 0.0
    %v1757 = vsel %vm1756, 1, 0
    %v1758 = vcvt.s32.f32 %v1757
    %v1759 = vpack.c.bf16 %v1758, %v1758
    %v1760 = vpack.c.bf16 %v1597, %v1597
    %v1762 = vsel %vm246, %v1760, 0
    %1764 = vmatprep.subr.bf16.mxu0 0
    %1765 = vmatpush1.bf16.msra.mxu0 %v435
    %1766 = vmatprep.subr.bf16.mxu0 0
    %1767 = vmatpush1.bf16.msra.mxu0 %v436
    %1768 = vmatprep.subr.bf16.mxu0 0
    %1769 = vmatpush1.bf16.msra.mxu0 0
    %1770 = vmatprep.subr.bf16.mxu0 0
    %1771 = vmatpush1.bf16.msra.mxu0 0
    %1772 = vmatprep.subr.bf16.mxu0 0
    %1773 = vmatpush1.bf16.msra.mxu0 0
    %1774 = vmatprep.subr.bf16.mxu0 0
    %1775 = vmatpush1.bf16.msra.mxu0 0
    %1776 = vmatprep.subr.bf16.mxu0 0
    %1777 = vmatpush1.bf16.msra.mxu0 0
    %1778 = vmatprep.subr.bf16.mxu0 0
    %1779 = vmatpush1.bf16.msra.mxu0 0
    %1780 = vmatprep.subr.bf16.mxu0 0
    %1781 = vmatpush1.bf16.msra.mxu0 0
    %1782 = vmatprep.subr.bf16.mxu0 0
    %1783 = vmatpush1.bf16.msra.mxu0 0
    %1784 = vmatprep.subr.bf16.mxu0 0
    %1785 = vmatpush1.bf16.msra.mxu0 0
    %1786 = vmatprep.subr.bf16.mxu0 0
    %1787 = vmatpush1.bf16.msra.mxu0 0
    %1788 = vmatprep.subr.bf16.mxu0 0
    %1789 = vmatpush1.bf16.msra.mxu0 0
    %1790 = vmatprep.subr.bf16.mxu0 0
    %1791 = vmatpush1.bf16.msra.mxu0 0
    %1792 = vmatprep.subr.bf16.mxu0 0
    %1793 = vmatpush1.bf16.msra.mxu0 0
    %1794 = vmatprep.subr.bf16.mxu0 0
    %1795 = vmatpush1.bf16.msra.mxu0 0
    %1796 = vmatprep.mubr.bf16.mxu0 0
    %1797 = vmatmul.mubr.bf16.gmra.mrb[0].mxu0 %v1762
    %v1798 = vpop.f32.mrb[0].mxu0
    %v1799 = vadd.f32 0.0, %v1798
    %v1800 = vpop.f32.mrb[0].mxu0
    %v1801 = vpop.f32.mrb[0].mxu0
    %v1802 = vpop.f32.mrb[0].mxu0
    %1803 = vdwg.mxu0
    %v1805 = vsel %vm246, %v1759, 0
    %1807 = vmatprep.subr.bf16.mxu0 0
    %1808 = vmatpush1.bf16.msra.mxu0 %v487
    %1809 = vmatprep.subr.bf16.mxu0 0
    %1810 = vmatpush1.bf16.msra.mxu0 %v488
    %1811 = vmatprep.subr.bf16.mxu0 0
    %1812 = vmatpush1.bf16.msra.mxu0 0
    %1813 = vmatprep.subr.bf16.mxu0 0
    %1814 = vmatpush1.bf16.msra.mxu0 0
    %1815 = vmatprep.subr.bf16.mxu0 0
    %1816 = vmatpush1.bf16.msra.mxu0 0
    %1817 = vmatprep.subr.bf16.mxu0 0
    %1818 = vmatpush1.bf16.msra.mxu0 0
    %1819 = vmatprep.subr.bf16.mxu0 0
    %1820 = vmatpush1.bf16.msra.mxu0 0
    %1821 = vmatprep.subr.bf16.mxu0 0
    %1822 = vmatpush1.bf16.msra.mxu0 0
    %1823 = vmatprep.subr.bf16.mxu0 0
    %1824 = vmatpush1.bf16.msra.mxu0 0
    %1825 = vmatprep.subr.bf16.mxu0 0
    %1826 = vmatpush1.bf16.msra.mxu0 0
    %1827 = vmatprep.subr.bf16.mxu0 0
    %1828 = vmatpush1.bf16.msra.mxu0 0
    %1829 = vmatprep.subr.bf16.mxu0 0
    %1830 = vmatpush1.bf16.msra.mxu0 0
    %1831 = vmatprep.subr.bf16.mxu0 0
    %1832 = vmatpush1.bf16.msra.mxu0 0
    %1833 = vmatprep.subr.bf16.mxu0 0
    %1834 = vmatpush1.bf16.msra.mxu0 0
    %1835 = vmatprep.subr.bf16.mxu0 0
    %1836 = vmatpush1.bf16.msra.mxu0 0
    %1837 = vmatprep.subr.bf16.mxu0 0
    %1838 = vmatpush1.bf16.msra.mxu0 0
    %1839 = vmatprep.mubr.bf16.mxu0 0
    %1840 = vmatmul.mubr.bf16.gmra.mrb[0].mxu0 %v1805
    %v1841 = vpop.f32.mrb[0].mxu0
    %v1842 = vadd.f32 %v1799, %v1841
    %v1843 = vpop.f32.mrb[0].mxu0
    %v1844 = vpop.f32.mrb[0].mxu0
    %v1845 = vpop.f32.mrb[0].mxu0
    %1846 = vdwg.mxu0
    %v1847 = vadd.f32 %v1842, %v208
    %v1848 = vmul.f32 %v231, %v1586
    %v1849 = vmul.f32 %v233, %v1597
    %v1850 = vadd.f32 %v1848, %v1849
    %v1851 = vmul.f32 %v1850, 1.8
    %v1852 = vadd.f32 %v1851, 0.01
    %v1853 = vmul.f32 %v1593, 0.95122945
    %v1854 = vmul.f32 %v1847, 0.048770577
    %v1855 = vadd.f32 %v1853, %v1854
    %v1856 = vmul.f32 %v1852, %v1597
    %v1857 = vsub.f32 %v1855, %v1856
    %v1858 = vsub.f32 %v1857, %v1852
    %vm1859 = vcmp.gt.f32.partialorder %v1858, 0.0
    %v1860 = vsel %vm1859, 1, 0
    %v1861 = vcvt.s32.f32 %v1860
    %v1862 = vadd.f32 %v1598, %v1861
    %1863 = vmatprep.subr.bf16.mxu0 0
    %1864 = vmatpush1.bf16.msra.mxu0 %v242
    %1865 = vmatprep.subr.bf16.mxu0 0
    %1866 = vmatpush1.bf16.msra.mxu0 %v243
    %1867 = vmatprep.subr.bf16.mxu0 0
    %1868 = vmatpush1.bf16.msra.mxu0 0
    %1869 = vmatprep.subr.bf16.mxu0 0
    %1870 = vmatpush1.bf16.msra.mxu0 0
    %1871 = vmatprep.subr.bf16.mxu0 0
    %1872 = vmatpush1.bf16.msra.mxu0 0
    %1873 = vmatprep.subr.bf16.mxu0 0
    %1874 = vmatpush1.bf16.msra.mxu0 0
    %1875 = vmatprep.subr.bf16.mxu0 0
    %1876 = vmatpush1.bf16.msra.mxu0 0
    %1877 = vmatprep.subr.bf16.mxu0 0
    %1878 = vmatpush1.bf16.msra.mxu0 0
    %1879 = vmatprep.subr.bf16.mxu0 0
    %1880 = vmatpush1.bf16.msra.mxu0 0
    %1881 = vmatprep.subr.bf16.mxu0 0
    %1882 = vmatpush1.bf16.msra.mxu0 0
    %1883 = vmatprep.subr.bf16.mxu0 0
    %1884 = vmatpush1.bf16.msra.mxu0 0
    %1885 = vmatprep.subr.bf16.mxu0 0
    %1886 = vmatpush1.bf16.msra.mxu0 0
    %1887 = vmatprep.subr.bf16.mxu0 0
    %1888 = vmatpush1.bf16.msra.mxu0 0
    %1889 = vmatprep.subr.bf16.mxu0 0
    %1890 = vmatpush1.bf16.msra.mxu0 0
    %1891 = vmatprep.subr.bf16.mxu0 0
    %1892 = vmatpush1.bf16.msra.mxu0 0
    %1893 = vmatprep.subr.bf16.mxu0 0
    %1894 = vmatpush1.bf16.msra.mxu0 0
    %1895 = vmatprep.mubr.bf16.mxu0 0
    %1896 = vmatmul.mubr.bf16.gmra.mrb[0].mxu0 %v1702
    %v1897 = vpop.f32.mrb[0].mxu0
    %v1898 = vadd.f32 0.0, %v1897
    %v1899 = vpop.f32.mrb[0].mxu0
    %v1900 = vpop.f32.mrb[0].mxu0
    %v1901 = vpop.f32.mrb[0].mxu0
    %1902 = vdwg.mxu0
    %v1904 = vrot.slane %v1898, 4
    %v1906 = vadd.f32 %v169, %v1904
    %v1907 = vmul.f32 %v215, %v1645
    %v1908 = vmul.f32 %v217, %v1659
    %v1909 = vadd.f32 %v1907, %v1908
    %v1910 = vmul.f32 %v1909, 1.8
    %v1911 = vadd.f32 %v1910, 0.01
    %v1912 = vmul.f32 %v1655, 0.95122945
    %v1913 = vmul.f32 %v1906, 0.048770577
    %v1915 = vrot.slane %v1913, 4
    %v1917 = vadd.f32 %v1912, %v1915
    %v1918 = vmul.f32 %v1911, %v1659
    %v1919 = vsub.f32 %v1917, %v1918
    %v1920 = vsub.f32 %v1919, %v1911
    %vm1921 = vcmp.gt.f32.partialorder %v1920, 0.0
    %v1922 = vsel %vm1921, 1, 0
    %v1923 = vcvt.s32.f32 %v1922
    %v1924 = vpack.c.bf16 %v1923, %v1923
    %1925 = vmatprep.subr.bf16.mxu0 0
    %1926 = vmatpush1.bf16.msra.mxu0 %v313
    %1927 = vmatprep.subr.bf16.mxu0 0
    %1928 = vmatpush1.bf16.msra.mxu0 %v314
    %1929 = vmatprep.subr.bf16.mxu0 0
    %1930 = vmatpush1.bf16.msra.mxu0 0
    %1931 = vmatprep.subr.bf16.mxu0 0
    %1932 = vmatpush1.bf16.msra.mxu0 0
    %1933 = vmatprep.subr.bf16.mxu0 0
    %1934 = vmatpush1.bf16.msra.mxu0 0
    %1935 = vmatprep.subr.bf16.mxu0 0
    %1936 = vmatpush1.bf16.msra.mxu0 0
    %1937 = vmatprep.subr.bf16.mxu0 0
    %1938 = vmatpush1.bf16.msra.mxu0 0
    %1939 = vmatprep.subr.bf16.mxu0 0
    %1940 = vmatpush1.bf16.msra.mxu0 0
    %1941 = vmatprep.subr.bf16.mxu0 0
    %1942 = vmatpush1.bf16.msra.mxu0 0
    %1943 = vmatprep.subr.bf16.mxu0 0
    %1944 = vmatpush1.bf16.msra.mxu0 0
    %1945 = vmatprep.subr.bf16.mxu0 0
    %1946 = vmatpush1.bf16.msra.mxu0 0
    %1947 = vmatprep.subr.bf16.mxu0 0
    %1948 = vmatpush1.bf16.msra.mxu0 0
    %1949 = vmatprep.subr.bf16.mxu0 0
    %1950 = vmatpush1.bf16.msra.mxu0 0
    %1951 = vmatprep.subr.bf16.mxu0 0
    %1952 = vmatpush1.bf16.msra.mxu0 0
    %1953 = vmatprep.subr.bf16.mxu0 0
    %1954 = vmatpush1.bf16.msra.mxu0 0
    %1955 = vmatprep.subr.bf16.mxu0 0
    %1956 = vmatpush1.bf16.msra.mxu0 0
    %1957 = vmatprep.mubr.bf16.mxu0 0
    %1958 = vmatmul.mubr.bf16.gmra.mrb[0].mxu0 %v1805
    %v1959 = vpop.f32.mrb[0].mxu0
    %v1960 = vadd.f32 0.0, %v1959
    %v1961 = vpop.f32.mrb[0].mxu0
    %v1962 = vpop.f32.mrb[0].mxu0
    %v1963 = vpop.f32.mrb[0].mxu0
    %1964 = vdwg.mxu0
    %v1966 = vsel %vm246, %v1924, 0
    %1968 = vmatprep.subr.bf16.mxu0 0
    %1969 = vmatpush1.bf16.msra.mxu0 %v365
    %1970 = vmatprep.subr.bf16.mxu0 0
    %1971 = vmatpush1.bf16.msra.mxu0 %v366
    %1972 = vmatprep.subr.bf16.mxu0 0
    %1973 = vmatpush1.bf16.msra.mxu0 0
    %1974 = vmatprep.subr.bf16.mxu0 0
    %1975 = vmatpush1.bf16.msra.mxu0 0
    %1976 = vmatprep.subr.bf16.mxu0 0
    %1977 = vmatpush1.bf16.msra.mxu0 0
    %1978 = vmatprep.subr.bf16.mxu0 0
    %1979 = vmatpush1.bf16.msra.mxu0 0
    %1980 = vmatprep.subr.bf16.mxu0 0
    %1981 = vmatpush1.bf16.msra.mxu0 0
    %1982 = vmatprep.subr.bf16.mxu0 0
    %1983 = vmatpush1.bf16.msra.mxu0 0
    %1984 = vmatprep.subr.bf16.mxu0 0
    %1985 = vmatpush1.bf16.msra.mxu0 0
    %1986 = vmatprep.subr.bf16.mxu0 0
    %1987 = vmatpush1.bf16.msra.mxu0 0
    %1988 = vmatprep.subr.bf16.mxu0 0
    %1989 = vmatpush1.bf16.msra.mxu0 0
    %1990 = vmatprep.subr.bf16.mxu0 0
    %1991 = vmatpush1.bf16.msra.mxu0 0
    %1992 = vmatprep.subr.bf16.mxu0 0
    %1993 = vmatpush1.bf16.msra.mxu0 0
    %1994 = vmatprep.subr.bf16.mxu0 0
    %1995 = vmatpush1.bf16.msra.mxu0 0
    %1996 = vmatprep.subr.bf16.mxu0 0
    %1997 = vmatpush1.bf16.msra.mxu0 0
    %1998 = vmatprep.subr.bf16.mxu0 0
    %1999 = vmatpush1.bf16.msra.mxu0 0
    %2000 = vmatprep.mubr.bf16.mxu0 0
    %2001 = vmatmul.mubr.bf16.gmra.mrb[0].mxu0 %v1966
    %v2002 = vpop.f32.mrb[0].mxu0
    %v2003 = vadd.f32 %v1960, %v2002
    %v2004 = vpop.f32.mrb[0].mxu0
    %v2005 = vpop.f32.mrb[0].mxu0
    %v2006 = vpop.f32.mrb[0].mxu0
    %2007 = vdwg.mxu0
    %v2008 = vadd.f32 %v2003, %v201
    %v2009 = vmul.f32 %v223, %v1747
    %v2010 = vmul.f32 %v225, %v1758
    %v2011 = vadd.f32 %v2009, %v2010
    %v2012 = vmul.f32 %v2011, 1.8
    %v2013 = vadd.f32 %v2012, 0.01
    %v2014 = vmul.f32 %v1754, 0.95122945
    %v2015 = vmul.f32 %v2008, 0.048770577
    %v2016 = vadd.f32 %v2014, %v2015
    %v2017 = vmul.f32 %v2013, %v1758
    %v2018 = vsub.f32 %v2016, %v2017
    %v2019 = vsub.f32 %v2018, %v2013
    %vm2020 = vcmp.gt.f32.partialorder %v2019, 0.0
    %v2021 = vsel %vm2020, 1, 0
    %v2022 = vcvt.s32.f32 %v2021
    %v2023 = vpack.c.bf16 %v2022, %v2022
    %v2024 = vpack.c.bf16 %v1861, %v1861
    %v2026 = vsel %vm246, %v2024, 0
    %2028 = vmatprep.subr.bf16.mxu0 0
    %2029 = vmatpush1.bf16.msra.mxu0 %v435
    %2030 = vmatprep.subr.bf16.mxu0 0
    %2031 = vmatpush1.bf16.msra.mxu0 %v436
    %2032 = vmatprep.subr.bf16.mxu0 0
    %2033 = vmatpush1.bf16.msra.mxu0 0
    %2034 = vmatprep.subr.bf16.mxu0 0
    %2035 = vmatpush1.bf16.msra.mxu0 0
    %2036 = vmatprep.subr.bf16.mxu0 0
    %2037 = vmatpush1.bf16.msra.mxu0 0
    %2038 = vmatprep.subr.bf16.mxu0 0
    %2039 = vmatpush1.bf16.msra.mxu0 0
    %2040 = vmatprep.subr.bf16.mxu0 0
    %2041 = vmatpush1.bf16.msra.mxu0 0
    %2042 = vmatprep.subr.bf16.mxu0 0
    %2043 = vmatpush1.bf16.msra.mxu0 0
    %2044 = vmatprep.subr.bf16.mxu0 0
    %2045 = vmatpush1.bf16.msra.mxu0 0
    %2046 = vmatprep.subr.bf16.mxu0 0
    %2047 = vmatpush1.bf16.msra.mxu0 0
    %2048 = vmatprep.subr.bf16.mxu0 0
    %2049 = vmatpush1.bf16.msra.mxu0 0
    %2050 = vmatprep.subr.bf16.mxu0 0
    %2051 = vmatpush1.bf16.msra.mxu0 0
    %2052 = vmatprep.subr.bf16.mxu0 0
    %2053 = vmatpush1.bf16.msra.mxu0 0
    %2054 = vmatprep.subr.bf16.mxu0 0
    %2055 = vmatpush1.bf16.msra.mxu0 0
    %2056 = vmatprep.subr.bf16.mxu0 0
    %2057 = vmatpush1.bf16.msra.mxu0 0
    %2058 = vmatprep.subr.bf16.mxu0 0
    %2059 = vmatpush1.bf16.msra.mxu0 0
    %2060 = vmatprep.mubr.bf16.mxu0 0
    %2061 = vmatmul.mubr.bf16.gmra.mrb[0].mxu0 %v2026
    %v2062 = vpop.f32.mrb[0].mxu0
    %v2063 = vadd.f32 0.0, %v2062
    %v2064 = vpop.f32.mrb[0].mxu0
    %v2065 = vpop.f32.mrb[0].mxu0
    %v2066 = vpop.f32.mrb[0].mxu0
    %2067 = vdwg.mxu0
    %v2069 = vsel %vm246, %v2023, 0
    %2071 = vmatprep.subr.bf16.mxu0 0
    %2072 = vmatpush1.bf16.msra.mxu0 %v487
    %2073 = vmatprep.subr.bf16.mxu0 0
    %2074 = vmatpush1.bf16.msra.mxu0 %v488
    %2075 = vmatprep.subr.bf16.mxu0 0
    %2076 = vmatpush1.bf16.msra.mxu0 0
    %2077 = vmatprep.subr.bf16.mxu0 0
    %2078 = vmatpush1.bf16.msra.mxu0 0
    %2079 = vmatprep.subr.bf16.mxu0 0
    %2080 = vmatpush1.bf16.msra.mxu0 0
    %2081 = vmatprep.subr.bf16.mxu0 0
    %2082 = vmatpush1.bf16.msra.mxu0 0
    %2083 = vmatprep.subr.bf16.mxu0 0
    %2084 = vmatpush1.bf16.msra.mxu0 0
    %2085 = vmatprep.subr.bf16.mxu0 0
    %2086 = vmatpush1.bf16.msra.mxu0 0
    %2087 = vmatprep.subr.bf16.mxu0 0
    %2088 = vmatpush1.bf16.msra.mxu0 0
    %2089 = vmatprep.subr.bf16.mxu0 0
    %2090 = vmatpush1.bf16.msra.mxu0 0
    %2091 = vmatprep.subr.bf16.mxu0 0
    %2092 = vmatpush1.bf16.msra.mxu0 0
    %2093 = vmatprep.subr.bf16.mxu0 0
    %2094 = vmatpush1.bf16.msra.mxu0 0
    %2095 = vmatprep.subr.bf16.mxu0 0
    %2096 = vmatpush1.bf16.msra.mxu0 0
    %2097 = vmatprep.subr.bf16.mxu0 0
    %2098 = vmatpush1.bf16.msra.mxu0 0
    %2099 = vmatprep.subr.bf16.mxu0 0
    %2100 = vmatpush1.bf16.msra.mxu0 0
    %2101 = vmatprep.subr.bf16.mxu0 0
    %2102 = vmatpush1.bf16.msra.mxu0 0
    %2103 = vmatprep.mubr.bf16.mxu0 0
    %2104 = vmatmul.mubr.bf16.gmra.mrb[0].mxu0 %v2069
    %v2105 = vpop.f32.mrb[0].mxu0
    %v2106 = vadd.f32 %v2063, %v2105
    %v2107 = vpop.f32.mrb[0].mxu0
    %v2108 = vpop.f32.mrb[0].mxu0
    %v2109 = vpop.f32.mrb[0].mxu0
    %2110 = vdwg.mxu0
    %v2111 = vadd.f32 %v2106, %v208
    %v2112 = vmul.f32 %v231, %v1850
    %v2113 = vmul.f32 %v233, %v1861
    %v2114 = vadd.f32 %v2112, %v2113
    %v2115 = vmul.f32 %v2114, 1.8
    %v2116 = vadd.f32 %v2115, 0.01
    %v2117 = vmul.f32 %v1857, 0.95122945
    %v2118 = vmul.f32 %v2111, 0.048770577
    %v2119 = vadd.f32 %v2117, %v2118
    %v2120 = vmul.f32 %v2116, %v1861
    %v2121 = vsub.f32 %v2119, %v2120
    %v2122 = vsub.f32 %v2121, %v2116
    %vm2123 = vcmp.gt.f32.partialorder %v2122, 0.0
    %v2124 = vsel %vm2123, 1, 0
    %v2125 = vcvt.s32.f32 %v2124
    %v2126 = vadd.f32 %v1862, %v2125
    %2127 = vmatprep.subr.bf16.mxu0 0
    %2128 = vmatpush1.bf16.msra.mxu0 %v242
    %2129 = vmatprep.subr.bf16.mxu0 0
    %2130 = vmatpush1.bf16.msra.mxu0 %v243
    %2131 = vmatprep.subr.bf16.mxu0 0
    %2132 = vmatpush1.bf16.msra.mxu0 0
    %2133 = vmatprep.subr.bf16.mxu0 0
    %2134 = vmatpush1.bf16.msra.mxu0 0
    %2135 = vmatprep.subr.bf16.mxu0 0
    %2136 = vmatpush1.bf16.msra.mxu0 0
    %2137 = vmatprep.subr.bf16.mxu0 0
    %2138 = vmatpush1.bf16.msra.mxu0 0
    %2139 = vmatprep.subr.bf16.mxu0 0
    %2140 = vmatpush1.bf16.msra.mxu0 0
    %2141 = vmatprep.subr.bf16.mxu0 0
    %2142 = vmatpush1.bf16.msra.mxu0 0
    %2143 = vmatprep.subr.bf16.mxu0 0
    %2144 = vmatpush1.bf16.msra.mxu0 0
    %2145 = vmatprep.subr.bf16.mxu0 0
    %2146 = vmatpush1.bf16.msra.mxu0 0
    %2147 = vmatprep.subr.bf16.mxu0 0
    %2148 = vmatpush1.bf16.msra.mxu0 0
    %2149 = vmatprep.subr.bf16.mxu0 0
    %2150 = vmatpush1.bf16.msra.mxu0 0
    %2151 = vmatprep.subr.bf16.mxu0 0
    %2152 = vmatpush1.bf16.msra.mxu0 0
    %2153 = vmatprep.subr.bf16.mxu0 0
    %2154 = vmatpush1.bf16.msra.mxu0 0
    %2155 = vmatprep.subr.bf16.mxu0 0
    %2156 = vmatpush1.bf16.msra.mxu0 0
    %2157 = vmatprep.subr.bf16.mxu0 0
    %2158 = vmatpush1.bf16.msra.mxu0 0
    %2159 = vmatprep.mubr.bf16.mxu0 0
    %2160 = vmatmul.mubr.bf16.gmra.mrb[0].mxu0 %v1966
    %v2161 = vpop.f32.mrb[0].mxu0
    %v2162 = vadd.f32 0.0, %v2161
    %v2163 = vpop.f32.mrb[0].mxu0
    %v2164 = vpop.f32.mrb[0].mxu0
    %v2165 = vpop.f32.mrb[0].mxu0
    %2166 = vdwg.mxu0
    %v2168 = vrot.slane %v2162, 2
    %v2170 = vadd.f32 %v169, %v2168
    %v2171 = vmul.f32 %v215, %v1909
    %v2172 = vmul.f32 %v217, %v1923
    %v2173 = vadd.f32 %v2171, %v2172
    %v2174 = vmul.f32 %v2173, 1.8
    %v2175 = vadd.f32 %v2174, 0.01
    %v2176 = vmul.f32 %v1919, 0.95122945
    %v2177 = vmul.f32 %v2170, 0.048770577
    %v2179 = vrot.slane %v2177, 6
    %v2181 = vadd.f32 %v2176, %v2179
    %v2182 = vmul.f32 %v2175, %v1923
    %v2183 = vsub.f32 %v2181, %v2182
    %v2184 = vsub.f32 %v2183, %v2175
    %vm2185 = vcmp.gt.f32.partialorder %v2184, 0.0
    %v2186 = vsel %vm2185, 1, 0
    %v2187 = vcvt.s32.f32 %v2186
    %v2188 = vpack.c.bf16 %v2187, %v2187
    %2189 = vmatprep.subr.bf16.mxu0 0
    %2190 = vmatpush1.bf16.msra.mxu0 %v313
    %2191 = vmatprep.subr.bf16.mxu0 0
    %2192 = vmatpush1.bf16.msra.mxu0 %v314
    %2193 = vmatprep.subr.bf16.mxu0 0
    %2194 = vmatpush1.bf16.msra.mxu0 0
    %2195 = vmatprep.subr.bf16.mxu0 0
    %2196 = vmatpush1.bf16.msra.mxu0 0
    %2197 = vmatprep.subr.bf16.mxu0 0
    %2198 = vmatpush1.bf16.msra.mxu0 0
    %2199 = vmatprep.subr.bf16.mxu0 0
    %2200 = vmatpush1.bf16.msra.mxu0 0
    %2201 = vmatprep.subr.bf16.mxu0 0
    %2202 = vmatpush1.bf16.msra.mxu0 0
    %2203 = vmatprep.subr.bf16.mxu0 0
    %2204 = vmatpush1.bf16.msra.mxu0 0
    %2205 = vmatprep.subr.bf16.mxu0 0
    %2206 = vmatpush1.bf16.msra.mxu0 0
    %2207 = vmatprep.subr.bf16.mxu0 0
    %2208 = vmatpush1.bf16.msra.mxu0 0
    %2209 = vmatprep.subr.bf16.mxu0 0
    %2210 = vmatpush1.bf16.msra.mxu0 0
    %2211 = vmatprep.subr.bf16.mxu0 0
    %2212 = vmatpush1.bf16.msra.mxu0 0
    %2213 = vmatprep.subr.bf16.mxu0 0
    %2214 = vmatpush1.bf16.msra.mxu0 0
    %2215 = vmatprep.subr.bf16.mxu0 0
    %2216 = vmatpush1.bf16.msra.mxu0 0
    %2217 = vmatprep.subr.bf16.mxu0 0
    %2218 = vmatpush1.bf16.msra.mxu0 0
    %2219 = vmatprep.subr.bf16.mxu0 0
    %2220 = vmatpush1.bf16.msra.mxu0 0
    %2221 = vmatprep.mubr.bf16.mxu0 0
    %2222 = vmatmul.mubr.bf16.gmra.mrb[0].mxu0 %v2069
    %v2223 = vpop.f32.mrb[0].mxu0
    %v2224 = vadd.f32 0.0, %v2223
    %v2225 = vpop.f32.mrb[0].mxu0
    %v2226 = vpop.f32.mrb[0].mxu0
    %v2227 = vpop.f32.mrb[0].mxu0
    %2228 = vdwg.mxu0
    %v2230 = vsel %vm246, %v2188, 0
    %2232 = vmatprep.subr.bf16.mxu0 0
    %2233 = vmatpush1.bf16.msra.mxu0 %v365
    %2234 = vmatprep.subr.bf16.mxu0 0
    %2235 = vmatpush1.bf16.msra.mxu0 %v366
    %2236 = vmatprep.subr.bf16.mxu0 0
    %2237 = vmatpush1.bf16.msra.mxu0 0
    %2238 = vmatprep.subr.bf16.mxu0 0
    %2239 = vmatpush1.bf16.msra.mxu0 0
    %2240 = vmatprep.subr.bf16.mxu0 0
    %2241 = vmatpush1.bf16.msra.mxu0 0
    %2242 = vmatprep.subr.bf16.mxu0 0
    %2243 = vmatpush1.bf16.msra.mxu0 0
    %2244 = vmatprep.subr.bf16.mxu0 0
    %2245 = vmatpush1.bf16.msra.mxu0 0
    %2246 = vmatprep.subr.bf16.mxu0 0
    %2247 = vmatpush1.bf16.msra.mxu0 0
    %2248 = vmatprep.subr.bf16.mxu0 0
    %2249 = vmatpush1.bf16.msra.mxu0 0
    %2250 = vmatprep.subr.bf16.mxu0 0
    %2251 = vmatpush1.bf16.msra.mxu0 0
    %2252 = vmatprep.subr.bf16.mxu0 0
    %2253 = vmatpush1.bf16.msra.mxu0 0
    %2254 = vmatprep.subr.bf16.mxu0 0
    %2255 = vmatpush1.bf16.msra.mxu0 0
    %2256 = vmatprep.subr.bf16.mxu0 0
    %2257 = vmatpush1.bf16.msra.mxu0 0
    %2258 = vmatprep.subr.bf16.mxu0 0
    %2259 = vmatpush1.bf16.msra.mxu0 0
    %2260 = vmatprep.subr.bf16.mxu0 0
    %2261 = vmatpush1.bf16.msra.mxu0 0
    %2262 = vmatprep.subr.bf16.mxu0 0
    %2263 = vmatpush1.bf16.msra.mxu0 0
    %2264 = vmatprep.mubr.bf16.mxu0 0
    %2265 = vmatmul.mubr.bf16.gmra.mrb[0].mxu0 %v2230
    %v2266 = vpop.f32.mrb[0].mxu0
    %v2267 = vadd.f32 %v2224, %v2266
    %v2268 = vpop.f32.mrb[0].mxu0
    %v2269 = vpop.f32.mrb[0].mxu0
    %v2270 = vpop.f32.mrb[0].mxu0
    %2271 = vdwg.mxu0
    %v2272 = vadd.f32 %v2267, %v201
    %v2273 = vmul.f32 %v223, %v2011
    %v2274 = vmul.f32 %v225, %v2022
    %v2275 = vadd.f32 %v2273, %v2274
    %v2276 = vmul.f32 %v2275, 1.8
    %v2277 = vadd.f32 %v2276, 0.01
    %v2278 = vmul.f32 %v2018, 0.95122945
    %v2279 = vmul.f32 %v2272, 0.048770577
    %v2280 = vadd.f32 %v2278, %v2279
    %v2281 = vmul.f32 %v2277, %v2022
    %v2282 = vsub.f32 %v2280, %v2281
    %v2283 = vsub.f32 %v2282, %v2277
    %vm2284 = vcmp.gt.f32.partialorder %v2283, 0.0
    %v2285 = vsel %vm2284, 1, 0
    %v2286 = vcvt.s32.f32 %v2285
    %v2287 = vpack.c.bf16 %v2286, %v2286
    %v2288 = vpack.c.bf16 %v2125, %v2125
    %v2290 = vsel %vm246, %v2288, 0
    %2292 = vmatprep.subr.bf16.mxu0 0
    %2293 = vmatpush1.bf16.msra.mxu0 %v435
    %2294 = vmatprep.subr.bf16.mxu0 0
    %2295 = vmatpush1.bf16.msra.mxu0 %v436
    %2296 = vmatprep.subr.bf16.mxu0 0
    %2297 = vmatpush1.bf16.msra.mxu0 0
    %2298 = vmatprep.subr.bf16.mxu0 0
    %2299 = vmatpush1.bf16.msra.mxu0 0
    %2300 = vmatprep.subr.bf16.mxu0 0
    %2301 = vmatpush1.bf16.msra.mxu0 0
    %2302 = vmatprep.subr.bf16.mxu0 0
    %2303 = vmatpush1.bf16.msra.mxu0 0
    %2304 = vmatprep.subr.bf16.mxu0 0
    %2305 = vmatpush1.bf16.msra.mxu0 0
    %2306 = vmatprep.subr.bf16.mxu0 0
    %2307 = vmatpush1.bf16.msra.mxu0 0
    %2308 = vmatprep.subr.bf16.mxu0 0
    %2309 = vmatpush1.bf16.msra.mxu0 0
    %2310 = vmatprep.subr.bf16.mxu0 0
    %2311 = vmatpush1.bf16.msra.mxu0 0
    %2312 = vmatprep.subr.bf16.mxu0 0
    %2313 = vmatpush1.bf16.msra.mxu0 0
    %2314 = vmatprep.subr.bf16.mxu0 0
    %2315 = vmatpush1.bf16.msra.mxu0 0
    %2316 = vmatprep.subr.bf16.mxu0 0
    %2317 = vmatpush1.bf16.msra.mxu0 0
    %2318 = vmatprep.subr.bf16.mxu0 0
    %2319 = vmatpush1.bf16.msra.mxu0 0
    %2320 = vmatprep.subr.bf16.mxu0 0
    %2321 = vmatpush1.bf16.msra.mxu0 0
    %2322 = vmatprep.subr.bf16.mxu0 0
    %2323 = vmatpush1.bf16.msra.mxu0 0
    %2324 = vmatprep.mubr.bf16.mxu0 0
    %2325 = vmatmul.mubr.bf16.gmra.mrb[0].mxu0 %v2290
    %v2326 = vpop.f32.mrb[0].mxu0
    %v2327 = vadd.f32 0.0, %v2326
    %v2328 = vpop.f32.mrb[0].mxu0
    %v2329 = vpop.f32.mrb[0].mxu0
    %v2330 = vpop.f32.mrb[0].mxu0
    %2331 = vdwg.mxu0
    %v2333 = vsel %vm246, %v2287, 0
    %2335 = vmatprep.subr.bf16.mxu0 0
    %2336 = vmatpush1.bf16.msra.mxu0 %v487
    %2337 = vmatprep.subr.bf16.mxu0 0
    %2338 = vmatpush1.bf16.msra.mxu0 %v488
    %2339 = vmatprep.subr.bf16.mxu0 0
    %2340 = vmatpush1.bf16.msra.mxu0 0
    %2341 = vmatprep.subr.bf16.mxu0 0
    %2342 = vmatpush1.bf16.msra.mxu0 0
    %2343 = vmatprep.subr.bf16.mxu0 0
    %2344 = vmatpush1.bf16.msra.mxu0 0
    %2345 = vmatprep.subr.bf16.mxu0 0
    %2346 = vmatpush1.bf16.msra.mxu0 0
    %2347 = vmatprep.subr.bf16.mxu0 0
    %2348 = vmatpush1.bf16.msra.mxu0 0
    %2349 = vmatprep.subr.bf16.mxu0 0
    %2350 = vmatpush1.bf16.msra.mxu0 0
    %2351 = vmatprep.subr.bf16.mxu0 0
    %2352 = vmatpush1.bf16.msra.mxu0 0
    %2353 = vmatprep.subr.bf16.mxu0 0
    %2354 = vmatpush1.bf16.msra.mxu0 0
    %2355 = vmatprep.subr.bf16.mxu0 0
    %2356 = vmatpush1.bf16.msra.mxu0 0
    %2357 = vmatprep.subr.bf16.mxu0 0
    %2358 = vmatpush1.bf16.msra.mxu0 0
    %2359 = vmatprep.subr.bf16.mxu0 0
    %2360 = vmatpush1.bf16.msra.mxu0 0
    %2361 = vmatprep.subr.bf16.mxu0 0
    %2362 = vmatpush1.bf16.msra.mxu0 0
    %2363 = vmatprep.subr.bf16.mxu0 0
    %2364 = vmatpush1.bf16.msra.mxu0 0
    %2365 = vmatprep.subr.bf16.mxu0 0
    %2366 = vmatpush1.bf16.msra.mxu0 0
    %2367 = vmatprep.mubr.bf16.mxu0 0
    %2368 = vmatmul.mubr.bf16.gmra.mrb[0].mxu0 %v2333
    %v2369 = vpop.f32.mrb[0].mxu0
    %v2370 = vadd.f32 %v2327, %v2369
    %v2371 = vpop.f32.mrb[0].mxu0
    %v2372 = vpop.f32.mrb[0].mxu0
    %v2373 = vpop.f32.mrb[0].mxu0
    %2374 = vdwg.mxu0
    %v2375 = vadd.f32 %v2370, %v208
    %v2376 = vmul.f32 %v231, %v2114
    %v2377 = vmul.f32 %v233, %v2125
    %v2378 = vadd.f32 %v2376, %v2377
    %v2379 = vmul.f32 %v2378, 1.8
    %v2380 = vadd.f32 %v2379, 0.01
    %v2381 = vmul.f32 %v2121, 0.95122945
    %v2382 = vmul.f32 %v2375, 0.048770577
    %v2383 = vadd.f32 %v2381, %v2382
    %v2384 = vmul.f32 %v2380, %v2125
    %v2385 = vsub.f32 %v2383, %v2384
    %v2386 = vsub.f32 %v2385, %v2380
    %vm2387 = vcmp.gt.f32.partialorder %v2386, 0.0
    %v2388 = vsel %vm2387, 1, 0
    %v2389 = vcvt.s32.f32 %v2388
    %v2390 = vadd.f32 %v2126, %v2389
    %v2391 = vpack.c.bf16 %v2390, %v2390
    %v2392 = vld [vmem:[%s14] sm:$0x1]
    %v2394 = vlaneseq
    %v2395 = vshrl.u32 %v2394, 7
    %v2396 = vsub.s32 0, %v2395
    %v2397 = vrot.slane %v2392, %v2396
    %v2399 = vmul.f32 %v2397, 8.0
    %v2404 = vunpack.c.l.b16 %v192
    %v2405 = vunpack.c.l.b16 %v193
    %v2406 = vunpack.c.l.b16 %v194
    %v2407 = vunpack.c.l.b16 %v195
    %v2408 = vpack.c.b16 %v2405, %v2404
    %v2409 = vpack.c.b16 %v2407, %v2406
    %v2413 = vsel %vm246, %v2391, 0
    %2415 = vmatprep.subr.bf16.mxu0 0
    %2416 = vmatpush1.bf16.msra.mxu0 %v2408
    %2417 = vmatprep.subr.bf16.mxu0 0
    %2418 = vmatpush1.bf16.msra.mxu0 %v2409
    %2419 = vmatprep.subr.bf16.mxu0 0
    %2420 = vmatpush1.bf16.msra.mxu0 0
    %2421 = vmatprep.subr.bf16.mxu0 0
    %2422 = vmatpush1.bf16.msra.mxu0 0
    %2423 = vmatprep.subr.bf16.mxu0 0
    %2424 = vmatpush1.bf16.msra.mxu0 0
    %2425 = vmatprep.subr.bf16.mxu0 0
    %2426 = vmatpush1.bf16.msra.mxu0 0
    %2427 = vmatprep.subr.bf16.mxu0 0
    %2428 = vmatpush1.bf16.msra.mxu0 0
    %2429 = vmatprep.subr.bf16.mxu0 0
    %2430 = vmatpush1.bf16.msra.mxu0 0
    %2431 = vmatprep.subr.bf16.mxu0 0
    %2432 = vmatpush1.bf16.msra.mxu0 0
    %2433 = vmatprep.subr.bf16.mxu0 0
    %2434 = vmatpush1.bf16.msra.mxu0 0
    %2435 = vmatprep.subr.bf16.mxu0 0
    %2436 = vmatpush1.bf16.msra.mxu0 0
    %2437 = vmatprep.subr.bf16.mxu0 0
    %2438 = vmatpush1.bf16.msra.mxu0 0
    %2439 = vmatprep.subr.bf16.mxu0 0
    %2440 = vmatpush1.bf16.msra.mxu0 0
    %2441 = vmatprep.subr.bf16.mxu0 0
    %2442 = vmatpush1.bf16.msra.mxu0 0
    %2443 = vmatprep.subr.bf16.mxu0 0
    %2444 = vmatpush1.bf16.msra.mxu0 0
    %2445 = vmatprep.subr.bf16.mxu0 0
    %2446 = vmatpush1.bf16.msra.mxu0 0
    %2447 = vmatprep.mubr.bf16.mxu0 0
    %2448 = vmatmul.mubr.bf16.gmra.mrb[0].mxu0 %v2413
    %v2449 = vpop.f32.mrb[0].mxu0
    %v2450 = vadd.f32 %v2399, %v2449
    %v2451 = vpop.f32.mrb[0].mxu0
    %v2452 = vpop.f32.mrb[0].mxu0
    %v2453 = vpop.f32.mrb[0].mxu0
    %2454 = vdwg.mxu0
    %vm2455 = vcmask 74752
    %2456 = vst.msk [vmem:[#allocation2] sm:$0x3] %vm2455, %v2450
    // Predicated region
    $region62: #{tpu_custom_call.1} parent=1 // pred_check
      _
    $region63: #{tpu_custom_call.1} parent=1 // pred_check_branch
      %2458 = sbr.rel (0) target = $region65
    $region64: #{tpu_custom_call.1} parent=1 // pred_region
      %s2460 = ssub.s32 32, 32
      %2461 = vsyncadd [#allocation3], %s2460
      %s2463 = sshll.u32 [#allocation2], 4
      %s2464 = int_to_ptr.vmem [resolvable:$true] %s2463
      %2466 = dma.vmem_to_hbm [thread:$0]  %s2464, 32, %s15, [#allocation3]
    $region65: #{tpu_custom_call.1} parent=1 // pred_fallthru
      _
    // Predicated region
    $region66: #{tpu_custom_call.1} parent=1 // pred_check
      _
    $region67: #{tpu_custom_call.1} parent=1 // pred_check_branch
      %2468 = sbr.rel (0) target = $region69
    $region68: #{tpu_custom_call.1} parent=1 // pred_region
      %2469 = dma.done [#allocation3], 32
    $region69: #{tpu_custom_call.1} parent=1 // pred_fallthru
      _
    %2470 = vsyncpa [#allocation3], 1

</llo_original>
